<compile_context>
chip_gen: v7x
topology: tpu7x:2x2x1
jax: 0.10.0
libtpu: 0.0.40
codegen_flags: <defaults>
</compile_context>

<pallas_src>
import functools

import jax
import jax.numpy as jnp
from jax.experimental import pallas as pl
from jax.experimental.pallas import tpu as pltpu

_INV_SQRT2 = 0.7071067811865476
_EPS = 1e-5  # torch.nn.LayerNorm default


def _pad128(n):
    return max(128, ((n + 127) // 128) * 128)


def _pad2d(a, rows, cols):
    return jnp.pad(a, ((0, rows - a.shape[0]), (0, cols - a.shape[1])))


def _layernorm(x, gamma, beta, n_real):
    # LayerNorm over the padded last axis.  Padded columns of x are exactly zero,
    # so sum(x)/n_real is the true mean.  The variance uses centered values with
    # padded lanes masked back to zero (two-pass style; avoids E[x^2]-mu^2
    # cancellation), and zero-padded gamma/beta keep padded lanes at exactly zero.
    inv_n = 1.0 / n_real
    mu = jnp.sum(x, axis=-1, keepdims=True) * inv_n
    xc = x - mu
    if n_real != x.shape[-1]:
        lane = jax.lax.broadcasted_iota(jnp.int32, x.shape, x.ndim - 1)
        xc = jnp.where(lane < n_real, xc, 0.0)
    var = jnp.sum(xc * xc, axis=-1, keepdims=True) * inv_n
    return xc * jax.lax.rsqrt(var + _EPS) * gamma + beta


def _gelu_exact(x):
    # PyTorch nn.GELU() default = exact erf form (tanh approx would move this to
    # the EUP; kept exact for parity with the reference module).
    return 0.5 * x * (1.0 + jax.lax.erf(x * _INV_SQRT2))


# ------------------------------ fused kernel --------------------------------


def fused_gmlp_kernel(
    patches_ref, wp_ref, bp_ref,
    ln1_g_ref, ln1_b_ref, w1_ref, b1_ref,
    sgu_g_ref, sgu_b_ref, ws_ref, bs_ref, w2_ref, b2_ref,
    wc_ref, bc_ref,
    out_ref,
    acc_ref,
    *, hidden, ffn, seq, bt,
):
    l = pl.program_id(1)
    n_layers = pl.num_programs(1)
    m = bt * seq
    h_pad = acc_ref.shape[-1]
    f_pad = sgu_g_ref.shape[-1]

    # ---- prologue: patch embedding (once per batch block) ------------------
    @pl.when(l == 0)
    def _():
        p = patches_ref[...].reshape(m, patches_ref.shape[-1])      # (m, Kp) bf16
        emb = jnp.dot(p, wp_ref[...], preferred_element_type=jnp.float32)
        acc_ref[...] = emb + bp_ref[...]

    # ---- gMLP layer l (residual stream resident in VMEM, f32) --------------
    x = acc_ref[...]                                                # (m, Hp) f32
    h = _layernorm(x, ln1_g_ref[l], ln1_b_ref[l], hidden)

    # channel_proj1 + GELU (batch folded into the matmul M dimension)
    y = jnp.dot(h.astype(jnp.bfloat16), w1_ref[l],
                preferred_element_type=jnp.float32) + b1_ref[l]
    y = _gelu_exact(y)

    # ---- Spatial Gating Unit ------------------------------------------------
    u = y[:, :f_pad]                                                # (m, Fp)
    v = _layernorm(y[:, f_pad:], sgu_g_ref[l], sgu_b_ref[l], ffn)   # (m, Fp)

    # spatial_proj == Conv1d(seq, seq, k=1).  One wide matmul instead of bt tiny
    # batched matmuls: lane-concat the per-batch (S, Fp) slabs into (S, bt*Fp),
    # do a single (S,S)@(S, bt*Fp) MXU pass, then sublane-concat back into the
    # b-major (m, Fp) row layout.  Only 128-aligned static slices + concats.
    v3 = v.astype(jnp.bfloat16).reshape(bt, seq, f_pad)             # free split
    vt = jnp.concatenate([v3[b] for b in range(bt)], axis=-1)       # (S, bt*Fp)
    mixed = jnp.dot(ws_ref[l], vt, preferred_element_type=jnp.float32)
    bs_l = bs_ref[l]                                                # (S, Fp) f32
    mixed = jnp.concatenate(
        [mixed[:, b * f_pad:(b + 1) * f_pad] + bs_l for b in range(bt)], axis=0)
    # Padded Fp lanes stay exactly zero: v's padded lanes are zero (zero gamma/
    # beta), the spatial matmul maps them to zero, and bs_l's padded lanes are
    # zero too — so the gate u * mixed cannot leak padding into the residual.
    g = u * mixed                                                   # (m, Fp)

    # channel_proj2 + residual
    out = jnp.dot(g.astype(jnp.bfloat16), w2_ref[l],
                  preferred_element_type=jnp.float32) + b2_ref[l]
    acc_ref[...] = out + x

    # ---- epilogue: token pooling + classifier (last layer only) ------------
    # The 1/seq mean factor is folded into wc at init, so this is a plain sum.
    @pl.when(l == n_layers - 1)
    def _():
        pooled = jnp.sum(acc_ref[...].reshape(bt, seq, h_pad), axis=1)  # (bt, Hp)
        logits = jnp.dot(pooled.astype(jnp.bfloat16), wc_ref[...],
                         preferred_element_type=jnp.float32) + bc_ref[...]
        out_ref[0] = logits


# ------------------------------ wrapper --------------------------------------


def fused_gmlp(patches, params, *, batch_tile):
    B, S, Kp = patches.shape
    cfg = params["cfg"]
    n_layers = cfg["n_layers"]
    Hp = params["w_patch"].shape[1]
    NCp = params["wc"].shape[1]
    bt = batch_tile
    assert B % bt == 0, "batch must be divisible by the batch tile"
    assert S % 8 == 0, "seq_len must be a multiple of 8 to keep sublane tiles aligned"
    nb = B // bt

    kernel = functools.partial(
        fused_gmlp_kernel, hidden=cfg["hidden"], ffn=cfg["ffn"], seq=S, bt=bt)

    def const_spec(arr):
        # Grid-invariant block covering the whole array: DMA'd once and kept
        # VMEM-resident across both grid axes (layer weights are indexed with
        # program_id(1) in-kernel instead of being re-streamed per batch block).
        nd = arr.ndim
        return pl.BlockSpec(arr.shape, lambda b, l, _nd=nd: (0,) * _nd)

    # TODO(synk): at real patch/class sizes, patches/wc/bc could move to
    # memory_space=pl.ANY with manual DMA in the prologue/epilogue to free
    # VMEM residency on v7x; negligible at these sizes.
    in_specs = [
        pl.BlockSpec((bt, S, Kp), lambda b, l: (b, 0, 0)),   # patches (per batch block)
        const_spec(params["w_patch"]), const_spec(params["b_patch"]),
        const_spec(params["ln1_g"]), const_spec(params["ln1_b"]),
        const_spec(params["w1"]), const_spec(params["b1"]),
        const_spec(params["sgu_g"]), const_spec(params["sgu_b"]),
        const_spec(params["ws"]), const_spec(params["bs"]),
        const_spec(params["w2"]), const_spec(params["b2"]),
        const_spec(params["wc"]), const_spec(params["bc"]),
    ]

    # Per-generation scoped-VMEM limit: ~80% of physical (64 MiB on v7x,
    # 128 MiB on v5e/v6e), with a conservative fallback.
    try:
        phys = pltpu.get_tpu_info().vmem_capacity_bytes
        vmem_limit = max(32 * 1024 * 1024, min(112 * 1024 * 1024, int(phys * 0.8)))
    except Exception:
        vmem_limit = 48 * 1024 * 1024

    out = pl.pallas_call(
        kernel,
        out_shape=jax.ShapeDtypeStruct((nb, bt, NCp), jnp.float32),
        grid=(nb, n_layers),
        in_specs=in_specs,
        out_specs=pl.BlockSpec((1, bt, NCp), lambda b, l: (b, 0, 0)),
        # Residual stream stays f32 (bf16 would halve its footprint if bt*S grows
        # enough to pressure v7x's 64 MiB VMEM; unnecessary at these sizes).
        scratch_shapes=[pltpu.VMEM((bt * S, Hp), jnp.float32)],
        compiler_params=pltpu.CompilerParams(
            dimension_semantics=("parallel", "arbitrary"),
            vmem_limit_bytes=vmem_limit,
        ),
    )(
        patches, params["w_patch"], params["b_patch"],
        params["ln1_g"], params["ln1_b"], params["w1"], params["b1"],
        params["sgu_g"], params["sgu_b"], params["ws"], params["bs"],
        params["w2"], params["b2"], params["wc"], params["bc"],
    )
    return out.reshape(B, NCp)[:, :cfg["n_classes"]]


# ------------------------------ model glue ----------------------------------


def patchify(x, p):
    # x: (B, C, H, W) NCHW -> (B, num_patches, C*p*p); entry order (c, ph, pw)
    # matches Conv2d weight layout (O, C, ph, pw) flattened.
    B, C, H, W = x.shape
    hp, wp = H // p, W // p
    x = x.reshape(B, C, hp, p, wp, p)
    x = jnp.transpose(x, (0, 2, 4, 1, 3, 5))  # (B, hp, wp, C, p, p)
    return x.reshape(B, hp * wp, C * p * p)


def init_params(key, in_channels, patch, hidden, ffn, seq, n_layers, n_classes):
    K = in_channels * patch * patch
    Kp, Hp, Fp, NCp = (_pad128(d) for d in (K, hidden, ffn, n_classes))

    keys = jax.random.split(key, 2 + 3 * n_layers)
    k = iter(keys)
    params = {"cfg": dict(hidden=hidden, ffn=ffn, seq=seq,
                          n_layers=n_layers, n_classes=n_classes)}

    # patcher: Conv2d(hidden, C, p, p) with stride p == (C*p*p, hidden) matmul
    w_conv = 0.02 * jax.random.normal(next(k), (hidden, in_channels, patch, patch),
                                      jnp.float32)
    params["w_patch"] = _pad2d(w_conv.reshape(hidden, K).T, Kp, Hp).astype(jnp.bfloat16)
    params["b_patch"] = jnp.zeros((1, Hp), jnp.float32)

    ln1_g, ln1_b, w1s, b1s = [], [], [], []
    sgu_g, sgu_b, wss, bss, w2s, b2s = [], [], [], [], [], []
    for _ in range(n_layers):
        ln1_g.append(_pad2d(jnp.ones((1, hidden), jnp.float32), 1, Hp))
        ln1_b.append(jnp.zeros((1, Hp), jnp.float32))
        # channel_proj1: keep u/v halves separately padded so the SGU split stays
        # at a 128-aligned lane boundary.
        w1 = 0.02 * jax.random.normal(next(k), (hidden, 2 * ffn), jnp.float32)
        w1s.append(jnp.concatenate(
            [_pad2d(w1[:, :ffn], Hp, Fp), _pad2d(w1[:, ffn:], Hp, Fp)],
            axis=1).astype(jnp.bfloat16))
        b1s.append(jnp.zeros((1, 2 * Fp), jnp.float32))
        sgu_g.append(_pad2d(jnp.ones((1, ffn), jnp.float32), 1, Fp))
        sgu_b.append(jnp.zeros((1, Fp), jnp.float32))
        # spatial_proj: Conv1d(seq, seq, 1) weight (S, S); bias init to 1.0,
        # pre-broadcast to a lane-dense (S, Fp) tensor with padded lanes = 0.
        wss.append((0.02 * jax.random.normal(next(k), (seq, seq), jnp.float32)
                    ).astype(jnp.bfloat16))
        bss.append(_pad2d(jnp.ones((seq, ffn), jnp.float32), seq, Fp))
        w2 = 0.02 * jax.random.normal(next(k), (ffn, hidden), jnp.float32)
        w2s.append(_pad2d(w2, Fp, Hp).astype(jnp.bfloat16))
        b2s.append(jnp.zeros((1, Hp), jnp.float32))

    params["ln1_g"] = jnp.stack(ln1_g)
    params["ln1_b"] = jnp.stack(ln1_b)
    params["w1"] = jnp.stack(w1s)
    params["b1"] = jnp.stack(b1s)
    params["sgu_g"] = jnp.stack(sgu_g)
    params["sgu_b"] = jnp.stack(sgu_b)
    params["ws"] = jnp.stack(wss)
    params["bs"] = jnp.stack(bss)
    params["w2"] = jnp.stack(w2s)
    params["b2"] = jnp.stack(b2s)

    # classifier: the 1/seq mean-pool factor is folded into wc (epilogue sums).
    wc = 0.02 * jax.random.normal(next(k), (hidden, n_classes), jnp.float32)
    params["wc"] = _pad2d(wc / seq, Hp, NCp).astype(jnp.bfloat16)
    params["bc"] = jnp.zeros((1, NCp), jnp.float32)
    return params


def _pick_batch_tile(B, S, target_m=256):
    # Largest tile with m = bt*S >= target_m that still leaves an even number of
    # batch blocks (v7x megacore); else largest tile reaching target_m; else the
    # whole batch as one maximal block (best for single-TC v5e/v6e).
    for bt in range(B, 0, -1):
        if B % bt == 0 and bt * S >= target_m and (B // bt) % 2 == 0:
            return bt
    for bt in range(B, 0, -1):
        if B % bt == 0 and bt * S >= target_m:
            return bt
    return B


def gmlp_forward(x, params, patch, batch_tile=None):
    patches = patchify(x, patch)                      # plain-JAX reshape glue only
    B, S, K = patches.shape
    Kp = params["w_patch"].shape[0]
    patches = jnp.pad(patches, ((0, 0), (0, 0), (0, Kp - K))).astype(jnp.bfloat16)
    bt = batch_tile if batch_tile is not None else _pick_batch_tile(B, S)
    return fused_gmlp(patches, params, batch_tile=bt)


# ------------------------------ main ----------------------------------------

if __name__ == "__main__":
    # B=32, S=16 -> batch tile 16 gives m = bt*S = 256 rows in every channel
    # projection (fills the MXU M dim) and nb=2 "parallel" batch blocks so both
    # v7x TensorCores get work; on v5e/v6e the extra block costs ~nothing.
    B, C, IMG, PATCH = 32, 3, 16, 4
    HIDDEN, FFN, N_LAYERS, N_CLASSES = 32, 64, 2, 10
    SEQ = (IMG // PATCH) ** 2  # 16

    root = jax.random.PRNGKey(0)
    k_params, k_x = jax.random.split(root)
    params = init_params(k_params, C, PATCH, HIDDEN, FFN, SEQ, N_LAYERS, N_CLASSES)
    x = jax.random.normal(k_x, (B, C, IMG, IMG), jnp.float32)

    logits = gmlp_forward(x, params, PATCH)
    jax.block_until_ready(logits)
    assert logits.shape == (B, N_CLASSES)
    print("KERNEL_OK")
</pallas_src>

<mosaic_0001>
module attributes {stable_mosaic.version = 11 : i64} {
  func.func @fused_gmlp_kernel(%arg0: i32, %arg1: i32, %arg2: memref<16x16x128xbf16, #tpu.memory_space<vmem>>, %arg3: memref<128x128xbf16, #tpu.memory_space<vmem>>, %arg4: memref<1x128xf32, #tpu.memory_space<vmem>>, %arg5: memref<2x1x128xf32, #tpu.memory_space<vmem>>, %arg6: memref<2x1x128xf32, #tpu.memory_space<vmem>>, %arg7: memref<2x128x256xbf16, #tpu.memory_space<vmem>>, %arg8: memref<2x1x256xf32, #tpu.memory_space<vmem>>, %arg9: memref<2x1x128xf32, #tpu.memory_space<vmem>>, %arg10: memref<2x1x128xf32, #tpu.memory_space<vmem>>, %arg11: memref<2x16x16xbf16, #tpu.memory_space<vmem>>, %arg12: memref<2x16x128xf32, #tpu.memory_space<vmem>>, %arg13: memref<2x128x128xbf16, #tpu.memory_space<vmem>>, %arg14: memref<2x1x128xf32, #tpu.memory_space<vmem>>, %arg15: memref<128x128xbf16, #tpu.memory_space<vmem>>, %arg16: memref<1x128xf32, #tpu.memory_space<vmem>>, %arg17: memref<1x16x128xf32, #tpu.memory_space<vmem>>, %arg18: memref<256x128xf32, #tpu.memory_space<vmem>>) attributes {dimension_semantics = [#tpu.dimension_semantics<parallel>, #tpu.dimension_semantics<arbitrary>], iteration_bounds = array<i64: 2, 2>, scalar_prefetch = 0 : i64, scratch_operands = 1 : i64, tpu.core_type = #tpu.core_type<tc>, window_params = [{transform_indices = @transform_0, window_bounds = array<i64: 16, 16, 128>}, {pipeline_mode = #tpu.pipeline_mode<synchronous>, transform_indices = @transform_1, window_bounds = array<i64: 128, 128>}, {pipeline_mode = #tpu.pipeline_mode<synchronous>, transform_indices = @transform_2, window_bounds = array<i64: 1, 128>}, {pipeline_mode = #tpu.pipeline_mode<synchronous>, transform_indices = @transform_3, window_bounds = array<i64: 2, 1, 128>}, {pipeline_mode = #tpu.pipeline_mode<synchronous>, transform_indices = @transform_4, window_bounds = array<i64: 2, 1, 128>}, {pipeline_mode = #tpu.pipeline_mode<synchronous>, transform_indices = @transform_5, window_bounds = array<i64: 2, 128, 256>}, {pipeline_mode = #tpu.pipeline_mode<synchronous>, transform_indices = @transform_6, window_bounds = array<i64: 2, 1, 256>}, {pipeline_mode = #tpu.pipeline_mode<synchronous>, transform_indices = @transform_7, window_bounds = array<i64: 2, 1, 128>}, {pipeline_mode = #tpu.pipeline_mode<synchronous>, transform_indices = @transform_8, window_bounds = array<i64: 2, 1, 128>}, {pipeline_mode = #tpu.pipeline_mode<synchronous>, transform_indices = @transform_9, window_bounds = array<i64: 2, 16, 16>}, {pipeline_mode = #tpu.pipeline_mode<synchronous>, transform_indices = @transform_10, window_bounds = array<i64: 2, 16, 128>}, {pipeline_mode = #tpu.pipeline_mode<synchronous>, transform_indices = @transform_11, window_bounds = array<i64: 2, 128, 128>}, {pipeline_mode = #tpu.pipeline_mode<synchronous>, transform_indices = @transform_12, window_bounds = array<i64: 2, 1, 128>}, {pipeline_mode = #tpu.pipeline_mode<synchronous>, transform_indices = @transform_13, window_bounds = array<i64: 128, 128>}, {pipeline_mode = #tpu.pipeline_mode<synchronous>, transform_indices = @transform_14, window_bounds = array<i64: 1, 128>}, {transform_indices = @transform_15, window_bounds = array<i64: 1, 16, 128>}]} {
    %c0_i32 = arith.constant 0 : i32
    %0 = arith.cmpi eq, %arg1, %c0_i32 : i32
    %1 = arith.extui %0 : i1 to i32
    %c0_i32_0 = arith.constant 0 : i32
    %2 = arith.cmpi ne, %1, %c0_i32_0 : i32
    scf.if %2 {
      %c0_42 = arith.constant 0 : index
      %c0_43 = arith.constant 0 : index
      %c0_44 = arith.constant 0 : index
      %177 = vector.load %arg2[%c0_42, %c0_43, %c0_44] : memref<16x16x128xbf16, #tpu.memory_space<vmem>>, vector<16x16x128xbf16>
      %178 = vector.shape_cast %177 : vector<16x16x128xbf16> to vector<256x128xbf16>
      %c0_45 = arith.constant 0 : index
      %c0_46 = arith.constant 0 : index
      %179 = vector.load %arg3[%c0_45, %c0_46] : memref<128x128xbf16, #tpu.memory_space<vmem>>, vector<128x128xbf16>
      %cst_47 = arith.constant dense<0.000000e+00> : vector<256x128xf32>
      %180 = tpu.matmul %178, %179, %cst_47 {dimension_numbers = #tpu.dot_dimension_numbers<[1], [0], [0], [1], [0, 0, 1, 1], [], []>} : vector<256x128xbf16>, vector<128x128xbf16>, vector<256x128xf32> -> vector<256x128xf32>
      %c0_48 = arith.constant 0 : index
      %c0_49 = arith.constant 0 : index
      %181 = vector.load %arg4[%c0_48, %c0_49] : memref<1x128xf32, #tpu.memory_space<vmem>>, vector<1x128xf32>
      %182 = vector.broadcast %181 : vector<1x128xf32> to vector<256x128xf32>
      %183 = arith.addf %180, %182 : vector<256x128xf32>
      %c0_50 = arith.constant 0 : index
      %c0_51 = arith.constant 0 : index
      %184 = vector.load %arg18[%c0_50, %c0_51] : memref<256x128xf32, #tpu.memory_space<vmem>>, vector<256x128xf32>
      tpu.vector_store %arg18[%c0_50, %c0_51], %183 {strides = array<i32>} : memref<256x128xf32, #tpu.memory_space<vmem>>, vector<256x128xf32>,
    } else {
    }
    %c0 = arith.constant 0 : index
    %c0_1 = arith.constant 0 : index
    %3 = vector.load %arg18[%c0, %c0_1] : memref<256x128xf32, #tpu.memory_space<vmem>>, vector<256x128xf32>
    %4 = arith.index_cast %arg1 : i32 to index
    %c0_2 = arith.constant 0 : index
    %c0_3 = arith.constant 0 : index
    %5 = vector.load %arg5[%4, %c0_2, %c0_3] : memref<2x1x128xf32, #tpu.memory_space<vmem>>, vector<1x1x128xf32>
    %6 = vector.shape_cast %5 : vector<1x1x128xf32> to vector<1x128xf32>
    %7 = arith.index_cast %arg1 : i32 to index
    %c0_4 = arith.constant 0 : index
    %c0_5 = arith.constant 0 : index
    %8 = vector.load %arg6[%7, %c0_4, %c0_5] : memref<2x1x128xf32, #tpu.memory_space<vmem>>, vector<1x1x128xf32>
    %9 = vector.shape_cast %8 : vector<1x1x128xf32> to vector<1x128xf32>
    %cst = arith.constant dense<0.000000e+00> : vector<256xf32>
    %10 = vector.multi_reduction <add>, %3, %cst [1] : vector<256x128xf32> to vector<256xf32>
    %11 = vector.shape_cast %10 : vector<256xf32> to vector<256x1xf32>
    %cst_6 = arith.constant 3.125000e-02 : f32
    %12 = vector.broadcast %cst_6 : f32 to vector<256x1xf32>
    %13 = arith.mulf %11, %12 : vector<256x1xf32>
    %14 = vector.broadcast %13 : vector<256x1xf32> to vector<256x128xf32>
    %15 = arith.subf %3, %14 : vector<256x128xf32>
    %16 = tpu.iota {dimensions = array<i32: 1>} : vector<256x128xi32>
    %c32_i32 = arith.constant 32 : i32
    %17 = vector.broadcast %c32_i32 : i32 to vector<256x128xi32>
    %18 = arith.cmpi slt, %16, %17 : vector<256x128xi32>
    %cst_7 = arith.constant 0.000000e+00 : f32
    %19 = vector.broadcast %cst_7 : f32 to vector<256x128xf32>
    %20 = arith.select %18, %15, %19 : vector<256x128xi1>, vector<256x128xf32>
    %21 = arith.mulf %20, %20 : vector<256x128xf32>
    %cst_8 = arith.constant dense<0.000000e+00> : vector<256xf32>
    %22 = vector.multi_reduction <add>, %21, %cst_8 [1] : vector<256x128xf32> to vector<256xf32>
    %23 = vector.shape_cast %22 : vector<256xf32> to vector<256x1xf32>
    %cst_9 = arith.constant 3.125000e-02 : f32
    %24 = vector.broadcast %cst_9 : f32 to vector<256x1xf32>
    %25 = arith.mulf %23, %24 : vector<256x1xf32>
    %cst_10 = arith.constant 9.99999974E-6 : f32
    %26 = vector.broadcast %cst_10 : f32 to vector<256x1xf32>
    %27 = arith.addf %25, %26 : vector<256x1xf32>
    %28 = math.rsqrt %27 : vector<256x1xf32>
    %29 = vector.broadcast %28 : vector<256x1xf32> to vector<256x128xf32>
    %30 = arith.mulf %20, %29 : vector<256x128xf32>
    %31 = vector.broadcast %6 : vector<1x128xf32> to vector<256x128xf32>
    %32 = arith.mulf %30, %31 : vector<256x128xf32>
    %33 = vector.broadcast %9 : vector<1x128xf32> to vector<256x128xf32>
    %34 = arith.addf %32, %33 : vector<256x128xf32>
    %35 = arith.truncf %34 : vector<256x128xf32> to vector<256x128xbf16>
    %36 = arith.index_cast %arg1 : i32 to index
    %c0_11 = arith.constant 0 : index
    %c0_12 = arith.constant 0 : index
    %37 = vector.load %arg7[%36, %c0_11, %c0_12] : memref<2x128x256xbf16, #tpu.memory_space<vmem>>, vector<1x128x256xbf16>
    %38 = vector.shape_cast %37 : vector<1x128x256xbf16> to vector<128x256xbf16>
    %cst_13 = arith.constant dense<0.000000e+00> : vector<256x256xf32>
    %39 = tpu.matmul %35, %38, %cst_13 {dimension_numbers = #tpu.dot_dimension_numbers<[1], [0], [0], [1], [0, 0, 1, 1], [], []>} : vector<256x128xbf16>, vector<128x256xbf16>, vector<256x256xf32> -> vector<256x256xf32>
    %40 = arith.index_cast %arg1 : i32 to index
    %c0_14 = arith.constant 0 : index
    %c0_15 = arith.constant 0 : index
    %41 = vector.load %arg8[%40, %c0_14, %c0_15] : memref<2x1x256xf32, #tpu.memory_space<vmem>>, vector<1x1x256xf32>
    %42 = vector.shape_cast %41 : vector<1x1x256xf32> to vector<1x256xf32>
    %43 = vector.broadcast %42 : vector<1x256xf32> to vector<256x256xf32>
    %44 = arith.addf %39, %43 : vector<256x256xf32>
    %cst_16 = arith.constant 5.000000e-01 : f32
    %45 = vector.broadcast %cst_16 : f32 to vector<256x256xf32>
    %46 = arith.mulf %45, %44 : vector<256x256xf32>
    %cst_17 = arith.constant 0.707106769 : f32
    %47 = vector.broadcast %cst_17 : f32 to vector<256x256xf32>
    %48 = arith.mulf %44, %47 : vector<256x256xf32>
    %49 = math.erf %48 : vector<256x256xf32>
    %cst_18 = arith.constant 1.000000e+00 : f32
    %50 = vector.broadcast %cst_18 : f32 to vector<256x256xf32>
    %51 = arith.addf %50, %49 : vector<256x256xf32>
    %52 = arith.mulf %46, %51 : vector<256x256xf32>
    %53 = vector.extract_strided_slice %52 {offsets = [0, 0], sizes = [256, 128], strides = [1, 1]} : vector<256x256xf32> to vector<256x128xf32>
    %54 = vector.extract_strided_slice %52 {offsets = [0, 128], sizes = [256, 128], strides = [1, 1]} : vector<256x256xf32> to vector<256x128xf32>
    %55 = arith.index_cast %arg1 : i32 to index
    %c0_19 = arith.constant 0 : index
    %c0_20 = arith.constant 0 : index
    %56 = vector.load %arg9[%55, %c0_19, %c0_20] : memref<2x1x128xf32, #tpu.memory_space<vmem>>, vector<1x1x128xf32>
    %57 = vector.shape_cast %56 : vector<1x1x128xf32> to vector<1x128xf32>
    %58 = arith.index_cast %arg1 : i32 to index
    %c0_21 = arith.constant 0 : index
    %c0_22 = arith.constant 0 : index
    %59 = vector.load %arg10[%58, %c0_21, %c0_22] : memref<2x1x128xf32, #tpu.memory_space<vmem>>, vector<1x1x128xf32>
    %60 = vector.shape_cast %59 : vector<1x1x128xf32> to vector<1x128xf32>
    %cst_23 = arith.constant dense<0.000000e+00> : vector<256xf32>
    %61 = vector.multi_reduction <add>, %54, %cst_23 [1] : vector<256x128xf32> to vector<256xf32>
    %62 = vector.shape_cast %61 : vector<256xf32> to vector<256x1xf32>
    %cst_24 = arith.constant 1.562500e-02 : f32
    %63 = vector.broadcast %cst_24 : f32 to vector<256x1xf32>
    %64 = arith.mulf %62, %63 : vector<256x1xf32>
    %65 = vector.broadcast %64 : vector<256x1xf32> to vector<256x128xf32>
    %66 = arith.subf %54, %65 : vector<256x128xf32>
    %67 = tpu.iota {dimensions = array<i32: 1>} : vector<256x128xi32>
    %c64_i32 = arith.constant 64 : i32
    %68 = vector.broadcast %c64_i32 : i32 to vector<256x128xi32>
    %69 = arith.cmpi slt, %67, %68 : vector<256x128xi32>
    %cst_25 = arith.constant 0.000000e+00 : f32
    %70 = vector.broadcast %cst_25 : f32 to vector<256x128xf32>
    %71 = arith.select %69, %66, %70 : vector<256x128xi1>, vector<256x128xf32>
    %72 = arith.mulf %71, %71 : vector<256x128xf32>
    %cst_26 = arith.constant dense<0.000000e+00> : vector<256xf32>
    %73 = vector.multi_reduction <add>, %72, %cst_26 [1] : vector<256x128xf32> to vector<256xf32>
    %74 = vector.shape_cast %73 : vector<256xf32> to vector<256x1xf32>
    %cst_27 = arith.constant 1.562500e-02 : f32
    %75 = vector.broadcast %cst_27 : f32 to vector<256x1xf32>
    %76 = arith.mulf %74, %75 : vector<256x1xf32>
    %cst_28 = arith.constant 9.99999974E-6 : f32
    %77 = vector.broadcast %cst_28 : f32 to vector<256x1xf32>
    %78 = arith.addf %76, %77 : vector<256x1xf32>
    %79 = math.rsqrt %78 : vector<256x1xf32>
    %80 = vector.broadcast %79 : vector<256x1xf32> to vector<256x128xf32>
    %81 = arith.mulf %71, %80 : vector<256x128xf32>
    %82 = vector.broadcast %57 : vector<1x128xf32> to vector<256x128xf32>
    %83 = arith.mulf %81, %82 : vector<256x128xf32>
    %84 = vector.broadcast %60 : vector<1x128xf32> to vector<256x128xf32>
    %85 = arith.addf %83, %84 : vector<256x128xf32>
    %86 = arith.truncf %85 : vector<256x128xf32> to vector<256x128xbf16>
    %87 = vector.shape_cast %86 : vector<256x128xbf16> to vector<16x16x128xbf16>
    %88 = vector.extract_strided_slice %87 {offsets = [0, 0, 0], sizes = [1, 16, 128], strides = [1, 1, 1]} : vector<16x16x128xbf16> to vector<1x16x128xbf16>
    %89 = vector.shape_cast %88 : vector<1x16x128xbf16> to vector<16x128xbf16>
    %90 = vector.extract_strided_slice %87 {offsets = [1, 0, 0], sizes = [1, 16, 128], strides = [1, 1, 1]} : vector<16x16x128xbf16> to vector<1x16x128xbf16>
    %91 = vector.shape_cast %90 : vector<1x16x128xbf16> to vector<16x128xbf16>
    %92 = vector.extract_strided_slice %87 {offsets = [2, 0, 0], sizes = [1, 16, 128], strides = [1, 1, 1]} : vector<16x16x128xbf16> to vector<1x16x128xbf16>
    %93 = vector.shape_cast %92 : vector<1x16x128xbf16> to vector<16x128xbf16>
    %94 = vector.extract_strided_slice %87 {offsets = [3, 0, 0], sizes = [1, 16, 128], strides = [1, 1, 1]} : vector<16x16x128xbf16> to vector<1x16x128xbf16>
    %95 = vector.shape_cast %94 : vector<1x16x128xbf16> to vector<16x128xbf16>
    %96 = vector.extract_strided_slice %87 {offsets = [4, 0, 0], sizes = [1, 16, 128], strides = [1, 1, 1]} : vector<16x16x128xbf16> to vector<1x16x128xbf16>
    %97 = vector.shape_cast %96 : vector<1x16x128xbf16> to vector<16x128xbf16>
    %98 = vector.extract_strided_slice %87 {offsets = [5, 0, 0], sizes = [1, 16, 128], strides = [1, 1, 1]} : vector<16x16x128xbf16> to vector<1x16x128xbf16>
    %99 = vector.shape_cast %98 : vector<1x16x128xbf16> to vector<16x128xbf16>
    %100 = vector.extract_strided_slice %87 {offsets = [6, 0, 0], sizes = [1, 16, 128], strides = [1, 1, 1]} : vector<16x16x128xbf16> to vector<1x16x128xbf16>
    %101 = vector.shape_cast %100 : vector<1x16x128xbf16> to vector<16x128xbf16>
    %102 = vector.extract_strided_slice %87 {offsets = [7, 0, 0], sizes = [1, 16, 128], strides = [1, 1, 1]} : vector<16x16x128xbf16> to vector<1x16x128xbf16>
    %103 = vector.shape_cast %102 : vector<1x16x128xbf16> to vector<16x128xbf16>
    %104 = vector.extract_strided_slice %87 {offsets = [8, 0, 0], sizes = [1, 16, 128], strides = [1, 1, 1]} : vector<16x16x128xbf16> to vector<1x16x128xbf16>
    %105 = vector.shape_cast %104 : vector<1x16x128xbf16> to vector<16x128xbf16>
    %106 = vector.extract_strided_slice %87 {offsets = [9, 0, 0], sizes = [1, 16, 128], strides = [1, 1, 1]} : vector<16x16x128xbf16> to vector<1x16x128xbf16>
    %107 = vector.shape_cast %106 : vector<1x16x128xbf16> to vector<16x128xbf16>
    %108 = vector.extract_strided_slice %87 {offsets = [10, 0, 0], sizes = [1, 16, 128], strides = [1, 1, 1]} : vector<16x16x128xbf16> to vector<1x16x128xbf16>
    %109 = vector.shape_cast %108 : vector<1x16x128xbf16> to vector<16x128xbf16>
    %110 = vector.extract_strided_slice %87 {offsets = [11, 0, 0], sizes = [1, 16, 128], strides = [1, 1, 1]} : vector<16x16x128xbf16> to vector<1x16x128xbf16>
    %111 = vector.shape_cast %110 : vector<1x16x128xbf16> to vector<16x128xbf16>
    %112 = vector.extract_strided_slice %87 {offsets = [12, 0, 0], sizes = [1, 16, 128], strides = [1, 1, 1]} : vector<16x16x128xbf16> to vector<1x16x128xbf16>
    %113 = vector.shape_cast %112 : vector<1x16x128xbf16> to vector<16x128xbf16>
    %114 = vector.extract_strided_slice %87 {offsets = [13, 0, 0], sizes = [1, 16, 128], strides = [1, 1, 1]} : vector<16x16x128xbf16> to vector<1x16x128xbf16>
    %115 = vector.shape_cast %114 : vector<1x16x128xbf16> to vector<16x128xbf16>
    %116 = vector.extract_strided_slice %87 {offsets = [14, 0, 0], sizes = [1, 16, 128], strides = [1, 1, 1]} : vector<16x16x128xbf16> to vector<1x16x128xbf16>
    %117 = vector.shape_cast %116 : vector<1x16x128xbf16> to vector<16x128xbf16>
    %118 = vector.extract_strided_slice %87 {offsets = [15, 0, 0], sizes = [1, 16, 128], strides = [1, 1, 1]} : vector<16x16x128xbf16> to vector<1x16x128xbf16>
    %119 = vector.shape_cast %118 : vector<1x16x128xbf16> to vector<16x128xbf16>
    %120 = tpu.concatenate %89, %91, %93, %95, %97, %99, %101, %103, %105, %107, %109, %111, %113, %115, %117, %119 in 1 : vector<16x128xbf16>, vector<16x128xbf16>, vector<16x128xbf16>, vector<16x128xbf16>, vector<16x128xbf16>, vector<16x128xbf16>, vector<16x128xbf16>, vector<16x128xbf16>, vector<16x128xbf16>, vector<16x128xbf16>, vector<16x128xbf16>, vector<16x128xbf16>, vector<16x128xbf16>, vector<16x128xbf16>, vector<16x128xbf16>, vector<16x128xbf16> -> vector<16x2048xbf16>
    %121 = arith.index_cast %arg1 : i32 to index
    %c0_29 = arith.constant 0 : index
    %c0_30 = arith.constant 0 : index
    %122 = vector.load %arg11[%121, %c0_29, %c0_30] : memref<2x16x16xbf16, #tpu.memory_space<vmem>>, vector<1x16x16xbf16>
    %123 = vector.shape_cast %122 : vector<1x16x16xbf16> to vector<16x16xbf16>
    %cst_31 = arith.constant dense<0.000000e+00> : vector<16x2048xf32>
    %124 = tpu.matmul %123, %120, %cst_31 {dimension_numbers = #tpu.dot_dimension_numbers<[1], [0], [0], [1], [0, 0, 1, 1], [], []>} : vector<16x16xbf16>, vector<16x2048xbf16>, vector<16x2048xf32> -> vector<16x2048xf32>
    %125 = arith.index_cast %arg1 : i32 to index
    %c0_32 = arith.constant 0 : index
    %c0_33 = arith.constant 0 : index
    %126 = vector.load %arg12[%125, %c0_32, %c0_33] : memref<2x16x128xf32, #tpu.memory_space<vmem>>, vector<1x16x128xf32>
    %127 = vector.shape_cast %126 : vector<1x16x128xf32> to vector<16x128xf32>
    %128 = vector.extract_strided_slice %124 {offsets = [0, 0], sizes = [16, 128], strides = [1, 1]} : vector<16x2048xf32> to vector<16x128xf32>
    %129 = arith.addf %128, %127 : vector<16x128xf32>
    %130 = vector.extract_strided_slice %124 {offsets = [0, 128], sizes = [16, 128], strides = [1, 1]} : vector<16x2048xf32> to vector<16x128xf32>
    %131 = arith.addf %130, %127 : vector<16x128xf32>
    %132 = vector.extract_strided_slice %124 {offsets = [0, 256], sizes = [16, 128], strides = [1, 1]} : vector<16x2048xf32> to vector<16x128xf32>
    %133 = arith.addf %132, %127 : vector<16x128xf32>
    %134 = vector.extract_strided_slice %124 {offsets = [0, 384], sizes = [16, 128], strides = [1, 1]} : vector<16x2048xf32> to vector<16x128xf32>
    %135 = arith.addf %134, %127 : vector<16x128xf32>
    %136 = vector.extract_strided_slice %124 {offsets = [0, 512], sizes = [16, 128], strides = [1, 1]} : vector<16x2048xf32> to vector<16x128xf32>
    %137 = arith.addf %136, %127 : vector<16x128xf32>
    %138 = vector.extract_strided_slice %124 {offsets = [0, 640], sizes = [16, 128], strides = [1, 1]} : vector<16x2048xf32> to vector<16x128xf32>
    %139 = arith.addf %138, %127 : vector<16x128xf32>
    %140 = vector.extract_strided_slice %124 {offsets = [0, 768], sizes = [16, 128], strides = [1, 1]} : vector<16x2048xf32> to vector<16x128xf32>
    %141 = arith.addf %140, %127 : vector<16x128xf32>
    %142 = vector.extract_strided_slice %124 {offsets = [0, 896], sizes = [16, 128], strides = [1, 1]} : vector<16x2048xf32> to vector<16x128xf32>
    %143 = arith.addf %142, %127 : vector<16x128xf32>
    %144 = vector.extract_strided_slice %124 {offsets = [0, 1024], sizes = [16, 128], strides = [1, 1]} : vector<16x2048xf32> to vector<16x128xf32>
    %145 = arith.addf %144, %127 : vector<16x128xf32>
    %146 = vector.extract_strided_slice %124 {offsets = [0, 1152], sizes = [16, 128], strides = [1, 1]} : vector<16x2048xf32> to vector<16x128xf32>
    %147 = arith.addf %146, %127 : vector<16x128xf32>
    %148 = vector.extract_strided_slice %124 {offsets = [0, 1280], sizes = [16, 128], strides = [1, 1]} : vector<16x2048xf32> to vector<16x128xf32>
    %149 = arith.addf %148, %127 : vector<16x128xf32>
    %150 = vector.extract_strided_slice %124 {offsets = [0, 1408], sizes = [16, 128], strides = [1, 1]} : vector<16x2048xf32> to vector<16x128xf32>
    %151 = arith.addf %150, %127 : vector<16x128xf32>
    %152 = vector.extract_strided_slice %124 {offsets = [0, 1536], sizes = [16, 128], strides = [1, 1]} : vector<16x2048xf32> to vector<16x128xf32>
    %153 = arith.addf %152, %127 : vector<16x128xf32>
    %154 = vector.extract_strided_slice %124 {offsets = [0, 1664], sizes = [16, 128], strides = [1, 1]} : vector<16x2048xf32> to vector<16x128xf32>
    %155 = arith.addf %154, %127 : vector<16x128xf32>
    %156 = vector.extract_strided_slice %124 {offsets = [0, 1792], sizes = [16, 128], strides = [1, 1]} : vector<16x2048xf32> to vector<16x128xf32>
    %157 = arith.addf %156, %127 : vector<16x128xf32>
    %158 = vector.extract_strided_slice %124 {offsets = [0, 1920], sizes = [16, 128], strides = [1, 1]} : vector<16x2048xf32> to vector<16x128xf32>
    %159 = arith.addf %158, %127 : vector<16x128xf32>
    %160 = tpu.concatenate %129, %131, %133, %135, %137, %139, %141, %143, %145, %147, %149, %151, %153, %155, %157, %159 in 0 : vector<16x128xf32>, vector<16x128xf32>, vector<16x128xf32>, vector<16x128xf32>, vector<16x128xf32>, vector<16x128xf32>, vector<16x128xf32>, vector<16x128xf32>, vector<16x128xf32>, vector<16x128xf32>, vector<16x128xf32>, vector<16x128xf32>, vector<16x128xf32>, vector<16x128xf32>, vector<16x128xf32>, vector<16x128xf32> -> vector<256x128xf32>
    %161 = arith.mulf %53, %160 : vector<256x128xf32>
    %162 = arith.truncf %161 : vector<256x128xf32> to vector<256x128xbf16>
    %163 = arith.index_cast %arg1 : i32 to index
    %c0_34 = arith.constant 0 : index
    %c0_35 = arith.constant 0 : index
    %164 = vector.load %arg13[%163, %c0_34, %c0_35] : memref<2x128x128xbf16, #tpu.memory_space<vmem>>, vector<1x128x128xbf16>
    %165 = vector.shape_cast %164 : vector<1x128x128xbf16> to vector<128x128xbf16>
    %cst_36 = arith.constant dense<0.000000e+00> : vector<256x128xf32>
    %166 = tpu.matmul %162, %165, %cst_36 {dimension_numbers = #tpu.dot_dimension_numbers<[1], [0], [0], [1], [0, 0, 1, 1], [], []>} : vector<256x128xbf16>, vector<128x128xbf16>, vector<256x128xf32> -> vector<256x128xf32>
    %167 = arith.index_cast %arg1 : i32 to index
    %c0_37 = arith.constant 0 : index
    %c0_38 = arith.constant 0 : index
    %168 = vector.load %arg14[%167, %c0_37, %c0_38] : memref<2x1x128xf32, #tpu.memory_space<vmem>>, vector<1x1x128xf32>
    %169 = vector.shape_cast %168 : vector<1x1x128xf32> to vector<1x128xf32>
    %170 = vector.broadcast %169 : vector<1x128xf32> to vector<256x128xf32>
    %171 = arith.addf %166, %170 : vector<256x128xf32>
    %172 = arith.addf %171, %3 : vector<256x128xf32>
    %c0_39 = arith.constant 0 : index
    %c0_40 = arith.constant 0 : index
    %173 = vector.load %arg18[%c0_39, %c0_40] : memref<256x128xf32, #tpu.memory_space<vmem>>, vector<256x128xf32>
    tpu.vector_store %arg18[%c0_39, %c0_40], %172 {strides = array<i32>} : memref<256x128xf32, #tpu.memory_space<vmem>>, vector<256x128xf32>,
    %c1_i32 = arith.constant 1 : i32
    %174 = arith.cmpi eq, %arg1, %c1_i32 : i32
    %175 = arith.extui %174 : i1 to i32
    %c0_i32_41 = arith.constant 0 : i32
    %176 = arith.cmpi ne, %175, %c0_i32_41 : i32
    scf.if %176 {
      %c0_42 = arith.constant 0 : index
      %c0_43 = arith.constant 0 : index
      %177 = vector.load %arg18[%c0_42, %c0_43] : memref<256x128xf32, #tpu.memory_space<vmem>>, vector<256x128xf32>
      %178 = vector.shape_cast %177 : vector<256x128xf32> to vector<16x16x128xf32>
      %cst_44 = arith.constant dense<0.000000e+00> : vector<16x128xf32>
      %179 = vector.multi_reduction <add>, %178, %cst_44 [1] : vector<16x16x128xf32> to vector<16x128xf32>
      %180 = arith.truncf %179 : vector<16x128xf32> to vector<16x128xbf16>
      %c0_45 = arith.constant 0 : index
      %c0_46 = arith.constant 0 : index
      %181 = vector.load %arg15[%c0_45, %c0_46] : memref<128x128xbf16, #tpu.memory_space<vmem>>, vector<128x128xbf16>
      %cst_47 = arith.constant dense<0.000000e+00> : vector<16x128xf32>
      %182 = tpu.matmul %180, %181, %cst_47 {dimension_numbers = #tpu.dot_dimension_numbers<[1], [0], [0], [1], [0, 0, 1, 1], [], []>} : vector<16x128xbf16>, vector<128x128xbf16>, vector<16x128xf32> -> vector<16x128xf32>
      %c0_48 = arith.constant 0 : index
      %c0_49 = arith.constant 0 : index
      %183 = vector.load %arg16[%c0_48, %c0_49] : memref<1x128xf32, #tpu.memory_space<vmem>>, vector<1x128xf32>
      %184 = vector.broadcast %183 : vector<1x128xf32> to vector<16x128xf32>
      %185 = arith.addf %182, %184 : vector<16x128xf32>
      %c0_50 = arith.constant 0 : index
      %c0_51 = arith.constant 0 : index
      %c0_52 = arith.constant 0 : index
      %186 = vector.load %arg17[%c0_50, %c0_51, %c0_52] : memref<1x16x128xf32, #tpu.memory_space<vmem>>, vector<1x16x128xf32>
      %187 = vector.shape_cast %186 : vector<1x16x128xf32> to vector<16x128xf32>
      %188 = vector.shape_cast %185 : vector<16x128xf32> to vector<1x16x128xf32>
      tpu.vector_store %arg17[%c0_50, %c0_51, %c0_52], %188 {strides = array<i32>} : memref<1x16x128xf32, #tpu.memory_space<vmem>>, vector<1x16x128xf32>,
    } else {
    }
    return
  }
  func.func @transform_0(%arg0: i32, %arg1: i32) -> (i32, i32, i32) {
    %c0_i32 = arith.constant 0 : i32
    %c0_i32_0 = arith.constant 0 : i32
    %c0_i32_1 = arith.constant 0 : i32
    return %arg0, %c0_i32, %c0_i32_0 : i32, i32, i32
  }
  func.func @transform_1(%arg0: i32, %arg1: i32) -> (i32, i32) {
    %c0_i32 = arith.constant 0 : i32
    %c0_i32_0 = arith.constant 0 : i32
    %c0_i32_1 = arith.constant 0 : i32
    return %c0_i32, %c0_i32_0 : i32, i32
  }
  func.func @transform_2(%arg0: i32, %arg1: i32) -> (i32, i32) {
    %c0_i32 = arith.constant 0 : i32
    %c0_i32_0 = arith.constant 0 : i32
    %c0_i32_1 = arith.constant 0 : i32
    return %c0_i32, %c0_i32_0 : i32, i32
  }
  func.func @transform_3(%arg0: i32, %arg1: i32) -> (i32, i32, i32) {
    %c0_i32 = arith.constant 0 : i32
    %c0_i32_0 = arith.constant 0 : i32
    %c0_i32_1 = arith.constant 0 : i32
    %c0_i32_2 = arith.constant 0 : i32
    return %c0_i32, %c0_i32_0, %c0_i32_1 : i32, i32, i32
  }
  func.func @transform_4(%arg0: i32, %arg1: i32) -> (i32, i32, i32) {
    %c0_i32 = arith.constant 0 : i32
    %c0_i32_0 = arith.constant 0 : i32
    %c0_i32_1 = arith.constant 0 : i32
    %c0_i32_2 = arith.constant 0 : i32
    return %c0_i32, %c0_i32_0, %c0_i32_1 : i32, i32, i32
  }
  func.func @transform_5(%arg0: i32, %arg1: i32) -> (i32, i32, i32) {
    %c0_i32 = arith.constant 0 : i32
    %c0_i32_0 = arith.constant 0 : i32
    %c0_i32_1 = arith.constant 0 : i32
    %c0_i32_2 = arith.constant 0 : i32
    return %c0_i32, %c0_i32_0, %c0_i32_1 : i32, i32, i32
  }
  func.func @transform_6(%arg0: i32, %arg1: i32) -> (i32, i32, i32) {
    %c0_i32 = arith.constant 0 : i32
    %c0_i32_0 = arith.constant 0 : i32
    %c0_i32_1 = arith.constant 0 : i32
    %c0_i32_2 = arith.constant 0 : i32
    return %c0_i32, %c0_i32_0, %c0_i32_1 : i32, i32, i32
  }
  func.func @transform_7(%arg0: i32, %arg1: i32) -> (i32, i32, i32) {
    %c0_i32 = arith.constant 0 : i32
    %c0_i32_0 = arith.constant 0 : i32
    %c0_i32_1 = arith.constant 0 : i32
    %c0_i32_2 = arith.constant 0 : i32
    return %c0_i32, %c0_i32_0, %c0_i32_1 : i32, i32, i32
  }
  func.func @transform_8(%arg0: i32, %arg1: i32) -> (i32, i32, i32) {
    %c0_i32 = arith.constant 0 : i32
    %c0_i32_0 = arith.constant 0 : i32
    %c0_i32_1 = arith.constant 0 : i32
    %c0_i32_2 = arith.constant 0 : i32
    return %c0_i32, %c0_i32_0, %c0_i32_1 : i32, i32, i32
  }
  func.func @transform_9(%arg0: i32, %arg1: i32) -> (i32, i32, i32) {
    %c0_i32 = arith.constant 0 : i32
    %c0_i32_0 = arith.constant 0 : i32
    %c0_i32_1 = arith.constant 0 : i32
    %c0_i32_2 = arith.constant 0 : i32
    return %c0_i32, %c0_i32_0, %c0_i32_1 : i32, i32, i32
  }
  func.func @transform_10(%arg0: i32, %arg1: i32) -> (i32, i32, i32) {
    %c0_i32 = arith.constant 0 : i32
    %c0_i32_0 = arith.constant 0 : i32
    %c0_i32_1 = arith.constant 0 : i32
    %c0_i32_2 = arith.constant 0 : i32
    return %c0_i32, %c0_i32_0, %c0_i32_1 : i32, i32, i32
  }
  func.func @transform_11(%arg0: i32, %arg1: i32) -> (i32, i32, i32) {
    %c0_i32 = arith.constant 0 : i32
    %c0_i32_0 = arith.constant 0 : i32
    %c0_i32_1 = arith.constant 0 : i32
    %c0_i32_2 = arith.constant 0 : i32
    return %c0_i32, %c0_i32_0, %c0_i32_1 : i32, i32, i32
  }
  func.func @transform_12(%arg0: i32, %arg1: i32) -> (i32, i32, i32) {
    %c0_i32 = arith.constant 0 : i32
    %c0_i32_0 = arith.constant 0 : i32
    %c0_i32_1 = arith.constant 0 : i32
    %c0_i32_2 = arith.constant 0 : i32
    return %c0_i32, %c0_i32_0, %c0_i32_1 : i32, i32, i32
  }
  func.func @transform_13(%arg0: i32, %arg1: i32) -> (i32, i32) {
    %c0_i32 = arith.constant 0 : i32
    %c0_i32_0 = arith.constant 0 : i32
    %c0_i32_1 = arith.constant 0 : i32
    return %c0_i32, %c0_i32_0 : i32, i32
  }
  func.func @transform_14(%arg0: i32, %arg1: i32) -> (i32, i32) {
    %c0_i32 = arith.constant 0 : i32
    %c0_i32_0 = arith.constant 0 : i32
    %c0_i32_1 = arith.constant 0 : i32
    return %c0_i32, %c0_i32_0 : i32, i32
  }
  func.func @transform_15(%arg0: i32, %arg1: i32) -> (i32, i32, i32) {
    %c0_i32 = arith.constant 0 : i32
    %c0_i32_0 = arith.constant 0 : i32
    %c0_i32_1 = arith.constant 0 : i32
    return %arg0, %c0_i32, %c0_i32_0 : i32, i32, i32
  }
}

</mosaic_0001>

<llo_original>
// kernel: tpu_custom_call.1
$region0: #{tpu_custom_call.1}
  #allocation0 [shape = 'u32[]', space=smem, size = 0x4, offset = 0x4, fixed_abs, tag = 'smem constant byte address 0x4 - core index']
  #allocation1 [shape = 'u32[144,128]{1,0:T(1,128)}', space=vmem, size = 0x12000, scoped, tag = 'internal scratch']
  #allocation2 [shape = 'f32[256,128]{1,0:T(8,128)}', space=vmem, size = 0x20000, scoped, tag = 'scratch operand']
  %s0 = inlined_call_operand.hbm [shape: bf16[32,16,128], index: 0, kind: input, shape index: {}]
  %s1 = inlined_call_operand.hbm [shape: bf16[128,128], index: 1, kind: input, shape index: {}]
  %s2 = inlined_call_operand.vmem [shape: f32[1,128], index: 2, kind: input, shape index: {}]
  %s3 = inlined_call_operand.hbm [shape: f32[2,1,128], index: 3, kind: input, shape index: {}]
  %s4 = inlined_call_operand.hbm [shape: f32[2,1,128], index: 4, kind: input, shape index: {}]
  %s5 = inlined_call_operand.hbm [shape: bf16[2,128,256], index: 5, kind: input, shape index: {}]
  %s6 = inlined_call_operand.vmem [shape: f32[2,1,256], index: 6, kind: input, shape index: {}]
  %s7 = inlined_call_operand.hbm [shape: f32[2,1,128], index: 7, kind: input, shape index: {}]
  %s8 = inlined_call_operand.hbm [shape: f32[2,1,128], index: 8, kind: input, shape index: {}]
  %s9 = inlined_call_operand.hbm [shape: bf16[2,16,16], index: 9, kind: input, shape index: {}]
  %s10 = inlined_call_operand.vmem [shape: f32[2,16,128], index: 10, kind: input, shape index: {}]
  %s11 = inlined_call_operand.hbm [shape: bf16[2,128,128], index: 11, kind: input, shape index: {}]
  %s12 = inlined_call_operand.vmem [shape: f32[2,1,128], index: 12, kind: input, shape index: {}]
  %s13 = inlined_call_operand.hbm [shape: bf16[128,128], index: 13, kind: input, shape index: {}]
  %s14 = inlined_call_operand.vmem [shape: f32[1,128], index: 14, kind: input, shape index: {}]
  %s15 = inlined_call_operand.hbm [shape: f32[2,16,128], index: 15, kind: output, shape index: {}]
  %s16 = sld [smem:[#allocation0]]
  $region141: #{tpu_custom_call.1} parent=0
    _
  %s18 = ssub.s32 1, %s16
  %s19 = scalar_select 0, %s18, %s16
  $region1: #{tpu_custom_call.1} parent=0
    #allocation3 [shape = 'u8[131072]{0}', space=vmem, size = 0x20000, scoped, tag = 'input window, operand 0']
    #allocation4 [shape = 's32[2]{0}', space=sflag, size = 0x8, scoped, tag = 'scoped memory for tpu_custom_call.1']
    #allocation5 [shape = 's32[2]{0}', space=sflag, size = 0x8, scoped, tag = 'scoped memory for tpu_custom_call.1']
    #allocation6 [shape = 'u8[32768]{0}', space=vmem, size = 0x8000, scoped, tag = 'input window, operand 1, single buffered']
    #allocation7 [shape = 's32[1]{0}', space=sflag, size = 0x4, scoped, tag = 'scoped memory for tpu_custom_call.1']
    #allocation8 [shape = 'u8[1024]{0}', space=vmem, size = 0x400, scoped, tag = 'input window, operand 3, single buffered']
    #allocation9 [shape = 'u8[1024]{0}', space=vmem, size = 0x400, scoped, tag = 'input window, operand 4, single buffered']
    #allocation10 [shape = 's32[1]{0}', space=sflag, size = 0x4, scoped, tag = 'scoped memory for tpu_custom_call.1']
    #allocation11 [shape = 'u8[131072]{0}', space=vmem, size = 0x20000, scoped, tag = 'input window, operand 5, single buffered']
    #allocation12 [shape = 'u8[1024]{0}', space=vmem, size = 0x400, scoped, tag = 'input window, operand 7, single buffered']
    #allocation13 [shape = 's32[1]{0}', space=sflag, size = 0x4, scoped, tag = 'scoped memory for tpu_custom_call.1']
    #allocation14 [shape = 'u8[1024]{0}', space=vmem, size = 0x400, scoped, tag = 'input window, operand 8, single buffered']
    #allocation15 [shape = 'u8[8192]{0}', space=vmem, size = 0x2000, scoped, tag = 'input window, operand 9, single buffered']
    #allocation16 [shape = 's32[1]{0}', space=sflag, size = 0x4, scoped, tag = 'scoped memory for tpu_custom_call.1']
    #allocation17 [shape = 'u8[65536]{0}', space=vmem, size = 0x10000, scoped, tag = 'input window, operand 11, single buffered']
    #allocation18 [shape = 'u8[32768]{0}', space=vmem, size = 0x8000, scoped, tag = 'input window, operand 13, single buffered']
    #allocation19 [shape = 's32[1]{0}', space=sflag, size = 0x4, scoped, tag = 'scoped memory for tpu_custom_call.1']
    #allocation20 [shape = 'u8[16384]{0}', space=vmem, size = 0x4000, scoped, tag = 'output window, operand 0']
    %20 = vsyncpa [#allocation4], 0
    %s21 = scalar_lea.sflag [#allocation4], 1
    %22 = vsyncpa %s21, 0
    %23 = vsyncpa [#allocation7], 0
    %24 = vsyncpa [#allocation10], 0
    %25 = vsyncpa [#allocation13], 0
    %26 = vsyncpa [#allocation16], 0
    %27 = vsyncpa [#allocation19], 0
    %28 = vsyncpa [#allocation5], 0
    %s29 = scalar_lea.sflag [#allocation5], 1
    %30 = vsyncpa %s29, 0
    loop: start=0, step=1, limit=6
    $region2: #{tpu_custom_call.1} parent=1 // loop_pre_header
      _
    $region3: #{tpu_custom_call.1} parent=1 // loop_header
      %s32 = sphi 0, %s36
      %p33 = scmp.ge.s32.totalorder %s32, 6
      %s39 = sphi 0, %s51
      %s40 = sphi 0, %s47
      %s41 = sphi 0, %s39
      %s42 = sphi 0, %s40
      %s43 = sphi 0, %s41
      %s44 = sphi 0, %s42
      %s54 = sphi 0, %s56
      %s57 = sphi 0, %s54
      %s58 = sphi 0, %s57
      %s74 = sphi 0, %s58
      %s78 = sphi 0, %s78
      %s80 = sphi 0, %s78
      %s81 = sphi 0, %s80
      %s95 = sphi 0, %s81
      %s99 = sphi 0, %s99
      %s101 = sphi 0, %s99
      %s102 = sphi 0, %s101
      %s116 = sphi 0, %s102
      %s120 = sphi 0, %s120
      %s122 = sphi 0, %s120
      %s123 = sphi 0, %s122
      %s137 = sphi 0, %s123
      %s141 = sphi 0, %s141
      %s143 = sphi 0, %s141
      %s144 = sphi 0, %s143
      %s158 = sphi 0, %s144
      %s162 = sphi 0, %s162
      %s164 = sphi 0, %s162
      %s165 = sphi 0, %s164
      %s179 = sphi 0, %s165
      %s183 = sphi 0, %s183
      %s185 = sphi 0, %s183
      %s186 = sphi 0, %s185
      %s200 = sphi 0, %s186
      %s204 = sphi 0, %s204
      %s206 = sphi 0, %s204
      %s207 = sphi 0, %s206
      %s221 = sphi 0, %s207
      %s225 = sphi 0, %s225
      %s227 = sphi 0, %s225
      %s228 = sphi 0, %s227
      %s242 = sphi 0, %s228
      %s246 = sphi 0, %s246
      %s248 = sphi 0, %s246
      %s249 = sphi 0, %s248
      %s263 = sphi 0, %s249
      %s267 = sphi 0, %s267
      %s269 = sphi 0, %s267
      %s270 = sphi 0, %s269
      %s284 = sphi 0, %s270
      %s288 = sphi 0, %s288
      %s290 = sphi 0, %s288
      %s291 = sphi 0, %s290
      %s305 = sphi 0, %s291
      %s309 = sphi 0, %s309
      %s311 = sphi 0, %s309
      %s312 = sphi 0, %s311
      %s326 = sphi 0, %s312
      %s330 = sphi 0, %s330
      %s332 = sphi 0, %s330
      %s333 = sphi 0, %s332
      %s347 = sphi 0, %s333
      %s351 = sphi 0, %s351
      %s353 = sphi 0, %s351
      %s354 = sphi 0, %s353
      %s368 = sphi 0, %s354
      %s374 = sphi 0, %s376
      %s377 = sphi 0, %s374
      %s378 = sphi 0, %s377
      %s394 = sphi 0, %s378
    $region4: #{tpu_custom_call.1} parent=1 // loop_header_branch
      %35 = sbr.rel (%p33) target = $region8
    $region5: #{tpu_custom_call.1} parent=1 // loop_body
      %s37 = ssub.s32 %s32, 1
      %s38 = ssub.s32 %s32, 2
      %s45 = sadd.s32 1, %s40
      %p46 = scmp.ge.s32.totalorder %s45, 2
      %s47 = scalar_select %p46, 0, %s45
      %s48 = sadd.s32 1, %s39
      %s49 = scalar_select %p46, %s48, %s39
      %p50 = scmp.ge.s32.totalorder %s49, 2
      %s51 = scalar_select %p50, 0, %s49
      %s52 = ssub.s32 %s39, %s51
      %p53 = scmp.eq.s32.totalorder %s52, 0
      %s55 = sadd.s32 %s54, 1
      %s56 = scalar_select %p53, %s54, %s55
      %p59 = pneg %p53
      %p60 = scmp.eq.s32.totalorder %s32, 3
      %p61 = por %p59, %p60
      %p62 = scmp.ne.s32.totalorder %s54, %s57
      %p63 = scmp.eq.s32.totalorder %s32, 0
      %p64 = por %p62, %p63
      %p65 = scmp.ne.s32.totalorder %s54, %s57
      %p66 = scmp.eq.s32.totalorder %s37, 3
      %p67 = por %p65, %p66
      %p68 = scmp.ne.s32.totalorder %s57, %s58
      %p69 = scmp.eq.s32.totalorder %s37, 0
      %p70 = por %p68, %p69
      %p71 = scmp.ne.s32.totalorder %s57, %s58
      %p72 = scmp.eq.s32.totalorder %s38, 3
      %p73 = por %p71, %p72
      %p75 = scmp.ne.s32.totalorder %s58, %s74
      %p76 = scmp.eq.s32.totalorder %s38, 0
      %p77 = por %p75, %p76
      %s79 = sadd.s32 %s78, 1
      %p82 = scmp.eq.s32.totalorder %s32, 3
      %p83 = scmp.ne.s32.totalorder %s78, %s80
      %p84 = scmp.eq.s32.totalorder %s32, 0
      %p85 = por %p83, %p84
      %p86 = scmp.ne.s32.totalorder %s78, %s80
      %p87 = scmp.eq.s32.totalorder %s37, 3
      %p88 = por %p86, %p87
      %p89 = scmp.ne.s32.totalorder %s80, %s81
      %p90 = scmp.eq.s32.totalorder %s37, 0
      %p91 = por %p89, %p90
      %p92 = scmp.ne.s32.totalorder %s80, %s81
      %p93 = scmp.eq.s32.totalorder %s38, 3
      %p94 = por %p92, %p93
      %p96 = scmp.ne.s32.totalorder %s81, %s95
      %p97 = scmp.eq.s32.totalorder %s38, 0
      %p98 = por %p96, %p97
      %s100 = sadd.s32 %s99, 1
      %p103 = scmp.eq.s32.totalorder %s32, 3
      %p104 = scmp.ne.s32.totalorder %s99, %s101
      %p105 = scmp.eq.s32.totalorder %s32, 0
      %p106 = por %p104, %p105
      %p107 = scmp.ne.s32.totalorder %s99, %s101
      %p108 = scmp.eq.s32.totalorder %s37, 3
      %p109 = por %p107, %p108
      %p110 = scmp.ne.s32.totalorder %s101, %s102
      %p111 = scmp.eq.s32.totalorder %s37, 0
      %p112 = por %p110, %p111
      %p113 = scmp.ne.s32.totalorder %s101, %s102
      %p114 = scmp.eq.s32.totalorder %s38, 3
      %p115 = por %p113, %p114
      %p117 = scmp.ne.s32.totalorder %s102, %s116
      %p118 = scmp.eq.s32.totalorder %s38, 0
      %p119 = por %p117, %p118
      %s121 = sadd.s32 %s120, 1
      %p124 = scmp.eq.s32.totalorder %s32, 3
      %p125 = scmp.ne.s32.totalorder %s120, %s122
      %p126 = scmp.eq.s32.totalorder %s32, 0
      %p127 = por %p125, %p126
      %p128 = scmp.ne.s32.totalorder %s120, %s122
      %p129 = scmp.eq.s32.totalorder %s37, 3
      %p130 = por %p128, %p129
      %p131 = scmp.ne.s32.totalorder %s122, %s123
      %p132 = scmp.eq.s32.totalorder %s37, 0
      %p133 = por %p131, %p132
      %p134 = scmp.ne.s32.totalorder %s122, %s123
      %p135 = scmp.eq.s32.totalorder %s38, 3
      %p136 = por %p134, %p135
      %p138 = scmp.ne.s32.totalorder %s123, %s137
      %p139 = scmp.eq.s32.totalorder %s38, 0
      %p140 = por %p138, %p139
      %s142 = sadd.s32 %s141, 1
      %p145 = scmp.eq.s32.totalorder %s32, 3
      %p146 = scmp.ne.s32.totalorder %s141, %s143
      %p147 = scmp.eq.s32.totalorder %s32, 0
      %p148 = por %p146, %p147
      %p149 = scmp.ne.s32.totalorder %s141, %s143
      %p150 = scmp.eq.s32.totalorder %s37, 3
      %p151 = por %p149, %p150
      %p152 = scmp.ne.s32.totalorder %s143, %s144
      %p153 = scmp.eq.s32.totalorder %s37, 0
      %p154 = por %p152, %p153
      %p155 = scmp.ne.s32.totalorder %s143, %s144
      %p156 = scmp.eq.s32.totalorder %s38, 3
      %p157 = por %p155, %p156
      %p159 = scmp.ne.s32.totalorder %s144, %s158
      %p160 = scmp.eq.s32.totalorder %s38, 0
      %p161 = por %p159, %p160
      %s163 = sadd.s32 %s162, 1
      %p166 = scmp.eq.s32.totalorder %s32, 3
      %p167 = scmp.ne.s32.totalorder %s162, %s164
      %p168 = scmp.eq.s32.totalorder %s32, 0
      %p169 = por %p167, %p168
      %p170 = scmp.ne.s32.totalorder %s162, %s164
      %p171 = scmp.eq.s32.totalorder %s37, 3
      %p172 = por %p170, %p171
      %p173 = scmp.ne.s32.totalorder %s164, %s165
      %p174 = scmp.eq.s32.totalorder %s37, 0
      %p175 = por %p173, %p174
      %p176 = scmp.ne.s32.totalorder %s164, %s165
      %p177 = scmp.eq.s32.totalorder %s38, 3
      %p178 = por %p176, %p177
      %p180 = scmp.ne.s32.totalorder %s165, %s179
      %p181 = scmp.eq.s32.totalorder %s38, 0
      %p182 = por %p180, %p181
      %s184 = sadd.s32 %s183, 1
      %p187 = scmp.eq.s32.totalorder %s32, 3
      %p188 = scmp.ne.s32.totalorder %s183, %s185
      %p189 = scmp.eq.s32.totalorder %s32, 0
      %p190 = por %p188, %p189
      %p191 = scmp.ne.s32.totalorder %s183, %s185
      %p192 = scmp.eq.s32.totalorder %s37, 3
      %p193 = por %p191, %p192
      %p194 = scmp.ne.s32.totalorder %s185, %s186
      %p195 = scmp.eq.s32.totalorder %s37, 0
      %p196 = por %p194, %p195
      %p197 = scmp.ne.s32.totalorder %s185, %s186
      %p198 = scmp.eq.s32.totalorder %s38, 3
      %p199 = por %p197, %p198
      %p201 = scmp.ne.s32.totalorder %s186, %s200
      %p202 = scmp.eq.s32.totalorder %s38, 0
      %p203 = por %p201, %p202
      %s205 = sadd.s32 %s204, 1
      %p208 = scmp.eq.s32.totalorder %s32, 3
      %p209 = scmp.ne.s32.totalorder %s204, %s206
      %p210 = scmp.eq.s32.totalorder %s32, 0
      %p211 = por %p209, %p210
      %p212 = scmp.ne.s32.totalorder %s204, %s206
      %p213 = scmp.eq.s32.totalorder %s37, 3
      %p214 = por %p212, %p213
      %p215 = scmp.ne.s32.totalorder %s206, %s207
      %p216 = scmp.eq.s32.totalorder %s37, 0
      %p217 = por %p215, %p216
      %p218 = scmp.ne.s32.totalorder %s206, %s207
      %p219 = scmp.eq.s32.totalorder %s38, 3
      %p220 = por %p218, %p219
      %p222 = scmp.ne.s32.totalorder %s207, %s221
      %p223 = scmp.eq.s32.totalorder %s38, 0
      %p224 = por %p222, %p223
      %s226 = sadd.s32 %s225, 1
      %p229 = scmp.eq.s32.totalorder %s32, 3
      %p230 = scmp.ne.s32.totalorder %s225, %s227
      %p231 = scmp.eq.s32.totalorder %s32, 0
      %p232 = por %p230, %p231
      %p233 = scmp.ne.s32.totalorder %s225, %s227
      %p234 = scmp.eq.s32.totalorder %s37, 3
      %p235 = por %p233, %p234
      %p236 = scmp.ne.s32.totalorder %s227, %s228
      %p237 = scmp.eq.s32.totalorder %s37, 0
      %p238 = por %p236, %p237
      %p239 = scmp.ne.s32.totalorder %s227, %s228
      %p240 = scmp.eq.s32.totalorder %s38, 3
      %p241 = por %p239, %p240
      %p243 = scmp.ne.s32.totalorder %s228, %s242
      %p244 = scmp.eq.s32.totalorder %s38, 0
      %p245 = por %p243, %p244
      %s247 = sadd.s32 %s246, 1
      %p250 = scmp.eq.s32.totalorder %s32, 3
      %p251 = scmp.ne.s32.totalorder %s246, %s248
      %p252 = scmp.eq.s32.totalorder %s32, 0
      %p253 = por %p251, %p252
      %p254 = scmp.ne.s32.totalorder %s246, %s248
      %p255 = scmp.eq.s32.totalorder %s37, 3
      %p256 = por %p254, %p255
      %p257 = scmp.ne.s32.totalorder %s248, %s249
      %p258 = scmp.eq.s32.totalorder %s37, 0
      %p259 = por %p257, %p258
      %p260 = scmp.ne.s32.totalorder %s248, %s249
      %p261 = scmp.eq.s32.totalorder %s38, 3
      %p262 = por %p260, %p261
      %p264 = scmp.ne.s32.totalorder %s249, %s263
      %p265 = scmp.eq.s32.totalorder %s38, 0
      %p266 = por %p264, %p265
      %s268 = sadd.s32 %s267, 1
      %p271 = scmp.eq.s32.totalorder %s32, 3
      %p272 = scmp.ne.s32.totalorder %s267, %s269
      %p273 = scmp.eq.s32.totalorder %s32, 0
      %p274 = por %p272, %p273
      %p275 = scmp.ne.s32.totalorder %s267, %s269
      %p276 = scmp.eq.s32.totalorder %s37, 3
      %p277 = por %p275, %p276
      %p278 = scmp.ne.s32.totalorder %s269, %s270
      %p279 = scmp.eq.s32.totalorder %s37, 0
      %p280 = por %p278, %p279
      %p281 = scmp.ne.s32.totalorder %s269, %s270
      %p282 = scmp.eq.s32.totalorder %s38, 3
      %p283 = por %p281, %p282
      %p285 = scmp.ne.s32.totalorder %s270, %s284
      %p286 = scmp.eq.s32.totalorder %s38, 0
      %p287 = por %p285, %p286
      %s289 = sadd.s32 %s288, 1
      %p292 = scmp.eq.s32.totalorder %s32, 3
      %p293 = scmp.ne.s32.totalorder %s288, %s290
      %p294 = scmp.eq.s32.totalorder %s32, 0
      %p295 = por %p293, %p294
      %p296 = scmp.ne.s32.totalorder %s288, %s290
      %p297 = scmp.eq.s32.totalorder %s37, 3
      %p298 = por %p296, %p297
      %p299 = scmp.ne.s32.totalorder %s290, %s291
      %p300 = scmp.eq.s32.totalorder %s37, 0
      %p301 = por %p299, %p300
      %p302 = scmp.ne.s32.totalorder %s290, %s291
      %p303 = scmp.eq.s32.totalorder %s38, 3
      %p304 = por %p302, %p303
      %p306 = scmp.ne.s32.totalorder %s291, %s305
      %p307 = scmp.eq.s32.totalorder %s38, 0
      %p308 = por %p306, %p307
      %s310 = sadd.s32 %s309, 1
      %p313 = scmp.eq.s32.totalorder %s32, 3
      %p314 = scmp.ne.s32.totalorder %s309, %s311
      %p315 = scmp.eq.s32.totalorder %s32, 0
      %p316 = por %p314, %p315
      %p317 = scmp.ne.s32.totalorder %s309, %s311
      %p318 = scmp.eq.s32.totalorder %s37, 3
      %p319 = por %p317, %p318
      %p320 = scmp.ne.s32.totalorder %s311, %s312
      %p321 = scmp.eq.s32.totalorder %s37, 0
      %p322 = por %p320, %p321
      %p323 = scmp.ne.s32.totalorder %s311, %s312
      %p324 = scmp.eq.s32.totalorder %s38, 3
      %p325 = por %p323, %p324
      %p327 = scmp.ne.s32.totalorder %s312, %s326
      %p328 = scmp.eq.s32.totalorder %s38, 0
      %p329 = por %p327, %p328
      %s331 = sadd.s32 %s330, 1
      %p334 = scmp.eq.s32.totalorder %s32, 3
      %p335 = scmp.ne.s32.totalorder %s330, %s332
      %p336 = scmp.eq.s32.totalorder %s32, 0
      %p337 = por %p335, %p336
      %p338 = scmp.ne.s32.totalorder %s330, %s332
      %p339 = scmp.eq.s32.totalorder %s37, 3
      %p340 = por %p338, %p339
      %p341 = scmp.ne.s32.totalorder %s332, %s333
      %p342 = scmp.eq.s32.totalorder %s37, 0
      %p343 = por %p341, %p342
      %p344 = scmp.ne.s32.totalorder %s332, %s333
      %p345 = scmp.eq.s32.totalorder %s38, 3
      %p346 = por %p344, %p345
      %p348 = scmp.ne.s32.totalorder %s333, %s347
      %p349 = scmp.eq.s32.totalorder %s38, 0
      %p350 = por %p348, %p349
      %s352 = sadd.s32 %s351, 1
      %p355 = scmp.eq.s32.totalorder %s32, 3
      %p356 = scmp.ne.s32.totalorder %s351, %s353
      %p357 = scmp.eq.s32.totalorder %s32, 0
      %p358 = por %p356, %p357
      %p359 = scmp.ne.s32.totalorder %s351, %s353
      %p360 = scmp.eq.s32.totalorder %s37, 3
      %p361 = por %p359, %p360
      %p362 = scmp.ne.s32.totalorder %s353, %s354
      %p363 = scmp.eq.s32.totalorder %s37, 0
      %p364 = por %p362, %p363
      %p365 = scmp.ne.s32.totalorder %s353, %s354
      %p366 = scmp.eq.s32.totalorder %s38, 3
      %p367 = por %p365, %p366
      %p369 = scmp.ne.s32.totalorder %s354, %s368
      %p370 = scmp.eq.s32.totalorder %s38, 0
      %p371 = por %p369, %p370
      %s372 = ssub.s32 %s39, %s51
      %p373 = scmp.eq.s32.totalorder %s372, 0
      %s375 = sadd.s32 %s374, 1
      %s376 = scalar_select %p373, %s374, %s375
      %p379 = pneg %p373
      %p380 = scmp.eq.s32.totalorder %s32, 3
      %p381 = por %p379, %p380
      %p382 = scmp.ne.s32.totalorder %s374, %s377
      %p383 = scmp.eq.s32.totalorder %s32, 0
      %p384 = por %p382, %p383
      %p385 = scmp.ne.s32.totalorder %s374, %s377
      %p386 = scmp.eq.s32.totalorder %s37, 3
      %p387 = por %p385, %p386
      %p388 = scmp.ne.s32.totalorder %s377, %s378
      %p389 = scmp.eq.s32.totalorder %s37, 0
      %p390 = por %p388, %p389
      %p391 = scmp.ne.s32.totalorder %s377, %s378
      %p392 = scmp.eq.s32.totalorder %s38, 3
      %p393 = por %p391, %p392
      %p395 = scmp.ne.s32.totalorder %s378, %s394
      %p396 = scmp.eq.s32.totalorder %s38, 0
      %p397 = por %p395, %p396
      %p398 = scmp.le.s32.totalorder 1, %s32
      %p399 = scmp.lt.s32.totalorder %s32, 5
      %p400 = pnand %p398, %p399
      %p401 = pneg %p400
      // Predicated region
      $region9: #{tpu_custom_call.1} parent=5 // pred_check
        _
      $region10: #{tpu_custom_call.1} parent=5 // pred_check_branch
        %403 = sbr.rel (%p400) target = $region12
      $region11: #{tpu_custom_call.1} parent=5 // pred_region
        %s404 = ssub.s32 %s32, 1
        // Predicated region
        $region13: #{tpu_custom_call.1} parent=11 // pred_check
          %p405 = pneg %p91
        $region14: #{tpu_custom_call.1} parent=11 // pred_check_branch
          %407 = sbr.rel (%p405) target = $region16
        $region15: #{tpu_custom_call.1} parent=11 // pred_region
          %s409 = ssub.s32 1024, 1024
          %410 = vsyncadd [#allocation7], %s409
          %s411 = sshll.u32 [#allocation6], 4
          %s412 = int_to_ptr.vmem [resolvable:$true] %s411
          %417 = dma.hbm_to_vmem [thread:$0]  %s1, 1024, %s412, [#allocation7], 64, 64, 4
        $region16: #{tpu_custom_call.1} parent=11 // pred_fallthru
          _
        // Predicated region
        $region17: #{tpu_custom_call.1} parent=11 // pred_check
          %p418 = pneg %p112
        $region18: #{tpu_custom_call.1} parent=11 // pred_check_branch
          %420 = sbr.rel (%p418) target = $region20
        $region19: #{tpu_custom_call.1} parent=11 // pred_region
          _
        $region20: #{tpu_custom_call.1} parent=11 // pred_fallthru
          _
        // Predicated region
        $region21: #{tpu_custom_call.1} parent=11 // pred_check
          %p421 = pneg %p133
        $region22: #{tpu_custom_call.1} parent=11 // pred_check_branch
          %423 = sbr.rel (%p421) target = $region24
        $region23: #{tpu_custom_call.1} parent=11 // pred_region
          %s425 = ssub.s32 32, 32
          %426 = vsyncadd [#allocation7], %s425
          %s427 = sshll.u32 [#allocation8], 4
          %s428 = int_to_ptr.vmem [resolvable:$true] %s427
          %433 = dma.hbm_to_vmem [thread:$0]  %s3, 32, %s428, [#allocation7], 16, 16, 1
        $region24: #{tpu_custom_call.1} parent=11 // pred_fallthru
          _
        // Predicated region
        $region25: #{tpu_custom_call.1} parent=11 // pred_check
          %p434 = pneg %p154
        $region26: #{tpu_custom_call.1} parent=11 // pred_check_branch
          %436 = sbr.rel (%p434) target = $region28
        $region27: #{tpu_custom_call.1} parent=11 // pred_region
          %s438 = ssub.s32 32, 32
          %439 = vsyncadd [#allocation10], %s438
          %s440 = sshll.u32 [#allocation9], 4
          %s441 = int_to_ptr.vmem [resolvable:$true] %s440
          %446 = dma.hbm_to_vmem [thread:$0]  %s4, 32, %s441, [#allocation10], 16, 16, 1
        $region28: #{tpu_custom_call.1} parent=11 // pred_fallthru
          _
        // Predicated region
        $region29: #{tpu_custom_call.1} parent=11 // pred_check
          %p447 = pneg %p175
        $region30: #{tpu_custom_call.1} parent=11 // pred_check_branch
          %449 = sbr.rel (%p447) target = $region32
        $region31: #{tpu_custom_call.1} parent=11 // pred_region
          %s451 = ssub.s32 4096, 4096
          %452 = vsyncadd [#allocation10], %s451
          %s453 = sshll.u32 [#allocation11], 4
          %s454 = int_to_ptr.vmem [resolvable:$true] %s453
          %459 = dma.hbm_to_vmem [thread:$0]  %s5, 4096, %s454, [#allocation10], 128, 128, 8
        $region32: #{tpu_custom_call.1} parent=11 // pred_fallthru
          _
        // Predicated region
        $region33: #{tpu_custom_call.1} parent=11 // pred_check
          %p460 = pneg %p196
        $region34: #{tpu_custom_call.1} parent=11 // pred_check_branch
          %462 = sbr.rel (%p460) target = $region36
        $region35: #{tpu_custom_call.1} parent=11 // pred_region
          _
        $region36: #{tpu_custom_call.1} parent=11 // pred_fallthru
          _
        // Predicated region
        $region37: #{tpu_custom_call.1} parent=11 // pred_check
          %p463 = pneg %p217
        $region38: #{tpu_custom_call.1} parent=11 // pred_check_branch
          %465 = sbr.rel (%p463) target = $region40
        $region39: #{tpu_custom_call.1} parent=11 // pred_region
          %s467 = ssub.s32 32, 32
          %468 = vsyncadd [#allocation13], %s467
          %s469 = sshll.u32 [#allocation12], 4
          %s470 = int_to_ptr.vmem [resolvable:$true] %s469
          %475 = dma.hbm_to_vmem [thread:$0]  %s7, 32, %s470, [#allocation13], 16, 16, 1
        $region40: #{tpu_custom_call.1} parent=11 // pred_fallthru
          _
        // Predicated region
        $region41: #{tpu_custom_call.1} parent=11 // pred_check
          %p476 = pneg %p238
        $region42: #{tpu_custom_call.1} parent=11 // pred_check_branch
          %478 = sbr.rel (%p476) target = $region44
        $region43: #{tpu_custom_call.1} parent=11 // pred_region
          %s480 = ssub.s32 32, 32
          %481 = vsyncadd [#allocation13], %s480
          %s482 = sshll.u32 [#allocation14], 4
          %s483 = int_to_ptr.vmem [resolvable:$true] %s482
          %488 = dma.hbm_to_vmem [thread:$0]  %s8, 32, %s483, [#allocation13], 16, 16, 1
        $region44: #{tpu_custom_call.1} parent=11 // pred_fallthru
          _
        // Predicated region
        $region45: #{tpu_custom_call.1} parent=11 // pred_check
          %p489 = pneg %p259
        $region46: #{tpu_custom_call.1} parent=11 // pred_check_branch
          %491 = sbr.rel (%p489) target = $region48
        $region47: #{tpu_custom_call.1} parent=11 // pred_region
          %s493 = ssub.s32 256, 256
          %494 = vsyncadd [#allocation16], %s493
          %s495 = sshll.u32 [#allocation15], 4
          %s496 = int_to_ptr.vmem [resolvable:$true] %s495
          %501 = dma.hbm_to_vmem [thread:$0]  %s9, 256, %s496, [#allocation16], 64, 64, 4
        $region48: #{tpu_custom_call.1} parent=11 // pred_fallthru
          _
        // Predicated region
        $region49: #{tpu_custom_call.1} parent=11 // pred_check
          %p502 = pneg %p280
        $region50: #{tpu_custom_call.1} parent=11 // pred_check_branch
          %504 = sbr.rel (%p502) target = $region52
        $region51: #{tpu_custom_call.1} parent=11 // pred_region
          _
        $region52: #{tpu_custom_call.1} parent=11 // pred_fallthru
          _
        // Predicated region
        $region53: #{tpu_custom_call.1} parent=11 // pred_check
          %p505 = pneg %p301
        $region54: #{tpu_custom_call.1} parent=11 // pred_check_branch
          %507 = sbr.rel (%p505) target = $region56
        $region55: #{tpu_custom_call.1} parent=11 // pred_region
          %s509 = ssub.s32 2048, 2048
          %510 = vsyncadd [#allocation16], %s509
          %s511 = sshll.u32 [#allocation17], 4
          %s512 = int_to_ptr.vmem [resolvable:$true] %s511
          %517 = dma.hbm_to_vmem [thread:$0]  %s11, 2048, %s512, [#allocation16], 64, 64, 4
        $region56: #{tpu_custom_call.1} parent=11 // pred_fallthru
          _
        // Predicated region
        $region57: #{tpu_custom_call.1} parent=11 // pred_check
          %p518 = pneg %p322
        $region58: #{tpu_custom_call.1} parent=11 // pred_check_branch
          %520 = sbr.rel (%p518) target = $region60
        $region59: #{tpu_custom_call.1} parent=11 // pred_region
          _
        $region60: #{tpu_custom_call.1} parent=11 // pred_fallthru
          _
        // Predicated region
        $region61: #{tpu_custom_call.1} parent=11 // pred_check
          %p521 = pneg %p343
        $region62: #{tpu_custom_call.1} parent=11 // pred_check_branch
          %523 = sbr.rel (%p521) target = $region64
        $region63: #{tpu_custom_call.1} parent=11 // pred_region
          %s525 = ssub.s32 1024, 1024
          %526 = vsyncadd [#allocation19], %s525
          %s527 = sshll.u32 [#allocation18], 4
          %s528 = int_to_ptr.vmem [resolvable:$true] %s527
          %533 = dma.hbm_to_vmem [thread:$0]  %s13, 1024, %s528, [#allocation19], 64, 64, 4
        $region64: #{tpu_custom_call.1} parent=11 // pred_fallthru
          _
        // Predicated region
        $region65: #{tpu_custom_call.1} parent=11 // pred_check
          %p534 = pneg %p364
        $region66: #{tpu_custom_call.1} parent=11 // pred_check_branch
          %536 = sbr.rel (%p534) target = $region68
        $region67: #{tpu_custom_call.1} parent=11 // pred_region
          _
        $region68: #{tpu_custom_call.1} parent=11 // pred_fallthru
          _
      $region12: #{tpu_custom_call.1} parent=5 // pred_fallthru
        _
      %p537 = scmp.lt.s32.totalorder %s32, 4
      // Predicated region
      $region69: #{tpu_custom_call.1} parent=5 // pred_check
        %p538 = pneg %p537
      $region70: #{tpu_custom_call.1} parent=5 // pred_check_branch
        %540 = sbr.rel (%p538) target = $region72
      $region71: #{tpu_custom_call.1} parent=5 // pred_region
        // Predicated region
        $region73: #{tpu_custom_call.1} parent=71 // pred_check
          %p541 = pneg %p64
        $region74: #{tpu_custom_call.1} parent=71 // pred_check_branch
          %543 = sbr.rel (%p541) target = $region76
        $region75: #{tpu_custom_call.1} parent=71 // pred_region
          %s544 = sand.u32 %s54, 1
          %s545 = scalar_lea.sflag [#allocation4], %s544
          %s546 = sand.u32 %s54, 1
          %s547 = smul.addr %s546, 128
          %s548 = scalar_lea.vmem [#allocation3], %s547
          %s549 = smul.u32 16, %s39
          %s551 = ssub.s32 2048, 2048
          %552 = vsyncadd %s545, %s551
          %s553 = smul.addr %s549, 2
          %s554 = smul.addr %s553, 64
          %s555 = scalar_lea.hbm %s0, %s554
          %s556 = sshll.u32 %s548, 4
          %s557 = int_to_ptr.vmem [resolvable:$true] %s556
          %562 = dma.hbm_to_vmem [thread:$0]  %s555, 2048, %s557, %s545, 64, 64, 4
        $region76: #{tpu_custom_call.1} parent=71 // pred_fallthru
          _
      $region72: #{tpu_custom_call.1} parent=5 // pred_fallthru
        _
      %p563 = scmp.le.s32.totalorder 1, %s32
      %p564 = scmp.lt.s32.totalorder %s32, 5
      %p565 = pnand %p563, %p564
      %p566 = pneg %p565
      // Predicated region
      $region77: #{tpu_custom_call.1} parent=5 // pred_check
        _
      $region78: #{tpu_custom_call.1} parent=5 // pred_check_branch
        %568 = sbr.rel (%p565) target = $region80
      $region79: #{tpu_custom_call.1} parent=5 // pred_region
        %s569 = ssub.s32 %s32, 1
        %s570 = sand.u32 %s57, 1
        %s571 = scalar_lea.sflag [#allocation4], %s570
        %s572 = sand.u32 %s57, 1
        %s573 = smul.addr %s572, 128
        %s574 = scalar_lea.vmem [#allocation3], %s573
        // Predicated region
        $region81: #{tpu_custom_call.1} parent=79 // pred_check
          %p575 = pneg %p70
        $region82: #{tpu_custom_call.1} parent=79 // pred_check_branch
          %577 = sbr.rel (%p575) target = $region84
        $region83: #{tpu_custom_call.1} parent=79 // pred_region
          %578 = dma.done %s571, 2048
        $region84: #{tpu_custom_call.1} parent=79 // pred_fallthru
          _
        // Predicated region
        $region85: #{tpu_custom_call.1} parent=79 // pred_check
          %p579 = pneg %p91
        $region86: #{tpu_custom_call.1} parent=79 // pred_check_branch
          %581 = sbr.rel (%p579) target = $region88
        $region87: #{tpu_custom_call.1} parent=79 // pred_region
          %582 = dma.done [#allocation7], 1024
        $region88: #{tpu_custom_call.1} parent=79 // pred_fallthru
          _
        // Predicated region
        $region89: #{tpu_custom_call.1} parent=79 // pred_check
          %p583 = pneg %p133
        $region90: #{tpu_custom_call.1} parent=79 // pred_check_branch
          %585 = sbr.rel (%p583) target = $region92
        $region91: #{tpu_custom_call.1} parent=79 // pred_region
          %586 = dma.done [#allocation7], 32
        $region92: #{tpu_custom_call.1} parent=79 // pred_fallthru
          _
        // Predicated region
        $region93: #{tpu_custom_call.1} parent=79 // pred_check
          %p587 = pneg %p154
        $region94: #{tpu_custom_call.1} parent=79 // pred_check_branch
          %589 = sbr.rel (%p587) target = $region96
        $region95: #{tpu_custom_call.1} parent=79 // pred_region
          %590 = dma.done [#allocation10], 32
        $region96: #{tpu_custom_call.1} parent=79 // pred_fallthru
          _
        // Predicated region
        $region97: #{tpu_custom_call.1} parent=79 // pred_check
          %p591 = pneg %p175
        $region98: #{tpu_custom_call.1} parent=79 // pred_check_branch
          %593 = sbr.rel (%p591) target = $region100
        $region99: #{tpu_custom_call.1} parent=79 // pred_region
          %594 = dma.done [#allocation10], 4096
        $region100: #{tpu_custom_call.1} parent=79 // pred_fallthru
          _
        // Predicated region
        $region101: #{tpu_custom_call.1} parent=79 // pred_check
          %p595 = pneg %p217
        $region102: #{tpu_custom_call.1} parent=79 // pred_check_branch
          %597 = sbr.rel (%p595) target = $region104
        $region103: #{tpu_custom_call.1} parent=79 // pred_region
          %598 = dma.done [#allocation13], 32
        $region104: #{tpu_custom_call.1} parent=79 // pred_fallthru
          _
        // Predicated region
        $region105: #{tpu_custom_call.1} parent=79 // pred_check
          %p599 = pneg %p238
        $region106: #{tpu_custom_call.1} parent=79 // pred_check_branch
          %601 = sbr.rel (%p599) target = $region108
        $region107: #{tpu_custom_call.1} parent=79 // pred_region
          %602 = dma.done [#allocation13], 32
        $region108: #{tpu_custom_call.1} parent=79 // pred_fallthru
          _
        // Predicated region
        $region109: #{tpu_custom_call.1} parent=79 // pred_check
          %p603 = pneg %p259
        $region110: #{tpu_custom_call.1} parent=79 // pred_check_branch
          %605 = sbr.rel (%p603) target = $region112
        $region111: #{tpu_custom_call.1} parent=79 // pred_region
          %606 = dma.done [#allocation16], 256
        $region112: #{tpu_custom_call.1} parent=79 // pred_fallthru
          _
        // Predicated region
        $region113: #{tpu_custom_call.1} parent=79 // pred_check
          %p607 = pneg %p301
        $region114: #{tpu_custom_call.1} parent=79 // pred_check_branch
          %609 = sbr.rel (%p607) target = $region116
        $region115: #{tpu_custom_call.1} parent=79 // pred_region
          %610 = dma.done [#allocation16], 2048
        $region116: #{tpu_custom_call.1} parent=79 // pred_fallthru
          _
        // Predicated region
        $region117: #{tpu_custom_call.1} parent=79 // pred_check
          %p611 = pneg %p343
        $region118: #{tpu_custom_call.1} parent=79 // pred_check_branch
          %613 = sbr.rel (%p611) target = $region120
        $region119: #{tpu_custom_call.1} parent=79 // pred_region
          %614 = dma.done [#allocation19], 1024
        $region120: #{tpu_custom_call.1} parent=79 // pred_fallthru
          _
        %s615 = sand.u32 %s57, 1
        %s616 = scalar_lea.sflag [#allocation4], %s615
        %s617 = sand.u32 %s57, 1
        %s618 = smul.addr %s617, 128
        %s619 = scalar_lea.vmem [#allocation3], %s618
        %p620 = pneg %p70
        %p621 = pneg %p67
        %p622 = pneg %p91
        %p623 = pneg %p88
        %p624 = pneg %p112
        %p625 = pneg %p109
        %p626 = pneg %p133
        %p627 = pneg %p130
        %p628 = pneg %p154
        %p629 = pneg %p151
        %p630 = pneg %p175
        %p631 = pneg %p172
        %p632 = pneg %p196
        %p633 = pneg %p193
        %p634 = pneg %p217
        %p635 = pneg %p214
        %p636 = pneg %p238
        %p637 = pneg %p235
        %p638 = pneg %p259
        %p639 = pneg %p256
        %p640 = pneg %p280
        %p641 = pneg %p277
        %p642 = pneg %p301
        %p643 = pneg %p298
        %p644 = pneg %p322
        %p645 = pneg %p319
        %p646 = pneg %p343
        %p647 = pneg %p340
        %p648 = pneg %p364
        %p649 = pneg %p361
        %p650 = pneg %p390
        %p651 = pneg %p387
        %s652 = sand.u32 %s377, 1
        %s653 = scalar_lea.sflag [#allocation5], %s652
        %s654 = sand.u32 %s377, 1
        %s655 = smul.addr %s654, 16
        %s656 = scalar_lea.vmem [#allocation20], %s655
        %s657 = smul.u32 16, %s41
        %p659 = scmp.eq.s32.totalorder %s42, 0
        // Predicated region
        $region121: #{tpu_custom_call.1} parent=79 // pred_check
          %p660 = pneg %p659
        $region122: #{tpu_custom_call.1} parent=79 // pred_check_branch
          %662 = sbr.rel (%p660) target = $region124
        $region123: #{tpu_custom_call.1} parent=79 // pred_region
          %v663 = vld [vmem:[%s574] sm:$0xf]
          %v664 = vld [vmem:[%s574 + $0x4] sm:$0xf]
          %v665 = vld [vmem:[%s574 + $0x8] sm:$0xf]
          %v666 = vld [vmem:[%s574 + $0xc] sm:$0xf]
          %v667 = vld [vmem:[%s574 + $0x10] sm:$0xf]
          %v668 = vld [vmem:[%s574 + $0x14] sm:$0xf]
          %v669 = vld [vmem:[%s574 + $0x18] sm:$0xf]
          %v670 = vld [vmem:[%s574 + $0x1c] sm:$0xf]
          %v671 = vld [vmem:[%s574 + $0x20] sm:$0xf]
          %v672 = vld [vmem:[%s574 + $0x24] sm:$0xf]
          %v673 = vld [vmem:[%s574 + $0x28] sm:$0xf]
          %v674 = vld [vmem:[%s574 + $0x2c] sm:$0xf]
          %v675 = vld [vmem:[%s574 + $0x30] sm:$0xf]
          %v676 = vld [vmem:[%s574 + $0x34] sm:$0xf]
          %v677 = vld [vmem:[%s574 + $0x38] sm:$0xf]
          %v678 = vld [vmem:[%s574 + $0x3c] sm:$0xf]
          %v679 = vld [vmem:[%s574 + $0x40] sm:$0xf]
          %v680 = vld [vmem:[%s574 + $0x44] sm:$0xf]
          %v681 = vld [vmem:[%s574 + $0x48] sm:$0xf]
          %v682 = vld [vmem:[%s574 + $0x4c] sm:$0xf]
          %v683 = vld [vmem:[%s574 + $0x50] sm:$0xf]
          %v684 = vld [vmem:[%s574 + $0x54] sm:$0xf]
          %v685 = vld [vmem:[%s574 + $0x58] sm:$0xf]
          %v686 = vld [vmem:[%s574 + $0x5c] sm:$0xf]
          %v687 = vld [vmem:[%s574 + $0x60] sm:$0xf]
          %v688 = vld [vmem:[%s574 + $0x64] sm:$0xf]
          %v689 = vld [vmem:[%s574 + $0x68] sm:$0xf]
          %v690 = vld [vmem:[%s574 + $0x6c] sm:$0xf]
          %v691 = vld [vmem:[%s574 + $0x70] sm:$0xf]
          %v692 = vld [vmem:[%s574 + $0x74] sm:$0xf]
          %v693 = vld [vmem:[%s574 + $0x78] sm:$0xf]
          %v694 = vld [vmem:[%s574 + $0x7c] sm:$0xf]
          %v695 = vld [vmem:[#allocation6] sm:$0xf]
          %v696 = vld [vmem:[#allocation6 + $0x4] sm:$0xf]
          %v697 = vld [vmem:[#allocation6 + $0x8] sm:$0xf]
          %v698 = vld [vmem:[#allocation6 + $0xc] sm:$0xf]
          %v699 = vld [vmem:[#allocation6 + $0x10] sm:$0xf]
          %v700 = vld [vmem:[#allocation6 + $0x14] sm:$0xf]
          %v701 = vld [vmem:[#allocation6 + $0x18] sm:$0xf]
          %v702 = vld [vmem:[#allocation6 + $0x1c] sm:$0xf]
          %v703 = vld [vmem:[#allocation6 + $0x20] sm:$0xf]
          %v704 = vld [vmem:[#allocation6 + $0x24] sm:$0xf]
          %v705 = vld [vmem:[#allocation6 + $0x28] sm:$0xf]
          %v706 = vld [vmem:[#allocation6 + $0x2c] sm:$0xf]
          %v707 = vld [vmem:[#allocation6 + $0x30] sm:$0xf]
          %v708 = vld [vmem:[#allocation6 + $0x34] sm:$0xf]
          %v709 = vld [vmem:[#allocation6 + $0x38] sm:$0xf]
          %v710 = vld [vmem:[#allocation6 + $0x3c] sm:$0xf]
          %v711 = vld [vmem:[%s2] sm:$0x1]
          %v713 = vlaneseq
          %v714 = vshrl.u32 %v713, 7
          %v715 = vsub.s32 0, %v714
          %v716 = vrot.slane %v711, %v715
          %v750 = vunpack.c.l.b16 %v663
          %v751 = vunpack.c.l.b16 %v664
          %v752 = vunpack.c.l.b16 %v665
          %v753 = vunpack.c.l.b16 %v666
          %v754 = vunpack.c.l.b16 %v667
          %v755 = vunpack.c.l.b16 %v668
          %v756 = vunpack.c.l.b16 %v669
          %v757 = vunpack.c.l.b16 %v670
          %v758 = vunpack.c.l.b16 %v671
          %v759 = vunpack.c.l.b16 %v672
          %v760 = vunpack.c.l.b16 %v673
          %v761 = vunpack.c.l.b16 %v674
          %v762 = vunpack.c.l.b16 %v675
          %v763 = vunpack.c.l.b16 %v676
          %v764 = vunpack.c.l.b16 %v677
          %v765 = vunpack.c.l.b16 %v678
          %v766 = vunpack.c.l.b16 %v679
          %v767 = vunpack.c.l.b16 %v680
          %v768 = vunpack.c.l.b16 %v681
          %v769 = vunpack.c.l.b16 %v682
          %v770 = vunpack.c.l.b16 %v683
          %v771 = vunpack.c.l.b16 %v684
          %v772 = vunpack.c.l.b16 %v685
          %v773 = vunpack.c.l.b16 %v686
          %v774 = vunpack.c.l.b16 %v687
          %v775 = vunpack.c.l.b16 %v688
          %v776 = vunpack.c.l.b16 %v689
          %v777 = vunpack.c.l.b16 %v690
          %v778 = vunpack.c.l.b16 %v691
          %v779 = vunpack.c.l.b16 %v692
          %v780 = vunpack.c.l.b16 %v693
          %v781 = vunpack.c.l.b16 %v694
          %v782 = vpack.c.b16 %v751, %v750
          %v783 = vpack.c.b16 %v753, %v752
          %v784 = vpack.c.b16 %v755, %v754
          %v785 = vpack.c.b16 %v757, %v756
          %v786 = vpack.c.b16 %v759, %v758
          %v787 = vpack.c.b16 %v761, %v760
          %v788 = vpack.c.b16 %v763, %v762
          %v789 = vpack.c.b16 %v765, %v764
          %v790 = vpack.c.b16 %v767, %v766
          %v791 = vpack.c.b16 %v769, %v768
          %v792 = vpack.c.b16 %v771, %v770
          %v793 = vpack.c.b16 %v773, %v772
          %v794 = vpack.c.b16 %v775, %v774
          %v795 = vpack.c.b16 %v777, %v776
          %v796 = vpack.c.b16 %v779, %v778
          %v797 = vpack.c.b16 %v781, %v780
          %v830 = vunpack.c.l.b16 %v695
          %v831 = vunpack.c.l.b16 %v696
          %v832 = vunpack.c.l.b16 %v697
          %v833 = vunpack.c.l.b16 %v698
          %v834 = vunpack.c.l.b16 %v699
          %v835 = vunpack.c.l.b16 %v700
          %v836 = vunpack.c.l.b16 %v701
          %v837 = vunpack.c.l.b16 %v702
          %v838 = vunpack.c.l.b16 %v703
          %v839 = vunpack.c.l.b16 %v704
          %v840 = vunpack.c.l.b16 %v705
          %v841 = vunpack.c.l.b16 %v706
          %v842 = vunpack.c.l.b16 %v707
          %v843 = vunpack.c.l.b16 %v708
          %v844 = vunpack.c.l.b16 %v709
          %v845 = vunpack.c.l.b16 %v710
          %v846 = vpack.c.b16 %v831, %v830
          %v847 = vpack.c.b16 %v833, %v832
          %v848 = vpack.c.b16 %v835, %v834
          %v849 = vpack.c.b16 %v837, %v836
          %v850 = vpack.c.b16 %v839, %v838
          %v851 = vpack.c.b16 %v841, %v840
          %v852 = vpack.c.b16 %v843, %v842
          %v853 = vpack.c.b16 %v845, %v844
          %862 = vmatprep.subr.bf16.mxu0 0
          %863 = vmatpush1.bf16.msra.mxu0 %v846
          %864 = vmatprep.subr.bf16.mxu0 0
          %865 = vmatpush1.bf16.msra.mxu0 %v847
          %866 = vmatprep.subr.bf16.mxu0 0
          %867 = vmatpush1.bf16.msra.mxu0 %v848
          %868 = vmatprep.subr.bf16.mxu0 0
          %869 = vmatpush1.bf16.msra.mxu0 %v849
          %870 = vmatprep.subr.bf16.mxu0 0
          %871 = vmatpush1.bf16.msra.mxu0 %v850
          %872 = vmatprep.subr.bf16.mxu0 0
          %873 = vmatpush1.bf16.msra.mxu0 %v851
          %874 = vmatprep.subr.bf16.mxu0 0
          %875 = vmatpush1.bf16.msra.mxu0 %v852
          %876 = vmatprep.subr.bf16.mxu0 0
          %877 = vmatpush1.bf16.msra.mxu0 %v853
          %878 = vmatprep.subr.bf16.mxu0 0
          %879 = vmatpush1.bf16.msra.mxu0 0
          %880 = vmatprep.subr.bf16.mxu0 0
          %881 = vmatpush1.bf16.msra.mxu0 0
          %882 = vmatprep.subr.bf16.mxu0 0
          %883 = vmatpush1.bf16.msra.mxu0 0
          %884 = vmatprep.subr.bf16.mxu0 0
          %885 = vmatpush1.bf16.msra.mxu0 0
          %886 = vmatprep.subr.bf16.mxu0 0
          %887 = vmatpush1.bf16.msra.mxu0 0
          %888 = vmatprep.subr.bf16.mxu0 0
          %889 = vmatpush1.bf16.msra.mxu0 0
          %890 = vmatprep.subr.bf16.mxu0 0
          %891 = vmatpush1.bf16.msra.mxu0 0
          %892 = vmatprep.subr.bf16.mxu0 0
          %893 = vmatpush1.bf16.msra.mxu0 0
          %894 = vmatprep.mubr.bf16.mxu0 0
          %895 = vmatmul.mubr.bf16.gmra.mrb[0].mxu0 %v782
          %v896 = vpop.f32.mrb[0].mxu0
          %v897 = vadd.f32 %v716, %v896
          %v898 = vpop.f32.mrb[0].mxu0
          %v899 = vpop.f32.mrb[0].mxu0
          %v900 = vadd.f32 %v716, %v899
          %v901 = vpop.f32.mrb[0].mxu0
          %902 = vmatprep.mubr.bf16.mxu0 0
          %903 = vmatmul.mubr.bf16.gmra.mrb[0].mxu0 %v783
          %v904 = vpop.f32.mrb[0].mxu0
          %v905 = vadd.f32 %v716, %v904
          %v906 = vpop.f32.mrb[0].mxu0
          %v907 = vpop.f32.mrb[0].mxu0
          %v908 = vadd.f32 %v716, %v907
          %v909 = vpop.f32.mrb[0].mxu0
          %910 = vmatprep.mubr.bf16.mxu0 0
          %911 = vmatmul.mubr.bf16.gmra.mrb[0].mxu0 %v784
          %v912 = vpop.f32.mrb[0].mxu0
          %v913 = vadd.f32 %v716, %v912
          %v914 = vpop.f32.mrb[0].mxu0
          %v915 = vpop.f32.mrb[0].mxu0
          %v916 = vadd.f32 %v716, %v915
          %v917 = vpop.f32.mrb[0].mxu0
          %918 = vmatprep.mubr.bf16.mxu0 0
          %919 = vmatmul.mubr.bf16.gmra.mrb[0].mxu0 %v785
          %v920 = vpop.f32.mrb[0].mxu0
          %v921 = vadd.f32 %v716, %v920
          %v922 = vpop.f32.mrb[0].mxu0
          %v923 = vpop.f32.mrb[0].mxu0
          %v924 = vadd.f32 %v716, %v923
          %v925 = vpop.f32.mrb[0].mxu0
          %926 = vmatprep.mubr.bf16.mxu0 0
          %927 = vmatmul.mubr.bf16.gmra.mrb[0].mxu0 %v786
          %v928 = vpop.f32.mrb[0].mxu0
          %v929 = vadd.f32 %v716, %v928
          %v930 = vpop.f32.mrb[0].mxu0
          %v931 = vpop.f32.mrb[0].mxu0
          %v932 = vadd.f32 %v716, %v931
          %v933 = vpop.f32.mrb[0].mxu0
          %934 = vmatprep.mubr.bf16.mxu0 0
          %935 = vmatmul.mubr.bf16.gmra.mrb[0].mxu0 %v787
          %v936 = vpop.f32.mrb[0].mxu0
          %v937 = vadd.f32 %v716, %v936
          %v938 = vpop.f32.mrb[0].mxu0
          %v939 = vpop.f32.mrb[0].mxu0
          %v940 = vadd.f32 %v716, %v939
          %v941 = vpop.f32.mrb[0].mxu0
          %942 = vmatprep.mubr.bf16.mxu0 0
          %943 = vmatmul.mubr.bf16.gmra.mrb[0].mxu0 %v788
          %v944 = vpop.f32.mrb[0].mxu0
          %v945 = vadd.f32 %v716, %v944
          %v946 = vpop.f32.mrb[0].mxu0
          %v947 = vpop.f32.mrb[0].mxu0
          %v948 = vadd.f32 %v716, %v947
          %v949 = vpop.f32.mrb[0].mxu0
          %950 = vmatprep.mubr.bf16.mxu0 0
          %951 = vmatmul.mubr.bf16.gmra.mrb[0].mxu0 %v789
          %v952 = vpop.f32.mrb[0].mxu0
          %v953 = vadd.f32 %v716, %v952
          %v954 = vpop.f32.mrb[0].mxu0
          %v955 = vpop.f32.mrb[0].mxu0
          %v956 = vadd.f32 %v716, %v955
          %v957 = vpop.f32.mrb[0].mxu0
          %958 = vmatprep.mubr.bf16.mxu0 0
          %959 = vmatmul.mubr.bf16.gmra.mrb[0].mxu0 %v790
          %v960 = vpop.f32.mrb[0].mxu0
          %v961 = vadd.f32 %v716, %v960
          %v962 = vpop.f32.mrb[0].mxu0
          %v963 = vpop.f32.mrb[0].mxu0
          %v964 = vadd.f32 %v716, %v963
          %v965 = vpop.f32.mrb[0].mxu0
          %966 = vmatprep.mubr.bf16.mxu0 0
          %967 = vmatmul.mubr.bf16.gmra.mrb[0].mxu0 %v791
          %v968 = vpop.f32.mrb[0].mxu0
          %v969 = vadd.f32 %v716, %v968
          %v970 = vpop.f32.mrb[0].mxu0
          %v971 = vpop.f32.mrb[0].mxu0
          %v972 = vadd.f32 %v716, %v971
          %v973 = vpop.f32.mrb[0].mxu0
          %974 = vmatprep.mubr.bf16.mxu0 0
          %975 = vmatmul.mubr.bf16.gmra.mrb[0].mxu0 %v792
          %v976 = vpop.f32.mrb[0].mxu0
          %v977 = vadd.f32 %v716, %v976
          %v978 = vpop.f32.mrb[0].mxu0
          %v979 = vpop.f32.mrb[0].mxu0
          %v980 = vadd.f32 %v716, %v979
          %v981 = vpop.f32.mrb[0].mxu0
          %982 = vmatprep.mubr.bf16.mxu0 0
          %983 = vmatmul.mubr.bf16.gmra.mrb[0].mxu0 %v793
          %v984 = vpop.f32.mrb[0].mxu0
          %v985 = vadd.f32 %v716, %v984
          %v986 = vpop.f32.mrb[0].mxu0
          %v987 = vpop.f32.mrb[0].mxu0
          %v988 = vadd.f32 %v716, %v987
          %v989 = vpop.f32.mrb[0].mxu0
          %990 = vmatprep.mubr.bf16.mxu0 0
          %991 = vmatmul.mubr.bf16.gmra.mrb[0].mxu0 %v794
          %v992 = vpop.f32.mrb[0].mxu0
          %v993 = vadd.f32 %v716, %v992
          %v994 = vpop.f32.mrb[0].mxu0
          %v995 = vpop.f32.mrb[0].mxu0
          %v996 = vadd.f32 %v716, %v995
          %v997 = vpop.f32.mrb[0].mxu0
          %998 = vmatprep.mubr.bf16.mxu0 0
          %999 = vmatmul.mubr.bf16.gmra.mrb[0].mxu0 %v795
          %v1000 = vpop.f32.mrb[0].mxu0
          %v1001 = vadd.f32 %v716, %v1000
          %v1002 = vpop.f32.mrb[0].mxu0
          %v1003 = vpop.f32.mrb[0].mxu0
          %v1004 = vadd.f32 %v716, %v1003
          %v1005 = vpop.f32.mrb[0].mxu0
          %1006 = vmatprep.mubr.bf16.mxu0 0
          %1007 = vmatmul.mubr.bf16.gmra.mrb[0].mxu0 %v796
          %v1008 = vpop.f32.mrb[0].mxu0
          %v1009 = vadd.f32 %v716, %v1008
          %v1010 = vpop.f32.mrb[0].mxu0
          %v1011 = vpop.f32.mrb[0].mxu0
          %v1012 = vadd.f32 %v716, %v1011
          %v1013 = vpop.f32.mrb[0].mxu0
          %1014 = vmatprep.mubr.bf16.mxu0 0
          %1015 = vmatmul.mubr.bf16.gmra.mrb[0].mxu0 %v797
          %v1016 = vpop.f32.mrb[0].mxu0
          %v1017 = vadd.f32 %v716, %v1016
          %v1018 = vpop.f32.mrb[0].mxu0
          %v1019 = vpop.f32.mrb[0].mxu0
          %v1020 = vadd.f32 %v716, %v1019
          %v1021 = vpop.f32.mrb[0].mxu0
          %1022 = vdwg.mxu0
          %1023 = vst [vmem:[#allocation2] sm:$0xff] %v897
          %1024 = vst [vmem:[#allocation2 + $0x8] sm:$0xff] %v900
          %1025 = vst [vmem:[#allocation2 + $0x10] sm:$0xff] %v905
          %1026 = vst [vmem:[#allocation2 + $0x18] sm:$0xff] %v908
          %1027 = vst [vmem:[#allocation2 + $0x20] sm:$0xff] %v913
          %1028 = vst [vmem:[#allocation2 + $0x28] sm:$0xff] %v916
          %1029 = vst [vmem:[#allocation2 + $0x30] sm:$0xff] %v921
          %1030 = vst [vmem:[#allocation2 + $0x38] sm:$0xff] %v924
          %1031 = vst [vmem:[#allocation2 + $0x40] sm:$0xff] %v929
          %1032 = vst [vmem:[#allocation2 + $0x48] sm:$0xff] %v932
          %1033 = vst [vmem:[#allocation2 + $0x50] sm:$0xff] %v937
          %1034 = vst [vmem:[#allocation2 + $0x58] sm:$0xff] %v940
          %1035 = vst [vmem:[#allocation2 + $0x60] sm:$0xff] %v945
          %1036 = vst [vmem:[#allocation2 + $0x68] sm:$0xff] %v948
          %1037 = vst [vmem:[#allocation2 + $0x70] sm:$0xff] %v953
          %1038 = vst [vmem:[#allocation2 + $0x78] sm:$0xff] %v956
          %1039 = vst [vmem:[#allocation2 + $0x80] sm:$0xff] %v961
          %1040 = vst [vmem:[#allocation2 + $0x88] sm:$0xff] %v964
          %1041 = vst [vmem:[#allocation2 + $0x90] sm:$0xff] %v969
          %1042 = vst [vmem:[#allocation2 + $0x98] sm:$0xff] %v972
          %1043 = vst [vmem:[#allocation2 + $0xa0] sm:$0xff] %v977
          %1044 = vst [vmem:[#allocation2 + $0xa8] sm:$0xff] %v980
          %1045 = vst [vmem:[#allocation2 + $0xb0] sm:$0xff] %v985
          %1046 = vst [vmem:[#allocation2 + $0xb8] sm:$0xff] %v988
          %1047 = vst [vmem:[#allocation2 + $0xc0] sm:$0xff] %v993
          %1048 = vst [vmem:[#allocation2 + $0xc8] sm:$0xff] %v996
          %1049 = vst [vmem:[#allocation2 + $0xd0] sm:$0xff] %v1001
          %1050 = vst [vmem:[#allocation2 + $0xd8] sm:$0xff] %v1004
          %1051 = vst [vmem:[#allocation2 + $0xe0] sm:$0xff] %v1009
          %1052 = vst [vmem:[#allocation2 + $0xe8] sm:$0xff] %v1012
          %1053 = vst [vmem:[#allocation2 + $0xf0] sm:$0xff] %v1017
          %1054 = vst [vmem:[#allocation2 + $0xf8] sm:$0xff] %v1020
        $region124: #{tpu_custom_call.1} parent=79 // pred_fallthru
          _
        %v1055 = vld [vmem:[#allocation2] sm:$0xff]
        %v1056 = vld [vmem:[#allocation2 + $0x8] sm:$0xff]
        %v1057 = vld [vmem:[#allocation2 + $0x10] sm:$0xff]
        %v1058 = vld [vmem:[#allocation2 + $0x18] sm:$0xff]
        %v1059 = vld [vmem:[#allocation2 + $0x20] sm:$0xff]
        %v1060 = vld [vmem:[#allocation2 + $0x28] sm:$0xff]
        %v1061 = vld [vmem:[#allocation2 + $0x30] sm:$0xff]
        %v1062 = vld [vmem:[#allocation2 + $0x38] sm:$0xff]
        %v1063 = vld [vmem:[#allocation2 + $0x40] sm:$0xff]
        %v1064 = vld [vmem:[#allocation2 + $0x48] sm:$0xff]
        %v1065 = vld [vmem:[#allocation2 + $0x50] sm:$0xff]
        %v1066 = vld [vmem:[#allocation2 + $0x58] sm:$0xff]
        %v1067 = vld [vmem:[#allocation2 + $0x60] sm:$0xff]
        %v1068 = vld [vmem:[#allocation2 + $0x68] sm:$0xff]
        %v1069 = vld [vmem:[#allocation2 + $0x70] sm:$0xff]
        %v1070 = vld [vmem:[#allocation2 + $0x78] sm:$0xff]
        %v1071 = vld [vmem:[#allocation2 + $0x80] sm:$0xff]
        %v1072 = vld [vmem:[#allocation2 + $0x88] sm:$0xff]
        %v1073 = vld [vmem:[#allocation2 + $0x90] sm:$0xff]
        %v1074 = vld [vmem:[#allocation2 + $0x98] sm:$0xff]
        %v1075 = vld [vmem:[#allocation2 + $0xa0] sm:$0xff]
        %v1076 = vld [vmem:[#allocation2 + $0xa8] sm:$0xff]
        %v1077 = vld [vmem:[#allocation2 + $0xb0] sm:$0xff]
        %v1078 = vld [vmem:[#allocation2 + $0xb8] sm:$0xff]
        %v1079 = vld [vmem:[#allocation2 + $0xc0] sm:$0xff]
        %v1080 = vld [vmem:[#allocation2 + $0xc8] sm:$0xff]
        %v1081 = vld [vmem:[#allocation2 + $0xd0] sm:$0xff]
        %v1082 = vld [vmem:[#allocation2 + $0xd8] sm:$0xff]
        %v1083 = vld [vmem:[#allocation2 + $0xe0] sm:$0xff]
        %v1084 = vld [vmem:[#allocation2 + $0xe8] sm:$0xff]
        %v1085 = vld [vmem:[#allocation2 + $0xf0] sm:$0xff]
        %v1086 = vld [vmem:[#allocation2 + $0xf8] sm:$0xff]
        %s1087 = scalar_lea.vmem [#allocation8], %s42
        %v1088 = vld [vmem:[%s1087] sm:$0x1]
        %s1089 = scalar_lea.vmem [#allocation9], %s42
        %v1090 = vld [vmem:[%s1089] sm:$0x1]
        %1091 = vadd.xlane.f32.xlu0 %v1055
        %v1092 = vpop.xlane.xlu0 %1091
        %1093 = vadd.xlane.f32.xlu0 %v1056
        %v1094 = vpop.xlane.xlu0 %1093
        %1095 = vadd.xlane.f32.xlu0 %v1057
        %v1096 = vpop.xlane.xlu0 %1095
        %1097 = vadd.xlane.f32.xlu0 %v1058
        %v1098 = vpop.xlane.xlu0 %1097
        %1099 = vadd.xlane.f32.xlu0 %v1059
        %v1100 = vpop.xlane.xlu0 %1099
        %1101 = vadd.xlane.f32.xlu0 %v1060
        %v1102 = vpop.xlane.xlu0 %1101
        %1103 = vadd.xlane.f32.xlu0 %v1061
        %v1104 = vpop.xlane.xlu0 %1103
        %1105 = vadd.xlane.f32.xlu0 %v1062
        %v1106 = vpop.xlane.xlu0 %1105
        %1107 = vadd.xlane.f32.xlu0 %v1063
        %v1108 = vpop.xlane.xlu0 %1107
        %1109 = vadd.xlane.f32.xlu0 %v1064
        %v1110 = vpop.xlane.xlu0 %1109
        %1111 = vadd.xlane.f32.xlu0 %v1065
        %v1112 = vpop.xlane.xlu0 %1111
        %1113 = vadd.xlane.f32.xlu0 %v1066
        %v1114 = vpop.xlane.xlu0 %1113
        %1115 = vadd.xlane.f32.xlu0 %v1067
        %v1116 = vpop.xlane.xlu0 %1115
        %1117 = vadd.xlane.f32.xlu0 %v1068
        %v1118 = vpop.xlane.xlu0 %1117
        %1119 = vadd.xlane.f32.xlu0 %v1069
        %v1120 = vpop.xlane.xlu0 %1119
        %1121 = vadd.xlane.f32.xlu0 %v1070
        %v1122 = vpop.xlane.xlu0 %1121
        %1123 = vadd.xlane.f32.xlu0 %v1071
        %v1124 = vpop.xlane.xlu0 %1123
        %1125 = vadd.xlane.f32.xlu0 %v1072
        %v1126 = vpop.xlane.xlu0 %1125
        %1127 = vadd.xlane.f32.xlu0 %v1073
        %v1128 = vpop.xlane.xlu0 %1127
        %1129 = vadd.xlane.f32.xlu0 %v1074
        %v1130 = vpop.xlane.xlu0 %1129
        %1131 = vadd.xlane.f32.xlu0 %v1075
        %v1132 = vpop.xlane.xlu0 %1131
        %1133 = vadd.xlane.f32.xlu0 %v1076
        %v1134 = vpop.xlane.xlu0 %1133
        %1135 = vadd.xlane.f32.xlu0 %v1077
        %v1136 = vpop.xlane.xlu0 %1135
        %1137 = vadd.xlane.f32.xlu0 %v1078
        %v1138 = vpop.xlane.xlu0 %1137
        %1139 = vadd.xlane.f32.xlu0 %v1079
        %v1140 = vpop.xlane.xlu0 %1139
        %1141 = vadd.xlane.f32.xlu0 %v1080
        %v1142 = vpop.xlane.xlu0 %1141
        %1143 = vadd.xlane.f32.xlu0 %v1081
        %v1144 = vpop.xlane.xlu0 %1143
        %1145 = vadd.xlane.f32.xlu0 %v1082
        %v1146 = vpop.xlane.xlu0 %1145
        %1147 = vadd.xlane.f32.xlu0 %v1083
        %v1148 = vpop.xlane.xlu0 %1147
        %1149 = vadd.xlane.f32.xlu0 %v1084
        %v1150 = vpop.xlane.xlu0 %1149
        %1151 = vadd.xlane.f32.xlu0 %v1085
        %v1152 = vpop.xlane.xlu0 %1151
        %1153 = vadd.xlane.f32.xlu0 %v1086
        %v1154 = vpop.xlane.xlu0 %1153
        %v1155 = vmul.f32 %v1092, 0.03125
        %v1156 = vmul.f32 %v1094, 0.03125
        %v1157 = vmul.f32 %v1096, 0.03125
        %v1158 = vmul.f32 %v1098, 0.03125
        %v1159 = vmul.f32 %v1100, 0.03125
        %v1160 = vmul.f32 %v1102, 0.03125
        %v1161 = vmul.f32 %v1104, 0.03125
        %v1162 = vmul.f32 %v1106, 0.03125
        %v1163 = vmul.f32 %v1108, 0.03125
        %v1164 = vmul.f32 %v1110, 0.03125
        %v1165 = vmul.f32 %v1112, 0.03125
        %v1166 = vmul.f32 %v1114, 0.03125
        %v1167 = vmul.f32 %v1116, 0.03125
        %v1168 = vmul.f32 %v1118, 0.03125
        %v1169 = vmul.f32 %v1120, 0.03125
        %v1170 = vmul.f32 %v1122, 0.03125
        %v1171 = vmul.f32 %v1124, 0.03125
        %v1172 = vmul.f32 %v1126, 0.03125
        %v1173 = vmul.f32 %v1128, 0.03125
        %v1174 = vmul.f32 %v1130, 0.03125
        %v1175 = vmul.f32 %v1132, 0.03125
        %v1176 = vmul.f32 %v1134, 0.03125
        %v1177 = vmul.f32 %v1136, 0.03125
        %v1178 = vmul.f32 %v1138, 0.03125
        %v1179 = vmul.f32 %v1140, 0.03125
        %v1180 = vmul.f32 %v1142, 0.03125
        %v1181 = vmul.f32 %v1144, 0.03125
        %v1182 = vmul.f32 %v1146, 0.03125
        %v1183 = vmul.f32 %v1148, 0.03125
        %v1184 = vmul.f32 %v1150, 0.03125
        %v1185 = vmul.f32 %v1152, 0.03125
        %v1186 = vmul.f32 %v1154, 0.03125
        %v1187 = vsub.f32 %v1055, %v1155
        %v1188 = vsub.f32 %v1056, %v1156
        %v1189 = vsub.f32 %v1057, %v1157
        %v1190 = vsub.f32 %v1058, %v1158
        %v1191 = vsub.f32 %v1059, %v1159
        %v1192 = vsub.f32 %v1060, %v1160
        %v1193 = vsub.f32 %v1061, %v1161
        %v1194 = vsub.f32 %v1062, %v1162
        %v1195 = vsub.f32 %v1063, %v1163
        %v1196 = vsub.f32 %v1064, %v1164
        %v1197 = vsub.f32 %v1065, %v1165
        %v1198 = vsub.f32 %v1066, %v1166
        %v1199 = vsub.f32 %v1067, %v1167
        %v1200 = vsub.f32 %v1068, %v1168
        %v1201 = vsub.f32 %v1069, %v1169
        %v1202 = vsub.f32 %v1070, %v1170
        %v1203 = vsub.f32 %v1071, %v1171
        %v1204 = vsub.f32 %v1072, %v1172
        %v1205 = vsub.f32 %v1073, %v1173
        %v1206 = vsub.f32 %v1074, %v1174
        %v1207 = vsub.f32 %v1075, %v1175
        %v1208 = vsub.f32 %v1076, %v1176
        %v1209 = vsub.f32 %v1077, %v1177
        %v1210 = vsub.f32 %v1078, %v1178
        %v1211 = vsub.f32 %v1079, %v1179
        %v1212 = vsub.f32 %v1080, %v1180
        %v1213 = vsub.f32 %v1081, %v1181
        %v1214 = vsub.f32 %v1082, %v1182
        %v1215 = vsub.f32 %v1083, %v1183
        %v1216 = vsub.f32 %v1084, %v1184
        %v1217 = vsub.f32 %v1085, %v1185
        %v1218 = vsub.f32 %v1086, %v1186
        %v1219 = vlaneseq
        %v1220 = vand.u32 %v1219, 127
        %vm1221 = vcmp.lt.s32.totalorder %v1220, 32
        %v1222 = vsel %vm1221, %v1187, 0.0
        %v1223 = vsel %vm1221, %v1188, 0.0
        %v1224 = vsel %vm1221, %v1189, 0.0
        %v1225 = vsel %vm1221, %v1190, 0.0
        %v1226 = vsel %vm1221, %v1191, 0.0
        %v1227 = vsel %vm1221, %v1192, 0.0
        %v1228 = vsel %vm1221, %v1193, 0.0
        %v1229 = vsel %vm1221, %v1194, 0.0
        %v1230 = vsel %vm1221, %v1195, 0.0
        %v1231 = vsel %vm1221, %v1196, 0.0
        %v1232 = vsel %vm1221, %v1197, 0.0
        %v1233 = vsel %vm1221, %v1198, 0.0
        %v1234 = vsel %vm1221, %v1199, 0.0
        %v1235 = vsel %vm1221, %v1200, 0.0
        %v1236 = vsel %vm1221, %v1201, 0.0
        %v1237 = vsel %vm1221, %v1202, 0.0
        %v1238 = vsel %vm1221, %v1203, 0.0
        %v1239 = vsel %vm1221, %v1204, 0.0
        %v1240 = vsel %vm1221, %v1205, 0.0
        %v1241 = vsel %vm1221, %v1206, 0.0
        %v1242 = vsel %vm1221, %v1207, 0.0
        %v1243 = vsel %vm1221, %v1208, 0.0
        %v1244 = vsel %vm1221, %v1209, 0.0
        %v1245 = vsel %vm1221, %v1210, 0.0
        %v1246 = vsel %vm1221, %v1211, 0.0
        %v1247 = vsel %vm1221, %v1212, 0.0
        %v1248 = vsel %vm1221, %v1213, 0.0
        %v1249 = vsel %vm1221, %v1214, 0.0
        %v1250 = vsel %vm1221, %v1215, 0.0
        %v1251 = vsel %vm1221, %v1216, 0.0
        %v1252 = vsel %vm1221, %v1217, 0.0
        %v1253 = vsel %vm1221, %v1218, 0.0
        %v1254 = vmul.f32 %v1222, %v1222
        %v1255 = vmul.f32 %v1223, %v1223
        %v1256 = vmul.f32 %v1224, %v1224
        %v1257 = vmul.f32 %v1225, %v1225
        %v1258 = vmul.f32 %v1226, %v1226
        %v1259 = vmul.f32 %v1227, %v1227
        %v1260 = vmul.f32 %v1228, %v1228
        %v1261 = vmul.f32 %v1229, %v1229
        %v1262 = vmul.f32 %v1230, %v1230
        %v1263 = vmul.f32 %v1231, %v1231
        %v1264 = vmul.f32 %v1232, %v1232
        %v1265 = vmul.f32 %v1233, %v1233
        %v1266 = vmul.f32 %v1234, %v1234
        %v1267 = vmul.f32 %v1235, %v1235
        %v1268 = vmul.f32 %v1236, %v1236
        %v1269 = vmul.f32 %v1237, %v1237
        %v1270 = vmul.f32 %v1238, %v1238
        %v1271 = vmul.f32 %v1239, %v1239
        %v1272 = vmul.f32 %v1240, %v1240
        %v1273 = vmul.f32 %v1241, %v1241
        %v1274 = vmul.f32 %v1242, %v1242
        %v1275 = vmul.f32 %v1243, %v1243
        %v1276 = vmul.f32 %v1244, %v1244
        %v1277 = vmul.f32 %v1245, %v1245
        %v1278 = vmul.f32 %v1246, %v1246
        %v1279 = vmul.f32 %v1247, %v1247
        %v1280 = vmul.f32 %v1248, %v1248
        %v1281 = vmul.f32 %v1249, %v1249
        %v1282 = vmul.f32 %v1250, %v1250
        %v1283 = vmul.f32 %v1251, %v1251
        %v1284 = vmul.f32 %v1252, %v1252
        %v1285 = vmul.f32 %v1253, %v1253
        %1286 = vadd.xlane.f32.xlu0 %v1254
        %v1287 = vpop.xlane.xlu0 %1286
        %1288 = vadd.xlane.f32.xlu0 %v1255
        %v1289 = vpop.xlane.xlu0 %1288
        %1290 = vadd.xlane.f32.xlu0 %v1256
        %v1291 = vpop.xlane.xlu0 %1290
        %1292 = vadd.xlane.f32.xlu0 %v1257
        %v1293 = vpop.xlane.xlu0 %1292
        %1294 = vadd.xlane.f32.xlu0 %v1258
        %v1295 = vpop.xlane.xlu0 %1294
        %1296 = vadd.xlane.f32.xlu0 %v1259
        %v1297 = vpop.xlane.xlu0 %1296
        %1298 = vadd.xlane.f32.xlu0 %v1260
        %v1299 = vpop.xlane.xlu0 %1298
        %1300 = vadd.xlane.f32.xlu0 %v1261
        %v1301 = vpop.xlane.xlu0 %1300
        %1302 = vadd.xlane.f32.xlu0 %v1262
        %v1303 = vpop.xlane.xlu0 %1302
        %1304 = vadd.xlane.f32.xlu0 %v1263
        %v1305 = vpop.xlane.xlu0 %1304
        %1306 = vadd.xlane.f32.xlu0 %v1264
        %v1307 = vpop.xlane.xlu0 %1306
        %1308 = vadd.xlane.f32.xlu0 %v1265
        %v1309 = vpop.xlane.xlu0 %1308
        %1310 = vadd.xlane.f32.xlu0 %v1266
        %v1311 = vpop.xlane.xlu0 %1310
        %1312 = vadd.xlane.f32.xlu0 %v1267
        %v1313 = vpop.xlane.xlu0 %1312
        %1314 = vadd.xlane.f32.xlu0 %v1268
        %v1315 = vpop.xlane.xlu0 %1314
        %1316 = vadd.xlane.f32.xlu0 %v1269
        %v1317 = vpop.xlane.xlu0 %1316
        %1318 = vadd.xlane.f32.xlu0 %v1270
        %v1319 = vpop.xlane.xlu0 %1318
        %1320 = vadd.xlane.f32.xlu0 %v1271
        %v1321 = vpop.xlane.xlu0 %1320
        %1322 = vadd.xlane.f32.xlu0 %v1272
        %v1323 = vpop.xlane.xlu0 %1322
        %1324 = vadd.xlane.f32.xlu0 %v1273
        %v1325 = vpop.xlane.xlu0 %1324
        %1326 = vadd.xlane.f32.xlu0 %v1274
        %v1327 = vpop.xlane.xlu0 %1326
        %1328 = vadd.xlane.f32.xlu0 %v1275
        %v1329 = vpop.xlane.xlu0 %1328
        %1330 = vadd.xlane.f32.xlu0 %v1276
        %v1331 = vpop.xlane.xlu0 %1330
        %1332 = vadd.xlane.f32.xlu0 %v1277
        %v1333 = vpop.xlane.xlu0 %1332
        %1334 = vadd.xlane.f32.xlu0 %v1278
        %v1335 = vpop.xlane.xlu0 %1334
        %1336 = vadd.xlane.f32.xlu0 %v1279
        %v1337 = vpop.xlane.xlu0 %1336
        %1338 = vadd.xlane.f32.xlu0 %v1280
        %v1339 = vpop.xlane.xlu0 %1338
        %1340 = vadd.xlane.f32.xlu0 %v1281
        %v1341 = vpop.xlane.xlu0 %1340
        %1342 = vadd.xlane.f32.xlu0 %v1282
        %v1343 = vpop.xlane.xlu0 %1342
        %1344 = vadd.xlane.f32.xlu0 %v1283
        %v1345 = vpop.xlane.xlu0 %1344
        %1346 = vadd.xlane.f32.xlu0 %v1284
        %v1347 = vpop.xlane.xlu0 %1346
        %1348 = vadd.xlane.f32.xlu0 %v1285
        %v1349 = vpop.xlane.xlu0 %1348
        %v1350 = vmul.f32 %v1287, 0.03125
        %v1351 = vmul.f32 %v1289, 0.03125
        %v1352 = vmul.f32 %v1291, 0.03125
        %v1353 = vmul.f32 %v1293, 0.03125
        %v1354 = vmul.f32 %v1295, 0.03125
        %v1355 = vmul.f32 %v1297, 0.03125
        %v1356 = vmul.f32 %v1299, 0.03125
        %v1357 = vmul.f32 %v1301, 0.03125
        %v1358 = vmul.f32 %v1303, 0.03125
        %v1359 = vmul.f32 %v1305, 0.03125
        %v1360 = vmul.f32 %v1307, 0.03125
        %v1361 = vmul.f32 %v1309, 0.03125
        %v1362 = vmul.f32 %v1311, 0.03125
        %v1363 = vmul.f32 %v1313, 0.03125
        %v1364 = vmul.f32 %v1315, 0.03125
        %v1365 = vmul.f32 %v1317, 0.03125
        %v1366 = vmul.f32 %v1319, 0.03125
        %v1367 = vmul.f32 %v1321, 0.03125
        %v1368 = vmul.f32 %v1323, 0.03125
        %v1369 = vmul.f32 %v1325, 0.03125
        %v1370 = vmul.f32 %v1327, 0.03125
        %v1371 = vmul.f32 %v1329, 0.03125
        %v1372 = vmul.f32 %v1331, 0.03125
        %v1373 = vmul.f32 %v1333, 0.03125
        %v1374 = vmul.f32 %v1335, 0.03125
        %v1375 = vmul.f32 %v1337, 0.03125
        %v1376 = vmul.f32 %v1339, 0.03125
        %v1377 = vmul.f32 %v1341, 0.03125
        %v1378 = vmul.f32 %v1343, 0.03125
        %v1379 = vmul.f32 %v1345, 0.03125
        %v1380 = vmul.f32 %v1347, 0.03125
        %v1381 = vmul.f32 %v1349, 0.03125
        %v1382 = vadd.f32 %v1350, 1e-05
        %v1383 = vadd.f32 %v1351, 1e-05
        %v1384 = vadd.f32 %v1352, 1e-05
        %v1385 = vadd.f32 %v1353, 1e-05
        %v1386 = vadd.f32 %v1354, 1e-05
        %v1387 = vadd.f32 %v1355, 1e-05
        %v1388 = vadd.f32 %v1356, 1e-05
        %v1389 = vadd.f32 %v1357, 1e-05
        %v1390 = vadd.f32 %v1358, 1e-05
        %v1391 = vadd.f32 %v1359, 1e-05
        %v1392 = vadd.f32 %v1360, 1e-05
        %v1393 = vadd.f32 %v1361, 1e-05
        %v1394 = vadd.f32 %v1362, 1e-05
        %v1395 = vadd.f32 %v1363, 1e-05
        %v1396 = vadd.f32 %v1364, 1e-05
        %v1397 = vadd.f32 %v1365, 1e-05
        %v1398 = vadd.f32 %v1366, 1e-05
        %v1399 = vadd.f32 %v1367, 1e-05
        %v1400 = vadd.f32 %v1368, 1e-05
        %v1401 = vadd.f32 %v1369, 1e-05
        %v1402 = vadd.f32 %v1370, 1e-05
        %v1403 = vadd.f32 %v1371, 1e-05
        %v1404 = vadd.f32 %v1372, 1e-05
        %v1405 = vadd.f32 %v1373, 1e-05
        %v1406 = vadd.f32 %v1374, 1e-05
        %v1407 = vadd.f32 %v1375, 1e-05
        %v1408 = vadd.f32 %v1376, 1e-05
        %v1409 = vadd.f32 %v1377, 1e-05
        %v1410 = vadd.f32 %v1378, 1e-05
        %v1411 = vadd.f32 %v1379, 1e-05
        %v1412 = vadd.f32 %v1380, 1e-05
        %v1413 = vadd.f32 %v1381, 1e-05
        %v1414 = vrsqrt.pop %v1382
        %v1415 = vrsqrt.pop %v1383
        %v1416 = vrsqrt.pop %v1384
        %v1417 = vrsqrt.pop %v1385
        %v1418 = vrsqrt.pop %v1386
        %v1419 = vrsqrt.pop %v1387
        %v1420 = vrsqrt.pop %v1388
        %v1421 = vrsqrt.pop %v1389
        %v1422 = vrsqrt.pop %v1390
        %v1423 = vrsqrt.pop %v1391
        %v1424 = vrsqrt.pop %v1392
        %v1425 = vrsqrt.pop %v1393
        %v1426 = vrsqrt.pop %v1394
        %v1427 = vrsqrt.pop %v1395
        %v1428 = vrsqrt.pop %v1396
        %v1429 = vrsqrt.pop %v1397
        %v1430 = vrsqrt.pop %v1398
        %v1431 = vrsqrt.pop %v1399
        %v1432 = vrsqrt.pop %v1400
        %v1433 = vrsqrt.pop %v1401
        %v1434 = vrsqrt.pop %v1402
        %v1435 = vrsqrt.pop %v1403
        %v1436 = vrsqrt.pop %v1404
        %v1437 = vrsqrt.pop %v1405
        %v1438 = vrsqrt.pop %v1406
        %v1439 = vrsqrt.pop %v1407
        %v1440 = vrsqrt.pop %v1408
        %v1441 = vrsqrt.pop %v1409
        %v1442 = vrsqrt.pop %v1410
        %v1443 = vrsqrt.pop %v1411
        %v1444 = vrsqrt.pop %v1412
        %v1445 = vrsqrt.pop %v1413
        %v1446 = vmul.f32 %v1222, %v1414
        %v1447 = vmul.f32 %v1223, %v1415
        %v1448 = vmul.f32 %v1224, %v1416
        %v1449 = vmul.f32 %v1225, %v1417
        %v1450 = vmul.f32 %v1226, %v1418
        %v1451 = vmul.f32 %v1227, %v1419
        %v1452 = vmul.f32 %v1228, %v1420
        %v1453 = vmul.f32 %v1229, %v1421
        %v1454 = vmul.f32 %v1230, %v1422
        %v1455 = vmul.f32 %v1231, %v1423
        %v1456 = vmul.f32 %v1232, %v1424
        %v1457 = vmul.f32 %v1233, %v1425
        %v1458 = vmul.f32 %v1234, %v1426
        %v1459 = vmul.f32 %v1235, %v1427
        %v1460 = vmul.f32 %v1236, %v1428
        %v1461 = vmul.f32 %v1237, %v1429
        %v1462 = vmul.f32 %v1238, %v1430
        %v1463 = vmul.f32 %v1239, %v1431
        %v1464 = vmul.f32 %v1240, %v1432
        %v1465 = vmul.f32 %v1241, %v1433
        %v1466 = vmul.f32 %v1242, %v1434
        %v1467 = vmul.f32 %v1243, %v1435
        %v1468 = vmul.f32 %v1244, %v1436
        %v1469 = vmul.f32 %v1245, %v1437
        %v1470 = vmul.f32 %v1246, %v1438
        %v1471 = vmul.f32 %v1247, %v1439
        %v1472 = vmul.f32 %v1248, %v1440
        %v1473 = vmul.f32 %v1249, %v1441
        %v1474 = vmul.f32 %v1250, %v1442
        %v1475 = vmul.f32 %v1251, %v1443
        %v1476 = vmul.f32 %v1252, %v1444
        %v1477 = vmul.f32 %v1253, %v1445
        %v1479 = vlaneseq
        %v1480 = vshrl.u32 %v1479, 7
        %v1481 = vsub.s32 0, %v1480
        %v1482 = vrot.slane %v1088, %v1481
        %v1484 = vmul.f32 %v1446, %v1482
        %v1485 = vmul.f32 %v1447, %v1482
        %v1486 = vmul.f32 %v1448, %v1482
        %v1487 = vmul.f32 %v1449, %v1482
        %v1488 = vmul.f32 %v1450, %v1482
        %v1489 = vmul.f32 %v1451, %v1482
        %v1490 = vmul.f32 %v1452, %v1482
        %v1491 = vmul.f32 %v1453, %v1482
        %v1492 = vmul.f32 %v1454, %v1482
        %v1493 = vmul.f32 %v1455, %v1482
        %v1494 = vmul.f32 %v1456, %v1482
        %v1495 = vmul.f32 %v1457, %v1482
        %v1496 = vmul.f32 %v1458, %v1482
        %v1497 = vmul.f32 %v1459, %v1482
        %v1498 = vmul.f32 %v1460, %v1482
        %v1499 = vmul.f32 %v1461, %v1482
        %v1500 = vmul.f32 %v1462, %v1482
        %v1501 = vmul.f32 %v1463, %v1482
        %v1502 = vmul.f32 %v1464, %v1482
        %v1503 = vmul.f32 %v1465, %v1482
        %v1504 = vmul.f32 %v1466, %v1482
        %v1505 = vmul.f32 %v1467, %v1482
        %v1506 = vmul.f32 %v1468, %v1482
        %v1507 = vmul.f32 %v1469, %v1482
        %v1508 = vmul.f32 %v1470, %v1482
        %v1509 = vmul.f32 %v1471, %v1482
        %v1510 = vmul.f32 %v1472, %v1482
        %v1511 = vmul.f32 %v1473, %v1482
        %v1512 = vmul.f32 %v1474, %v1482
        %v1513 = vmul.f32 %v1475, %v1482
        %v1514 = vmul.f32 %v1476, %v1482
        %v1515 = vmul.f32 %v1477, %v1482
        %v1517 = vlaneseq
        %v1518 = vshrl.u32 %v1517, 7
        %v1519 = vsub.s32 0, %v1518
        %v1520 = vrot.slane %v1090, %v1519
        %v1522 = vadd.f32 %v1484, %v1520
        %v1523 = vadd.f32 %v1485, %v1520
        %v1524 = vadd.f32 %v1486, %v1520
        %v1525 = vadd.f32 %v1487, %v1520
        %v1526 = vadd.f32 %v1488, %v1520
        %v1527 = vadd.f32 %v1489, %v1520
        %v1528 = vadd.f32 %v1490, %v1520
        %v1529 = vadd.f32 %v1491, %v1520
        %v1530 = vadd.f32 %v1492, %v1520
        %v1531 = vadd.f32 %v1493, %v1520
        %v1532 = vadd.f32 %v1494, %v1520
        %v1533 = vadd.f32 %v1495, %v1520
        %v1534 = vadd.f32 %v1496, %v1520
        %v1535 = vadd.f32 %v1497, %v1520
        %v1536 = vadd.f32 %v1498, %v1520
        %v1537 = vadd.f32 %v1499, %v1520
        %v1538 = vadd.f32 %v1500, %v1520
        %v1539 = vadd.f32 %v1501, %v1520
        %v1540 = vadd.f32 %v1502, %v1520
        %v1541 = vadd.f32 %v1503, %v1520
        %v1542 = vadd.f32 %v1504, %v1520
        %v1543 = vadd.f32 %v1505, %v1520
        %v1544 = vadd.f32 %v1506, %v1520
        %v1545 = vadd.f32 %v1507, %v1520
        %v1546 = vadd.f32 %v1508, %v1520
        %v1547 = vadd.f32 %v1509, %v1520
        %v1548 = vadd.f32 %v1510, %v1520
        %v1549 = vadd.f32 %v1511, %v1520
        %v1550 = vadd.f32 %v1512, %v1520
        %v1551 = vadd.f32 %v1513, %v1520
        %v1552 = vadd.f32 %v1514, %v1520
        %v1553 = vadd.f32 %v1515, %v1520
        %v1554 = vpack.c.bf16 %v1523, %v1522
        %v1555 = vpack.c.bf16 %v1525, %v1524
        %v1556 = vpack.c.bf16 %v1527, %v1526
        %v1557 = vpack.c.bf16 %v1529, %v1528
        %v1558 = vpack.c.bf16 %v1531, %v1530
        %v1559 = vpack.c.bf16 %v1533, %v1532
        %v1560 = vpack.c.bf16 %v1535, %v1534
        %v1561 = vpack.c.bf16 %v1537, %v1536
        %v1562 = vpack.c.bf16 %v1539, %v1538
        %v1563 = vpack.c.bf16 %v1541, %v1540
        %v1564 = vpack.c.bf16 %v1543, %v1542
        %v1565 = vpack.c.bf16 %v1545, %v1544
        %v1566 = vpack.c.bf16 %v1547, %v1546
        %v1567 = vpack.c.bf16 %v1549, %v1548
        %v1568 = vpack.c.bf16 %v1551, %v1550
        %v1569 = vpack.c.bf16 %v1553, %v1552
        %s1570 = smul.u32 %s42, 32
        %s1571 = smul.addr %s1570, 4
        %s1572 = scalar_lea.vmem [#allocation11], %s1571
        %v1573 = vld [vmem:[%s1572] sm:$0xff]
        %v1574 = vld [vmem:[%s1572 + $0x8] sm:$0xff]
        %v1575 = vld [vmem:[%s1572 + $0x10] sm:$0xff]
        %v1576 = vld [vmem:[%s1572 + $0x18] sm:$0xff]
        %v1577 = vld [vmem:[%s1572 + $0x20] sm:$0xff]
        %v1578 = vld [vmem:[%s1572 + $0x28] sm:$0xff]
        %v1579 = vld [vmem:[%s1572 + $0x30] sm:$0xff]
        %v1580 = vld [vmem:[%s1572 + $0x38] sm:$0xff]
        %v1581 = vld [vmem:[%s1572 + $0x40] sm:$0xff]
        %v1582 = vld [vmem:[%s1572 + $0x48] sm:$0xff]
        %v1583 = vld [vmem:[%s1572 + $0x50] sm:$0xff]
        %v1584 = vld [vmem:[%s1572 + $0x58] sm:$0xff]
        %v1585 = vld [vmem:[%s1572 + $0x60] sm:$0xff]
        %v1586 = vld [vmem:[%s1572 + $0x68] sm:$0xff]
        %v1587 = vld [vmem:[%s1572 + $0x70] sm:$0xff]
        %v1588 = vld [vmem:[%s1572 + $0x78] sm:$0xff]
        %s1589 = smul.u32 %s42, 2
        %s1590 = scalar_lea.vmem %s6, %s1589
        %v1591 = vld [vmem:[%s1590] sm:$0x3]
        %v1593 = vlaneseq
        %v1594 = vshrl.u32 %v1593, 7
        %v1595 = vsub.s32 0, %v1594
        %v1596 = vrot.slane %v1591, %v1595
        %v1597 = vlaneseq
        %v1598 = vshrl.u32 %v1597, 7
        %v1599 = vsub.s32 1, %v1598
        %v1600 = vrot.slane %v1591, %v1599
        %v1619 = vunpack.c.l.b16 %v1573
        %v1620 = vunpack.c.h.b16 %v1573
        %v1621 = vunpack.c.l.b16 %v1574
        %v1622 = vunpack.c.h.b16 %v1574
        %v1623 = vunpack.c.l.b16 %v1575
        %v1624 = vunpack.c.h.b16 %v1575
        %v1625 = vunpack.c.l.b16 %v1576
        %v1626 = vunpack.c.h.b16 %v1576
        %v1627 = vunpack.c.l.b16 %v1577
        %v1628 = vunpack.c.h.b16 %v1577
        %v1629 = vunpack.c.l.b16 %v1578
        %v1630 = vunpack.c.h.b16 %v1578
        %v1631 = vunpack.c.l.b16 %v1579
        %v1632 = vunpack.c.h.b16 %v1579
        %v1633 = vunpack.c.l.b16 %v1580
        %v1634 = vunpack.c.h.b16 %v1580
        %v1635 = vunpack.c.l.b16 %v1581
        %v1636 = vunpack.c.h.b16 %v1581
        %v1637 = vunpack.c.l.b16 %v1582
        %v1638 = vunpack.c.h.b16 %v1582
        %v1639 = vunpack.c.l.b16 %v1583
        %v1640 = vunpack.c.h.b16 %v1583
        %v1641 = vunpack.c.l.b16 %v1584
        %v1642 = vunpack.c.h.b16 %v1584
        %v1643 = vunpack.c.l.b16 %v1585
        %v1644 = vunpack.c.h.b16 %v1585
        %v1645 = vunpack.c.l.b16 %v1586
        %v1646 = vunpack.c.h.b16 %v1586
        %v1647 = vunpack.c.l.b16 %v1587
        %v1648 = vunpack.c.h.b16 %v1587
        %v1649 = vunpack.c.l.b16 %v1588
        %v1650 = vunpack.c.h.b16 %v1588
        %v1651 = vpack.c.b16 %v1621, %v1619
        %v1652 = vpack.c.b16 %v1622, %v1620
        %v1653 = vpack.c.b16 %v1625, %v1623
        %v1654 = vpack.c.b16 %v1626, %v1624
        %v1655 = vpack.c.b16 %v1629, %v1627
        %v1656 = vpack.c.b16 %v1630, %v1628
        %v1657 = vpack.c.b16 %v1633, %v1631
        %v1658 = vpack.c.b16 %v1634, %v1632
        %v1659 = vpack.c.b16 %v1637, %v1635
        %v1660 = vpack.c.b16 %v1638, %v1636
        %v1661 = vpack.c.b16 %v1641, %v1639
        %v1662 = vpack.c.b16 %v1642, %v1640
        %v1663 = vpack.c.b16 %v1645, %v1643
        %v1664 = vpack.c.b16 %v1646, %v1644
        %v1665 = vpack.c.b16 %v1649, %v1647
        %v1666 = vpack.c.b16 %v1650, %v1648
        %1683 = vmatprep.subr.bf16.mxu0 %v1652
        %1684 = vmatpush1.bf16.msra.mxu0 %v1651
        %1685 = vmatprep.subr.bf16.mxu0 %v1654
        %1686 = vmatpush1.bf16.msra.mxu0 %v1653
        %1687 = vmatprep.subr.bf16.mxu0 %v1656
        %1688 = vmatpush1.bf16.msra.mxu0 %v1655
        %1689 = vmatprep.subr.bf16.mxu0 %v1658
        %1690 = vmatpush1.bf16.msra.mxu0 %v1657
        %1691 = vmatprep.subr.bf16.mxu0 %v1660
        %1692 = vmatpush1.bf16.msra.mxu0 %v1659
        %1693 = vmatprep.subr.bf16.mxu0 %v1662
        %1694 = vmatpush1.bf16.msra.mxu0 %v1661
        %1695 = vmatprep.subr.bf16.mxu0 %v1664
        %1696 = vmatpush1.bf16.msra.mxu0 %v1663
        %1697 = vmatprep.subr.bf16.mxu0 %v1666
        %1698 = vmatpush1.bf16.msra.mxu0 %v1665
        %1699 = vmatprep.subr.bf16.mxu0 0
        %1700 = vmatpush1.bf16.msra.mxu0 0
        %1701 = vmatprep.subr.bf16.mxu0 0
        %1702 = vmatpush1.bf16.msra.mxu0 0
        %1703 = vmatprep.subr.bf16.mxu0 0
        %1704 = vmatpush1.bf16.msra.mxu0 0
        %1705 = vmatprep.subr.bf16.mxu0 0
        %1706 = vmatpush1.bf16.msra.mxu0 0
        %1707 = vmatprep.subr.bf16.mxu0 0
        %1708 = vmatpush1.bf16.msra.mxu0 0
        %1709 = vmatprep.subr.bf16.mxu0 0
        %1710 = vmatpush1.bf16.msra.mxu0 0
        %1711 = vmatprep.subr.bf16.mxu0 0
        %1712 = vmatpush1.bf16.msra.mxu0 0
        %1713 = vmatprep.subr.bf16.mxu0 0
        %1714 = vmatpush1.bf16.msra.mxu0 0
        %1715 = vmatprep.mubr.bf16.mxu0 0
        %1716 = vmatmul.mubr.bf16.gmra.mrb[0].mxu0 %v1554
        %v1717 = vpop.f32.mrb[0].mxu0
        %v1718 = vadd.f32 %v1596, %v1717
        %v1719 = vpop.f32.mrb[0].mxu0
        %v1720 = vadd.f32 %v1600, %v1719
        %v1721 = vpop.f32.mrb[0].mxu0
        %v1722 = vadd.f32 %v1596, %v1721
        %v1723 = vpop.f32.mrb[0].mxu0
        %v1724 = vadd.f32 %v1600, %v1723
        %1725 = vmatprep.mubr.bf16.mxu0 0
        %1726 = vmatmul.mubr.bf16.gmra.mrb[0].mxu0 %v1555
        %v1727 = vpop.f32.mrb[0].mxu0
        %v1728 = vadd.f32 %v1596, %v1727
        %v1729 = vpop.f32.mrb[0].mxu0
        %v1730 = vadd.f32 %v1600, %v1729
        %v1731 = vpop.f32.mrb[0].mxu0
        %v1732 = vadd.f32 %v1596, %v1731
        %v1733 = vpop.f32.mrb[0].mxu0
        %v1734 = vadd.f32 %v1600, %v1733
        %1735 = vmatprep.mubr.bf16.mxu0 0
        %1736 = vmatmul.mubr.bf16.gmra.mrb[0].mxu0 %v1556
        %v1737 = vpop.f32.mrb[0].mxu0
        %v1738 = vadd.f32 %v1596, %v1737
        %v1739 = vpop.f32.mrb[0].mxu0
        %v1740 = vadd.f32 %v1600, %v1739
        %v1741 = vpop.f32.mrb[0].mxu0
        %v1742 = vadd.f32 %v1596, %v1741
        %v1743 = vpop.f32.mrb[0].mxu0
        %v1744 = vadd.f32 %v1600, %v1743
        %1745 = vmatprep.mubr.bf16.mxu0 0
        %1746 = vmatmul.mubr.bf16.gmra.mrb[0].mxu0 %v1557
        %v1747 = vpop.f32.mrb[0].mxu0
        %v1748 = vadd.f32 %v1596, %v1747
        %v1749 = vpop.f32.mrb[0].mxu0
        %v1750 = vadd.f32 %v1600, %v1749
        %v1751 = vpop.f32.mrb[0].mxu0
        %v1752 = vadd.f32 %v1596, %v1751
        %v1753 = vpop.f32.mrb[0].mxu0
        %v1754 = vadd.f32 %v1600, %v1753
        %1755 = vmatprep.mubr.bf16.mxu0 0
        %1756 = vmatmul.mubr.bf16.gmra.mrb[0].mxu0 %v1558
        %v1757 = vpop.f32.mrb[0].mxu0
        %v1758 = vadd.f32 %v1596, %v1757
        %v1759 = vpop.f32.mrb[0].mxu0
        %v1760 = vadd.f32 %v1600, %v1759
        %v1761 = vpop.f32.mrb[0].mxu0
        %v1762 = vadd.f32 %v1596, %v1761
        %v1763 = vpop.f32.mrb[0].mxu0
        %v1764 = vadd.f32 %v1600, %v1763
        %1765 = vmatprep.mubr.bf16.mxu0 0
        %1766 = vmatmul.mubr.bf16.gmra.mrb[0].mxu0 %v1559
        %v1767 = vpop.f32.mrb[0].mxu0
        %v1768 = vadd.f32 %v1596, %v1767
        %v1769 = vpop.f32.mrb[0].mxu0
        %v1770 = vadd.f32 %v1600, %v1769
        %v1771 = vpop.f32.mrb[0].mxu0
        %v1772 = vadd.f32 %v1596, %v1771
        %v1773 = vpop.f32.mrb[0].mxu0
        %v1774 = vadd.f32 %v1600, %v1773
        %1775 = vmatprep.mubr.bf16.mxu0 0
        %1776 = vmatmul.mubr.bf16.gmra.mrb[0].mxu0 %v1560
        %v1777 = vpop.f32.mrb[0].mxu0
        %v1778 = vadd.f32 %v1596, %v1777
        %v1779 = vpop.f32.mrb[0].mxu0
        %v1780 = vadd.f32 %v1600, %v1779
        %v1781 = vpop.f32.mrb[0].mxu0
        %v1782 = vadd.f32 %v1596, %v1781
        %v1783 = vpop.f32.mrb[0].mxu0
        %v1784 = vadd.f32 %v1600, %v1783
        %1785 = vmatprep.mubr.bf16.mxu0 0
        %1786 = vmatmul.mubr.bf16.gmra.mrb[0].mxu0 %v1561
        %v1787 = vpop.f32.mrb[0].mxu0
        %v1788 = vadd.f32 %v1596, %v1787
        %v1789 = vpop.f32.mrb[0].mxu0
        %v1790 = vadd.f32 %v1600, %v1789
        %v1791 = vpop.f32.mrb[0].mxu0
        %v1792 = vadd.f32 %v1596, %v1791
        %v1793 = vpop.f32.mrb[0].mxu0
        %v1794 = vadd.f32 %v1600, %v1793
        %1795 = vmatprep.mubr.bf16.mxu0 0
        %1796 = vmatmul.mubr.bf16.gmra.mrb[0].mxu0 %v1562
        %v1797 = vpop.f32.mrb[0].mxu0
        %v1798 = vadd.f32 %v1596, %v1797
        %v1799 = vpop.f32.mrb[0].mxu0
        %v1800 = vadd.f32 %v1600, %v1799
        %v1801 = vpop.f32.mrb[0].mxu0
        %v1802 = vadd.f32 %v1596, %v1801
        %v1803 = vpop.f32.mrb[0].mxu0
        %v1804 = vadd.f32 %v1600, %v1803
        %1805 = vmatprep.mubr.bf16.mxu0 0
        %1806 = vmatmul.mubr.bf16.gmra.mrb[0].mxu0 %v1563
        %v1807 = vpop.f32.mrb[0].mxu0
        %v1808 = vadd.f32 %v1596, %v1807
        %v1809 = vpop.f32.mrb[0].mxu0
        %v1810 = vadd.f32 %v1600, %v1809
        %v1811 = vpop.f32.mrb[0].mxu0
        %v1812 = vadd.f32 %v1596, %v1811
        %v1813 = vpop.f32.mrb[0].mxu0
        %v1814 = vadd.f32 %v1600, %v1813
        %1815 = vmatprep.mubr.bf16.mxu0 0
        %1816 = vmatmul.mubr.bf16.gmra.mrb[0].mxu0 %v1564
        %v1817 = vpop.f32.mrb[0].mxu0
        %v1818 = vadd.f32 %v1596, %v1817
        %v1819 = vpop.f32.mrb[0].mxu0
        %v1820 = vadd.f32 %v1600, %v1819
        %v1821 = vpop.f32.mrb[0].mxu0
        %v1822 = vadd.f32 %v1596, %v1821
        %v1823 = vpop.f32.mrb[0].mxu0
        %v1824 = vadd.f32 %v1600, %v1823
        %1825 = vmatprep.mubr.bf16.mxu0 0
        %1826 = vmatmul.mubr.bf16.gmra.mrb[0].mxu0 %v1565
        %v1827 = vpop.f32.mrb[0].mxu0
        %v1828 = vadd.f32 %v1596, %v1827
        %v1829 = vpop.f32.mrb[0].mxu0
        %v1830 = vadd.f32 %v1600, %v1829
        %v1831 = vpop.f32.mrb[0].mxu0
        %v1832 = vadd.f32 %v1596, %v1831
        %v1833 = vpop.f32.mrb[0].mxu0
        %v1834 = vadd.f32 %v1600, %v1833
        %1835 = vmatprep.mubr.bf16.mxu0 0
        %1836 = vmatmul.mubr.bf16.gmra.mrb[0].mxu0 %v1566
        %v1837 = vpop.f32.mrb[0].mxu0
        %v1838 = vadd.f32 %v1596, %v1837
        %v1839 = vpop.f32.mrb[0].mxu0
        %v1840 = vadd.f32 %v1600, %v1839
        %v1841 = vpop.f32.mrb[0].mxu0
        %v1842 = vadd.f32 %v1596, %v1841
        %v1843 = vpop.f32.mrb[0].mxu0
        %v1844 = vadd.f32 %v1600, %v1843
        %1845 = vmatprep.mubr.bf16.mxu0 0
        %1846 = vmatmul.mubr.bf16.gmra.mrb[0].mxu0 %v1567
        %v1847 = vpop.f32.mrb[0].mxu0
        %v1848 = vadd.f32 %v1596, %v1847
        %v1849 = vpop.f32.mrb[0].mxu0
        %v1850 = vadd.f32 %v1600, %v1849
        %v1851 = vpop.f32.mrb[0].mxu0
        %v1852 = vadd.f32 %v1596, %v1851
        %v1853 = vpop.f32.mrb[0].mxu0
        %v1854 = vadd.f32 %v1600, %v1853
        %1855 = vmatprep.mubr.bf16.mxu0 0
        %1856 = vmatmul.mubr.bf16.gmra.mrb[0].mxu0 %v1568
        %v1857 = vpop.f32.mrb[0].mxu0
        %v1858 = vadd.f32 %v1596, %v1857
        %v1859 = vpop.f32.mrb[0].mxu0
        %v1860 = vadd.f32 %v1600, %v1859
        %v1861 = vpop.f32.mrb[0].mxu0
        %v1862 = vadd.f32 %v1596, %v1861
        %v1863 = vpop.f32.mrb[0].mxu0
        %v1864 = vadd.f32 %v1600, %v1863
        %1865 = vmatprep.mubr.bf16.mxu0 0
        %1866 = vmatmul.mubr.bf16.gmra.mrb[0].mxu0 %v1569
        %v1867 = vpop.f32.mrb[0].mxu0
        %v1868 = vadd.f32 %v1596, %v1867
        %v1869 = vpop.f32.mrb[0].mxu0
        %v1870 = vadd.f32 %v1600, %v1869
        %v1871 = vpop.f32.mrb[0].mxu0
        %v1872 = vadd.f32 %v1596, %v1871
        %v1873 = vpop.f32.mrb[0].mxu0
        %v1874 = vadd.f32 %v1600, %v1873
        %1875 = vdwg.mxu0
        %v1876 = vmul.f32 %v1718, 0.5
        %v1877 = vmul.f32 %v1720, 0.5
        %v1878 = vmul.f32 %v1722, 0.5
        %v1879 = vmul.f32 %v1724, 0.5
        %v1880 = vmul.f32 %v1728, 0.5
        %v1881 = vmul.f32 %v1730, 0.5
        %v1882 = vmul.f32 %v1732, 0.5
        %v1883 = vmul.f32 %v1734, 0.5
        %v1884 = vmul.f32 %v1738, 0.5
        %v1885 = vmul.f32 %v1740, 0.5
        %v1886 = vmul.f32 %v1742, 0.5
        %v1887 = vmul.f32 %v1744, 0.5
        %v1888 = vmul.f32 %v1748, 0.5
        %v1889 = vmul.f32 %v1750, 0.5
        %v1890 = vmul.f32 %v1752, 0.5
        %v1891 = vmul.f32 %v1754, 0.5
        %v1892 = vmul.f32 %v1758, 0.5
        %v1893 = vmul.f32 %v1760, 0.5
        %v1894 = vmul.f32 %v1762, 0.5
        %v1895 = vmul.f32 %v1764, 0.5
        %v1896 = vmul.f32 %v1768, 0.5
        %v1897 = vmul.f32 %v1770, 0.5
        %v1898 = vmul.f32 %v1772, 0.5
        %v1899 = vmul.f32 %v1774, 0.5
        %v1900 = vmul.f32 %v1778, 0.5
        %v1901 = vmul.f32 %v1780, 0.5
        %v1902 = vmul.f32 %v1782, 0.5
        %v1903 = vmul.f32 %v1784, 0.5
        %v1904 = vmul.f32 %v1788, 0.5
        %v1905 = vmul.f32 %v1790, 0.5
        %v1906 = vmul.f32 %v1792, 0.5
        %v1907 = vmul.f32 %v1794, 0.5
        %v1908 = vmul.f32 %v1798, 0.5
        %v1909 = vmul.f32 %v1800, 0.5
        %v1910 = vmul.f32 %v1802, 0.5
        %v1911 = vmul.f32 %v1804, 0.5
        %v1912 = vmul.f32 %v1808, 0.5
        %v1913 = vmul.f32 %v1810, 0.5
        %v1914 = vmul.f32 %v1812, 0.5
        %v1915 = vmul.f32 %v1814, 0.5
        %v1916 = vmul.f32 %v1818, 0.5
        %v1917 = vmul.f32 %v1820, 0.5
        %v1918 = vmul.f32 %v1822, 0.5
        %v1919 = vmul.f32 %v1824, 0.5
        %v1920 = vmul.f32 %v1828, 0.5
        %v1921 = vmul.f32 %v1830, 0.5
        %v1922 = vmul.f32 %v1832, 0.5
        %v1923 = vmul.f32 %v1834, 0.5
        %v1924 = vmul.f32 %v1838, 0.5
        %v1925 = vmul.f32 %v1840, 0.5
        %v1926 = vmul.f32 %v1842, 0.5
        %v1927 = vmul.f32 %v1844, 0.5
        %v1928 = vmul.f32 %v1848, 0.5
        %v1929 = vmul.f32 %v1850, 0.5
        %v1930 = vmul.f32 %v1852, 0.5
        %v1931 = vmul.f32 %v1854, 0.5
        %v1932 = vmul.f32 %v1858, 0.5
        %v1933 = vmul.f32 %v1860, 0.5
        %v1934 = vmul.f32 %v1862, 0.5
        %v1935 = vmul.f32 %v1864, 0.5
        %v1936 = vmul.f32 %v1868, 0.5
        %v1937 = vmul.f32 %v1870, 0.5
        %v1938 = vmul.f32 %v1872, 0.5
        %v1939 = vmul.f32 %v1874, 0.5
        %v1940 = vmul.f32 %v1718, 0.70710677
        %v1941 = vmul.f32 %v1720, 0.70710677
        %v1942 = vmul.f32 %v1722, 0.70710677
        %v1943 = vmul.f32 %v1724, 0.70710677
        %v1944 = vmul.f32 %v1728, 0.70710677
        %v1945 = vmul.f32 %v1730, 0.70710677
        %v1946 = vmul.f32 %v1732, 0.70710677
        %v1947 = vmul.f32 %v1734, 0.70710677
        %v1948 = vmul.f32 %v1738, 0.70710677
        %v1949 = vmul.f32 %v1740, 0.70710677
        %v1950 = vmul.f32 %v1742, 0.70710677
        %v1951 = vmul.f32 %v1744, 0.70710677
        %v1952 = vmul.f32 %v1748, 0.70710677
        %v1953 = vmul.f32 %v1750, 0.70710677
        %v1954 = vmul.f32 %v1752, 0.70710677
        %v1955 = vmul.f32 %v1754, 0.70710677
        %v1956 = vmul.f32 %v1758, 0.70710677
        %v1957 = vmul.f32 %v1760, 0.70710677
        %v1958 = vmul.f32 %v1762, 0.70710677
        %v1959 = vmul.f32 %v1764, 0.70710677
        %v1960 = vmul.f32 %v1768, 0.70710677
        %v1961 = vmul.f32 %v1770, 0.70710677
        %v1962 = vmul.f32 %v1772, 0.70710677
        %v1963 = vmul.f32 %v1774, 0.70710677
        %v1964 = vmul.f32 %v1778, 0.70710677
        %v1965 = vmul.f32 %v1780, 0.70710677
        %v1966 = vmul.f32 %v1782, 0.70710677
        %v1967 = vmul.f32 %v1784, 0.70710677
        %v1968 = vmul.f32 %v1788, 0.70710677
        %v1969 = vmul.f32 %v1790, 0.70710677
        %v1970 = vmul.f32 %v1792, 0.70710677
        %v1971 = vmul.f32 %v1794, 0.70710677
        %v1972 = vmul.f32 %v1798, 0.70710677
        %v1973 = vmul.f32 %v1800, 0.70710677
        %v1974 = vmul.f32 %v1802, 0.70710677
        %v1975 = vmul.f32 %v1804, 0.70710677
        %v1976 = vmul.f32 %v1808, 0.70710677
        %v1977 = vmul.f32 %v1810, 0.70710677
        %v1978 = vmul.f32 %v1812, 0.70710677
        %v1979 = vmul.f32 %v1814, 0.70710677
        %v1980 = vmul.f32 %v1818, 0.70710677
        %v1981 = vmul.f32 %v1820, 0.70710677
        %v1982 = vmul.f32 %v1822, 0.70710677
        %v1983 = vmul.f32 %v1824, 0.70710677
        %v1984 = vmul.f32 %v1828, 0.70710677
        %v1985 = vmul.f32 %v1830, 0.70710677
        %v1986 = vmul.f32 %v1832, 0.70710677
        %v1987 = vmul.f32 %v1834, 0.70710677
        %v1988 = vmul.f32 %v1838, 0.70710677
        %v1989 = vmul.f32 %v1840, 0.70710677
        %v1990 = vmul.f32 %v1842, 0.70710677
        %v1991 = vmul.f32 %v1844, 0.70710677
        %v1992 = vmul.f32 %v1848, 0.70710677
        %v1993 = vmul.f32 %v1850, 0.70710677
        %v1994 = vmul.f32 %v1852, 0.70710677
        %v1995 = vmul.f32 %v1854, 0.70710677
        %v1996 = vmul.f32 %v1858, 0.70710677
        %v1997 = vmul.f32 %v1860, 0.70710677
        %v1998 = vmul.f32 %v1862, 0.70710677
        %v1999 = vmul.f32 %v1864, 0.70710677
        %v2000 = vmul.f32 %v1868, 0.70710677
        %v2001 = vmul.f32 %v1870, 0.70710677
        %v2002 = vmul.f32 %v1872, 0.70710677
        %v2003 = vmul.f32 %v1874, 0.70710677
        %v2004 = verf.f32.pop %v1940
        %v2005 = verf.f32.pop %v1941
        %v2006 = verf.f32.pop %v1942
        %v2007 = verf.f32.pop %v1943
        %v2008 = verf.f32.pop %v1944
        %v2009 = verf.f32.pop %v1945
        %v2010 = verf.f32.pop %v1946
        %v2011 = verf.f32.pop %v1947
        %v2012 = verf.f32.pop %v1948
        %v2013 = verf.f32.pop %v1949
        %v2014 = verf.f32.pop %v1950
        %v2015 = verf.f32.pop %v1951
        %v2016 = verf.f32.pop %v1952
        %v2017 = verf.f32.pop %v1953
        %v2018 = verf.f32.pop %v1954
        %v2019 = verf.f32.pop %v1955
        %v2020 = verf.f32.pop %v1956
        %v2021 = verf.f32.pop %v1957
        %v2022 = verf.f32.pop %v1958
        %v2023 = verf.f32.pop %v1959
        %v2024 = verf.f32.pop %v1960
        %v2025 = verf.f32.pop %v1961
        %v2026 = verf.f32.pop %v1962
        %v2027 = verf.f32.pop %v1963
        %v2028 = verf.f32.pop %v1964
        %v2029 = verf.f32.pop %v1965
        %v2030 = verf.f32.pop %v1966
        %v2031 = verf.f32.pop %v1967
        %v2032 = verf.f32.pop %v1968
        %v2033 = verf.f32.pop %v1969
        %v2034 = verf.f32.pop %v1970
        %v2035 = verf.f32.pop %v1971
        %v2036 = verf.f32.pop %v1972
        %v2037 = verf.f32.pop %v1973
        %v2038 = verf.f32.pop %v1974
        %v2039 = verf.f32.pop %v1975
        %v2040 = verf.f32.pop %v1976
        %v2041 = verf.f32.pop %v1977
        %v2042 = verf.f32.pop %v1978
        %v2043 = verf.f32.pop %v1979
        %v2044 = verf.f32.pop %v1980
        %v2045 = verf.f32.pop %v1981
        %v2046 = verf.f32.pop %v1982
        %v2047 = verf.f32.pop %v1983
        %v2048 = verf.f32.pop %v1984
        %v2049 = verf.f32.pop %v1985
        %v2050 = verf.f32.pop %v1986
        %v2051 = verf.f32.pop %v1987
        %v2052 = verf.f32.pop %v1988
        %v2053 = verf.f32.pop %v1989
        %v2054 = verf.f32.pop %v1990
        %v2055 = verf.f32.pop %v1991
        %v2056 = verf.f32.pop %v1992
        %v2057 = verf.f32.pop %v1993
        %v2058 = verf.f32.pop %v1994
        %v2059 = verf.f32.pop %v1995
        %v2060 = verf.f32.pop %v1996
        %v2061 = verf.f32.pop %v1997
        %v2062 = verf.f32.pop %v1998
        %v2063 = verf.f32.pop %v1999
        %v2064 = verf.f32.pop %v2000
        %v2065 = verf.f32.pop %v2001
        %v2066 = verf.f32.pop %v2002
        %v2067 = verf.f32.pop %v2003
        %v2068 = vadd.f32 %v2004, 1.0
        %v2069 = vadd.f32 %v2005, 1.0
        %v2070 = vadd.f32 %v2006, 1.0
        %v2071 = vadd.f32 %v2007, 1.0
        %v2072 = vadd.f32 %v2008, 1.0
        %v2073 = vadd.f32 %v2009, 1.0
        %v2074 = vadd.f32 %v2010, 1.0
        %v2075 = vadd.f32 %v2011, 1.0
        %v2076 = vadd.f32 %v2012, 1.0
        %v2077 = vadd.f32 %v2013, 1.0
        %v2078 = vadd.f32 %v2014, 1.0
        %v2079 = vadd.f32 %v2015, 1.0
        %v2080 = vadd.f32 %v2016, 1.0
        %v2081 = vadd.f32 %v2017, 1.0
        %v2082 = vadd.f32 %v2018, 1.0
        %v2083 = vadd.f32 %v2019, 1.0
        %v2084 = vadd.f32 %v2020, 1.0
        %v2085 = vadd.f32 %v2021, 1.0
        %v2086 = vadd.f32 %v2022, 1.0
        %v2087 = vadd.f32 %v2023, 1.0
        %v2088 = vadd.f32 %v2024, 1.0
        %v2089 = vadd.f32 %v2025, 1.0
        %v2090 = vadd.f32 %v2026, 1.0
        %v2091 = vadd.f32 %v2027, 1.0
        %v2092 = vadd.f32 %v2028, 1.0
        %v2093 = vadd.f32 %v2029, 1.0
        %v2094 = vadd.f32 %v2030, 1.0
        %v2095 = vadd.f32 %v2031, 1.0
        %v2096 = vadd.f32 %v2032, 1.0
        %v2097 = vadd.f32 %v2033, 1.0
        %v2098 = vadd.f32 %v2034, 1.0
        %v2099 = vadd.f32 %v2035, 1.0
        %v2100 = vadd.f32 %v2036, 1.0
        %v2101 = vadd.f32 %v2037, 1.0
        %v2102 = vadd.f32 %v2038, 1.0
        %v2103 = vadd.f32 %v2039, 1.0
        %v2104 = vadd.f32 %v2040, 1.0
        %v2105 = vadd.f32 %v2041, 1.0
        %v2106 = vadd.f32 %v2042, 1.0
        %v2107 = vadd.f32 %v2043, 1.0
        %v2108 = vadd.f32 %v2044, 1.0
        %v2109 = vadd.f32 %v2045, 1.0
        %v2110 = vadd.f32 %v2046, 1.0
        %v2111 = vadd.f32 %v2047, 1.0
        %v2112 = vadd.f32 %v2048, 1.0
        %v2113 = vadd.f32 %v2049, 1.0
        %v2114 = vadd.f32 %v2050, 1.0
        %v2115 = vadd.f32 %v2051, 1.0
        %v2116 = vadd.f32 %v2052, 1.0
        %v2117 = vadd.f32 %v2053, 1.0
        %v2118 = vadd.f32 %v2054, 1.0
        %v2119 = vadd.f32 %v2055, 1.0
        %v2120 = vadd.f32 %v2056, 1.0
        %v2121 = vadd.f32 %v2057, 1.0
        %v2122 = vadd.f32 %v2058, 1.0
        %v2123 = vadd.f32 %v2059, 1.0
        %v2124 = vadd.f32 %v2060, 1.0
        %v2125 = vadd.f32 %v2061, 1.0
        %v2126 = vadd.f32 %v2062, 1.0
        %v2127 = vadd.f32 %v2063, 1.0
        %v2128 = vadd.f32 %v2064, 1.0
        %v2129 = vadd.f32 %v2065, 1.0
        %v2130 = vadd.f32 %v2066, 1.0
        %v2131 = vadd.f32 %v2067, 1.0
        %v2132 = vmul.f32 %v1876, %v2068
        %v2133 = vmul.f32 %v1877, %v2069
        %v2134 = vmul.f32 %v1878, %v2070
        %v2135 = vmul.f32 %v1879, %v2071
        %v2136 = vmul.f32 %v1880, %v2072
        %v2137 = vmul.f32 %v1881, %v2073
        %v2138 = vmul.f32 %v1882, %v2074
        %v2139 = vmul.f32 %v1883, %v2075
        %v2140 = vmul.f32 %v1884, %v2076
        %v2141 = vmul.f32 %v1885, %v2077
        %v2142 = vmul.f32 %v1886, %v2078
        %v2143 = vmul.f32 %v1887, %v2079
        %v2144 = vmul.f32 %v1888, %v2080
        %v2145 = vmul.f32 %v1889, %v2081
        %v2146 = vmul.f32 %v1890, %v2082
        %v2147 = vmul.f32 %v1891, %v2083
        %v2148 = vmul.f32 %v1892, %v2084
        %v2149 = vmul.f32 %v1893, %v2085
        %v2150 = vmul.f32 %v1894, %v2086
        %v2151 = vmul.f32 %v1895, %v2087
        %v2152 = vmul.f32 %v1896, %v2088
        %v2153 = vmul.f32 %v1897, %v2089
        %v2154 = vmul.f32 %v1898, %v2090
        %v2155 = vmul.f32 %v1899, %v2091
        %v2156 = vmul.f32 %v1900, %v2092
        %v2157 = vmul.f32 %v1901, %v2093
        %v2158 = vmul.f32 %v1902, %v2094
        %v2159 = vmul.f32 %v1903, %v2095
        %v2160 = vmul.f32 %v1904, %v2096
        %v2161 = vmul.f32 %v1905, %v2097
        %v2162 = vmul.f32 %v1906, %v2098
        %v2163 = vmul.f32 %v1907, %v2099
        %v2164 = vmul.f32 %v1908, %v2100
        %v2165 = vmul.f32 %v1909, %v2101
        %v2166 = vmul.f32 %v1910, %v2102
        %v2167 = vmul.f32 %v1911, %v2103
        %v2168 = vmul.f32 %v1912, %v2104
        %v2169 = vmul.f32 %v1913, %v2105
        %v2170 = vmul.f32 %v1914, %v2106
        %v2171 = vmul.f32 %v1915, %v2107
        %v2172 = vmul.f32 %v1916, %v2108
        %v2173 = vmul.f32 %v1917, %v2109
        %v2174 = vmul.f32 %v1918, %v2110
        %v2175 = vmul.f32 %v1919, %v2111
        %v2176 = vmul.f32 %v1920, %v2112
        %v2177 = vmul.f32 %v1921, %v2113
        %v2178 = vmul.f32 %v1922, %v2114
        %v2179 = vmul.f32 %v1923, %v2115
        %v2180 = vmul.f32 %v1924, %v2116
        %v2181 = vmul.f32 %v1925, %v2117
        %v2182 = vmul.f32 %v1926, %v2118
        %v2183 = vmul.f32 %v1927, %v2119
        %v2184 = vmul.f32 %v1928, %v2120
        %v2185 = vmul.f32 %v1929, %v2121
        %v2186 = vmul.f32 %v1930, %v2122
        %v2187 = vmul.f32 %v1931, %v2123
        %v2188 = vmul.f32 %v1932, %v2124
        %v2189 = vmul.f32 %v1933, %v2125
        %v2190 = vmul.f32 %v1934, %v2126
        %v2191 = vmul.f32 %v1935, %v2127
        %v2192 = vmul.f32 %v1936, %v2128
        %v2193 = vmul.f32 %v1937, %v2129
        %v2194 = vmul.f32 %v1938, %v2130
        %v2195 = vmul.f32 %v1939, %v2131
        %s2196 = scalar_lea.vmem [#allocation12], %s42
        %v2197 = vld [vmem:[%s2196] sm:$0x1]
        %s2198 = scalar_lea.vmem [#allocation14], %s42
        %v2199 = vld [vmem:[%s2198] sm:$0x1]
        %2200 = vadd.xlane.f32.xlu0 %v2133
        %v2201 = vpop.xlane.xlu0 %2200
        %2202 = vadd.xlane.f32.xlu0 %v2135
        %v2203 = vpop.xlane.xlu0 %2202
        %2204 = vadd.xlane.f32.xlu0 %v2137
        %v2205 = vpop.xlane.xlu0 %2204
        %2206 = vadd.xlane.f32.xlu0 %v2139
        %v2207 = vpop.xlane.xlu0 %2206
        %2208 = vadd.xlane.f32.xlu0 %v2141
        %v2209 = vpop.xlane.xlu0 %2208
        %2210 = vadd.xlane.f32.xlu0 %v2143
        %v2211 = vpop.xlane.xlu0 %2210
        %2212 = vadd.xlane.f32.xlu0 %v2145
        %v2213 = vpop.xlane.xlu0 %2212
        %2214 = vadd.xlane.f32.xlu0 %v2147
        %v2215 = vpop.xlane.xlu0 %2214
        %2216 = vadd.xlane.f32.xlu0 %v2149
        %v2217 = vpop.xlane.xlu0 %2216
        %2218 = vadd.xlane.f32.xlu0 %v2151
        %v2219 = vpop.xlane.xlu0 %2218
        %2220 = vadd.xlane.f32.xlu0 %v2153
        %v2221 = vpop.xlane.xlu0 %2220
        %2222 = vadd.xlane.f32.xlu0 %v2155
        %v2223 = vpop.xlane.xlu0 %2222
        %2224 = vadd.xlane.f32.xlu0 %v2157
        %v2225 = vpop.xlane.xlu0 %2224
        %2226 = vadd.xlane.f32.xlu0 %v2159
        %v2227 = vpop.xlane.xlu0 %2226
        %2228 = vadd.xlane.f32.xlu0 %v2161
        %v2229 = vpop.xlane.xlu0 %2228
        %2230 = vadd.xlane.f32.xlu0 %v2163
        %v2231 = vpop.xlane.xlu0 %2230
        %2232 = vadd.xlane.f32.xlu0 %v2165
        %v2233 = vpop.xlane.xlu0 %2232
        %2234 = vadd.xlane.f32.xlu0 %v2167
        %v2235 = vpop.xlane.xlu0 %2234
        %2236 = vadd.xlane.f32.xlu0 %v2169
        %v2237 = vpop.xlane.xlu0 %2236
        %2238 = vadd.xlane.f32.xlu0 %v2171
        %v2239 = vpop.xlane.xlu0 %2238
        %2240 = vadd.xlane.f32.xlu0 %v2173
        %v2241 = vpop.xlane.xlu0 %2240
        %2242 = vadd.xlane.f32.xlu0 %v2175
        %v2243 = vpop.xlane.xlu0 %2242
        %2244 = vadd.xlane.f32.xlu0 %v2177
        %v2245 = vpop.xlane.xlu0 %2244
        %2246 = vadd.xlane.f32.xlu0 %v2179
        %v2247 = vpop.xlane.xlu0 %2246
        %2248 = vadd.xlane.f32.xlu0 %v2181
        %v2249 = vpop.xlane.xlu0 %2248
        %2250 = vadd.xlane.f32.xlu0 %v2183
        %v2251 = vpop.xlane.xlu0 %2250
        %2252 = vadd.xlane.f32.xlu0 %v2185
        %v2253 = vpop.xlane.xlu0 %2252
        %2254 = vadd.xlane.f32.xlu0 %v2187
        %v2255 = vpop.xlane.xlu0 %2254
        %2256 = vadd.xlane.f32.xlu0 %v2189
        %v2257 = vpop.xlane.xlu0 %2256
        %2258 = vadd.xlane.f32.xlu0 %v2191
        %v2259 = vpop.xlane.xlu0 %2258
        %2260 = vadd.xlane.f32.xlu0 %v2193
        %v2261 = vpop.xlane.xlu0 %2260
        %2262 = vadd.xlane.f32.xlu0 %v2195
        %v2263 = vpop.xlane.xlu0 %2262
        %v2264 = vmul.f32 %v2201, 0.015625
        %v2265 = vmul.f32 %v2203, 0.015625
        %v2266 = vmul.f32 %v2205, 0.015625
        %v2267 = vmul.f32 %v2207, 0.015625
        %v2268 = vmul.f32 %v2209, 0.015625
        %v2269 = vmul.f32 %v2211, 0.015625
        %v2270 = vmul.f32 %v2213, 0.015625
        %v2271 = vmul.f32 %v2215, 0.015625
        %v2272 = vmul.f32 %v2217, 0.015625
        %v2273 = vmul.f32 %v2219, 0.015625
        %v2274 = vmul.f32 %v2221, 0.015625
        %v2275 = vmul.f32 %v2223, 0.015625
        %v2276 = vmul.f32 %v2225, 0.015625
        %v2277 = vmul.f32 %v2227, 0.015625
        %v2278 = vmul.f32 %v2229, 0.015625
        %v2279 = vmul.f32 %v2231, 0.015625
        %v2280 = vmul.f32 %v2233, 0.015625
        %v2281 = vmul.f32 %v2235, 0.015625
        %v2282 = vmul.f32 %v2237, 0.015625
        %v2283 = vmul.f32 %v2239, 0.015625
        %v2284 = vmul.f32 %v2241, 0.015625
        %v2285 = vmul.f32 %v2243, 0.015625
        %v2286 = vmul.f32 %v2245, 0.015625
        %v2287 = vmul.f32 %v2247, 0.015625
        %v2288 = vmul.f32 %v2249, 0.015625
        %v2289 = vmul.f32 %v2251, 0.015625
        %v2290 = vmul.f32 %v2253, 0.015625
        %v2291 = vmul.f32 %v2255, 0.015625
        %v2292 = vmul.f32 %v2257, 0.015625
        %v2293 = vmul.f32 %v2259, 0.015625
        %v2294 = vmul.f32 %v2261, 0.015625
        %v2295 = vmul.f32 %v2263, 0.015625
        %v2296 = vsub.f32 %v2133, %v2264
        %v2297 = vsub.f32 %v2135, %v2265
        %v2298 = vsub.f32 %v2137, %v2266
        %v2299 = vsub.f32 %v2139, %v2267
        %v2300 = vsub.f32 %v2141, %v2268
        %v2301 = vsub.f32 %v2143, %v2269
        %v2302 = vsub.f32 %v2145, %v2270
        %v2303 = vsub.f32 %v2147, %v2271
        %v2304 = vsub.f32 %v2149, %v2272
        %v2305 = vsub.f32 %v2151, %v2273
        %v2306 = vsub.f32 %v2153, %v2274
        %v2307 = vsub.f32 %v2155, %v2275
        %v2308 = vsub.f32 %v2157, %v2276
        %v2309 = vsub.f32 %v2159, %v2277
        %v2310 = vsub.f32 %v2161, %v2278
        %v2311 = vsub.f32 %v2163, %v2279
        %v2312 = vsub.f32 %v2165, %v2280
        %v2313 = vsub.f32 %v2167, %v2281
        %v2314 = vsub.f32 %v2169, %v2282
        %v2315 = vsub.f32 %v2171, %v2283
        %v2316 = vsub.f32 %v2173, %v2284
        %v2317 = vsub.f32 %v2175, %v2285
        %v2318 = vsub.f32 %v2177, %v2286
        %v2319 = vsub.f32 %v2179, %v2287
        %v2320 = vsub.f32 %v2181, %v2288
        %v2321 = vsub.f32 %v2183, %v2289
        %v2322 = vsub.f32 %v2185, %v2290
        %v2323 = vsub.f32 %v2187, %v2291
        %v2324 = vsub.f32 %v2189, %v2292
        %v2325 = vsub.f32 %v2191, %v2293
        %v2326 = vsub.f32 %v2193, %v2294
        %v2327 = vsub.f32 %v2195, %v2295
        %vm2328 = vcmp.lt.s32.totalorder %v1220, 64
        %v2329 = vsel %vm2328, %v2296, 0.0
        %v2330 = vsel %vm2328, %v2297, 0.0
        %v2331 = vsel %vm2328, %v2298, 0.0
        %v2332 = vsel %vm2328, %v2299, 0.0
        %v2333 = vsel %vm2328, %v2300, 0.0
        %v2334 = vsel %vm2328, %v2301, 0.0
        %v2335 = vsel %vm2328, %v2302, 0.0
        %v2336 = vsel %vm2328, %v2303, 0.0
        %v2337 = vsel %vm2328, %v2304, 0.0
        %v2338 = vsel %vm2328, %v2305, 0.0
        %v2339 = vsel %vm2328, %v2306, 0.0
        %v2340 = vsel %vm2328, %v2307, 0.0
        %v2341 = vsel %vm2328, %v2308, 0.0
        %v2342 = vsel %vm2328, %v2309, 0.0
        %v2343 = vsel %vm2328, %v2310, 0.0
        %v2344 = vsel %vm2328, %v2311, 0.0
        %v2345 = vsel %vm2328, %v2312, 0.0
        %v2346 = vsel %vm2328, %v2313, 0.0
        %v2347 = vsel %vm2328, %v2314, 0.0
        %v2348 = vsel %vm2328, %v2315, 0.0
        %v2349 = vsel %vm2328, %v2316, 0.0
        %v2350 = vsel %vm2328, %v2317, 0.0
        %v2351 = vsel %vm2328, %v2318, 0.0
        %v2352 = vsel %vm2328, %v2319, 0.0
        %v2353 = vsel %vm2328, %v2320, 0.0
        %v2354 = vsel %vm2328, %v2321, 0.0
        %v2355 = vsel %vm2328, %v2322, 0.0
        %v2356 = vsel %vm2328, %v2323, 0.0
        %v2357 = vsel %vm2328, %v2324, 0.0
        %v2358 = vsel %vm2328, %v2325, 0.0
        %v2359 = vsel %vm2328, %v2326, 0.0
        %v2360 = vsel %vm2328, %v2327, 0.0
        %v2361 = vmul.f32 %v2329, %v2329
        %v2362 = vmul.f32 %v2330, %v2330
        %v2363 = vmul.f32 %v2331, %v2331
        %v2364 = vmul.f32 %v2332, %v2332
        %v2365 = vmul.f32 %v2333, %v2333
        %v2366 = vmul.f32 %v2334, %v2334
        %v2367 = vmul.f32 %v2335, %v2335
        %v2368 = vmul.f32 %v2336, %v2336
        %v2369 = vmul.f32 %v2337, %v2337
        %v2370 = vmul.f32 %v2338, %v2338
        %v2371 = vmul.f32 %v2339, %v2339
        %v2372 = vmul.f32 %v2340, %v2340
        %v2373 = vmul.f32 %v2341, %v2341
        %v2374 = vmul.f32 %v2342, %v2342
        %v2375 = vmul.f32 %v2343, %v2343
        %v2376 = vmul.f32 %v2344, %v2344
        %v2377 = vmul.f32 %v2345, %v2345
        %v2378 = vmul.f32 %v2346, %v2346
        %v2379 = vmul.f32 %v2347, %v2347
        %v2380 = vmul.f32 %v2348, %v2348
        %v2381 = vmul.f32 %v2349, %v2349
        %v2382 = vmul.f32 %v2350, %v2350
        %v2383 = vmul.f32 %v2351, %v2351
        %v2384 = vmul.f32 %v2352, %v2352
        %v2385 = vmul.f32 %v2353, %v2353
        %v2386 = vmul.f32 %v2354, %v2354
        %v2387 = vmul.f32 %v2355, %v2355
        %v2388 = vmul.f32 %v2356, %v2356
        %v2389 = vmul.f32 %v2357, %v2357
        %v2390 = vmul.f32 %v2358, %v2358
        %v2391 = vmul.f32 %v2359, %v2359
        %v2392 = vmul.f32 %v2360, %v2360
        %2393 = vadd.xlane.f32.xlu0 %v2361
        %v2394 = vpop.xlane.xlu0 %2393
        %2395 = vadd.xlane.f32.xlu0 %v2362
        %v2396 = vpop.xlane.xlu0 %2395
        %2397 = vadd.xlane.f32.xlu0 %v2363
        %v2398 = vpop.xlane.xlu0 %2397
        %2399 = vadd.xlane.f32.xlu0 %v2364
        %v2400 = vpop.xlane.xlu0 %2399
        %2401 = vadd.xlane.f32.xlu0 %v2365
        %v2402 = vpop.xlane.xlu0 %2401
        %2403 = vadd.xlane.f32.xlu0 %v2366
        %v2404 = vpop.xlane.xlu0 %2403
        %2405 = vadd.xlane.f32.xlu0 %v2367
        %v2406 = vpop.xlane.xlu0 %2405
        %2407 = vadd.xlane.f32.xlu0 %v2368
        %v2408 = vpop.xlane.xlu0 %2407
        %2409 = vadd.xlane.f32.xlu0 %v2369
        %v2410 = vpop.xlane.xlu0 %2409
        %2411 = vadd.xlane.f32.xlu0 %v2370
        %v2412 = vpop.xlane.xlu0 %2411
        %2413 = vadd.xlane.f32.xlu0 %v2371
        %v2414 = vpop.xlane.xlu0 %2413
        %2415 = vadd.xlane.f32.xlu0 %v2372
        %v2416 = vpop.xlane.xlu0 %2415
        %2417 = vadd.xlane.f32.xlu0 %v2373
        %v2418 = vpop.xlane.xlu0 %2417
        %2419 = vadd.xlane.f32.xlu0 %v2374
        %v2420 = vpop.xlane.xlu0 %2419
        %2421 = vadd.xlane.f32.xlu0 %v2375
        %v2422 = vpop.xlane.xlu0 %2421
        %2423 = vadd.xlane.f32.xlu0 %v2376
        %v2424 = vpop.xlane.xlu0 %2423
        %2425 = vadd.xlane.f32.xlu0 %v2377
        %v2426 = vpop.xlane.xlu0 %2425
        %2427 = vadd.xlane.f32.xlu0 %v2378
        %v2428 = vpop.xlane.xlu0 %2427
        %2429 = vadd.xlane.f32.xlu0 %v2379
        %v2430 = vpop.xlane.xlu0 %2429
        %2431 = vadd.xlane.f32.xlu0 %v2380
        %v2432 = vpop.xlane.xlu0 %2431
        %2433 = vadd.xlane.f32.xlu0 %v2381
        %v2434 = vpop.xlane.xlu0 %2433
        %2435 = vadd.xlane.f32.xlu0 %v2382
        %v2436 = vpop.xlane.xlu0 %2435
        %2437 = vadd.xlane.f32.xlu0 %v2383
        %v2438 = vpop.xlane.xlu0 %2437
        %2439 = vadd.xlane.f32.xlu0 %v2384
        %v2440 = vpop.xlane.xlu0 %2439
        %2441 = vadd.xlane.f32.xlu0 %v2385
        %v2442 = vpop.xlane.xlu0 %2441
        %2443 = vadd.xlane.f32.xlu0 %v2386
        %v2444 = vpop.xlane.xlu0 %2443
        %2445 = vadd.xlane.f32.xlu0 %v2387
        %v2446 = vpop.xlane.xlu0 %2445
        %2447 = vadd.xlane.f32.xlu0 %v2388
        %v2448 = vpop.xlane.xlu0 %2447
        %2449 = vadd.xlane.f32.xlu0 %v2389
        %v2450 = vpop.xlane.xlu0 %2449
        %2451 = vadd.xlane.f32.xlu0 %v2390
        %v2452 = vpop.xlane.xlu0 %2451
        %2453 = vadd.xlane.f32.xlu0 %v2391
        %v2454 = vpop.xlane.xlu0 %2453
        %2455 = vadd.xlane.f32.xlu0 %v2392
        %v2456 = vpop.xlane.xlu0 %2455
        %v2457 = vmul.f32 %v2394, 0.015625
        %v2458 = vmul.f32 %v2396, 0.015625
        %v2459 = vmul.f32 %v2398, 0.015625
        %v2460 = vmul.f32 %v2400, 0.015625
        %v2461 = vmul.f32 %v2402, 0.015625
        %v2462 = vmul.f32 %v2404, 0.015625
        %v2463 = vmul.f32 %v2406, 0.015625
        %v2464 = vmul.f32 %v2408, 0.015625
        %v2465 = vmul.f32 %v2410, 0.015625
        %v2466 = vmul.f32 %v2412, 0.015625
        %v2467 = vmul.f32 %v2414, 0.015625
        %v2468 = vmul.f32 %v2416, 0.015625
        %v2469 = vmul.f32 %v2418, 0.015625
        %v2470 = vmul.f32 %v2420, 0.015625
        %v2471 = vmul.f32 %v2422, 0.015625
        %v2472 = vmul.f32 %v2424, 0.015625
        %v2473 = vmul.f32 %v2426, 0.015625
        %v2474 = vmul.f32 %v2428, 0.015625
        %v2475 = vmul.f32 %v2430, 0.015625
        %v2476 = vmul.f32 %v2432, 0.015625
        %v2477 = vmul.f32 %v2434, 0.015625
        %v2478 = vmul.f32 %v2436, 0.015625
        %v2479 = vmul.f32 %v2438, 0.015625
        %v2480 = vmul.f32 %v2440, 0.015625
        %v2481 = vmul.f32 %v2442, 0.015625
        %v2482 = vmul.f32 %v2444, 0.015625
        %v2483 = vmul.f32 %v2446, 0.015625
        %v2484 = vmul.f32 %v2448, 0.015625
        %v2485 = vmul.f32 %v2450, 0.015625
        %v2486 = vmul.f32 %v2452, 0.015625
        %v2487 = vmul.f32 %v2454, 0.015625
        %v2488 = vmul.f32 %v2456, 0.015625
        %v2489 = vadd.f32 %v2457, 1e-05
        %v2490 = vadd.f32 %v2458, 1e-05
        %v2491 = vadd.f32 %v2459, 1e-05
        %v2492 = vadd.f32 %v2460, 1e-05
        %v2493 = vadd.f32 %v2461, 1e-05
        %v2494 = vadd.f32 %v2462, 1e-05
        %v2495 = vadd.f32 %v2463, 1e-05
        %v2496 = vadd.f32 %v2464, 1e-05
        %v2497 = vadd.f32 %v2465, 1e-05
        %v2498 = vadd.f32 %v2466, 1e-05
        %v2499 = vadd.f32 %v2467, 1e-05
        %v2500 = vadd.f32 %v2468, 1e-05
        %v2501 = vadd.f32 %v2469, 1e-05
        %v2502 = vadd.f32 %v2470, 1e-05
        %v2503 = vadd.f32 %v2471, 1e-05
        %v2504 = vadd.f32 %v2472, 1e-05
        %v2505 = vadd.f32 %v2473, 1e-05
        %v2506 = vadd.f32 %v2474, 1e-05
        %v2507 = vadd.f32 %v2475, 1e-05
        %v2508 = vadd.f32 %v2476, 1e-05
        %v2509 = vadd.f32 %v2477, 1e-05
        %v2510 = vadd.f32 %v2478, 1e-05
        %v2511 = vadd.f32 %v2479, 1e-05
        %v2512 = vadd.f32 %v2480, 1e-05
        %v2513 = vadd.f32 %v2481, 1e-05
        %v2514 = vadd.f32 %v2482, 1e-05
        %v2515 = vadd.f32 %v2483, 1e-05
        %v2516 = vadd.f32 %v2484, 1e-05
        %v2517 = vadd.f32 %v2485, 1e-05
        %v2518 = vadd.f32 %v2486, 1e-05
        %v2519 = vadd.f32 %v2487, 1e-05
        %v2520 = vadd.f32 %v2488, 1e-05
        %v2521 = vrsqrt.pop %v2489
        %v2522 = vrsqrt.pop %v2490
        %v2523 = vrsqrt.pop %v2491
        %v2524 = vrsqrt.pop %v2492
        %v2525 = vrsqrt.pop %v2493
        %v2526 = vrsqrt.pop %v2494
        %v2527 = vrsqrt.pop %v2495
        %v2528 = vrsqrt.pop %v2496
        %v2529 = vrsqrt.pop %v2497
        %v2530 = vrsqrt.pop %v2498
        %v2531 = vrsqrt.pop %v2499
        %v2532 = vrsqrt.pop %v2500
        %v2533 = vrsqrt.pop %v2501
        %v2534 = vrsqrt.pop %v2502
        %v2535 = vrsqrt.pop %v2503
        %v2536 = vrsqrt.pop %v2504
        %v2537 = vrsqrt.pop %v2505
        %v2538 = vrsqrt.pop %v2506
        %v2539 = vrsqrt.pop %v2507
        %v2540 = vrsqrt.pop %v2508
        %v2541 = vrsqrt.pop %v2509
        %v2542 = vrsqrt.pop %v2510
        %v2543 = vrsqrt.pop %v2511
        %v2544 = vrsqrt.pop %v2512
        %v2545 = vrsqrt.pop %v2513
        %v2546 = vrsqrt.pop %v2514
        %v2547 = vrsqrt.pop %v2515
        %v2548 = vrsqrt.pop %v2516
        %v2549 = vrsqrt.pop %v2517
        %v2550 = vrsqrt.pop %v2518
        %v2551 = vrsqrt.pop %v2519
        %v2552 = vrsqrt.pop %v2520
        %v2553 = vmul.f32 %v2329, %v2521
        %v2554 = vmul.f32 %v2330, %v2522
        %v2555 = vmul.f32 %v2331, %v2523
        %v2556 = vmul.f32 %v2332, %v2524
        %v2557 = vmul.f32 %v2333, %v2525
        %v2558 = vmul.f32 %v2334, %v2526
        %v2559 = vmul.f32 %v2335, %v2527
        %v2560 = vmul.f32 %v2336, %v2528
        %v2561 = vmul.f32 %v2337, %v2529
        %v2562 = vmul.f32 %v2338, %v2530
        %v2563 = vmul.f32 %v2339, %v2531
        %v2564 = vmul.f32 %v2340, %v2532
        %v2565 = vmul.f32 %v2341, %v2533
        %v2566 = vmul.f32 %v2342, %v2534
        %v2567 = vmul.f32 %v2343, %v2535
        %v2568 = vmul.f32 %v2344, %v2536
        %v2569 = vmul.f32 %v2345, %v2537
        %v2570 = vmul.f32 %v2346, %v2538
        %v2571 = vmul.f32 %v2347, %v2539
        %v2572 = vmul.f32 %v2348, %v2540
        %v2573 = vmul.f32 %v2349, %v2541
        %v2574 = vmul.f32 %v2350, %v2542
        %v2575 = vmul.f32 %v2351, %v2543
        %v2576 = vmul.f32 %v2352, %v2544
        %v2577 = vmul.f32 %v2353, %v2545
        %v2578 = vmul.f32 %v2354, %v2546
        %v2579 = vmul.f32 %v2355, %v2547
        %v2580 = vmul.f32 %v2356, %v2548
        %v2581 = vmul.f32 %v2357, %v2549
        %v2582 = vmul.f32 %v2358, %v2550
        %v2583 = vmul.f32 %v2359, %v2551
        %v2584 = vmul.f32 %v2360, %v2552
        %v2586 = vlaneseq
        %v2587 = vshrl.u32 %v2586, 7
        %v2588 = vsub.s32 0, %v2587
        %v2589 = vrot.slane %v2197, %v2588
        %v2591 = vmul.f32 %v2553, %v2589
        %v2592 = vmul.f32 %v2554, %v2589
        %v2593 = vmul.f32 %v2555, %v2589
        %v2594 = vmul.f32 %v2556, %v2589
        %v2595 = vmul.f32 %v2557, %v2589
        %v2596 = vmul.f32 %v2558, %v2589
        %v2597 = vmul.f32 %v2559, %v2589
        %v2598 = vmul.f32 %v2560, %v2589
        %v2599 = vmul.f32 %v2561, %v2589
        %v2600 = vmul.f32 %v2562, %v2589
        %v2601 = vmul.f32 %v2563, %v2589
        %v2602 = vmul.f32 %v2564, %v2589
        %v2603 = vmul.f32 %v2565, %v2589
        %v2604 = vmul.f32 %v2566, %v2589
        %v2605 = vmul.f32 %v2567, %v2589
        %v2606 = vmul.f32 %v2568, %v2589
        %v2607 = vmul.f32 %v2569, %v2589
        %v2608 = vmul.f32 %v2570, %v2589
        %v2609 = vmul.f32 %v2571, %v2589
        %v2610 = vmul.f32 %v2572, %v2589
        %v2611 = vmul.f32 %v2573, %v2589
        %v2612 = vmul.f32 %v2574, %v2589
        %v2613 = vmul.f32 %v2575, %v2589
        %v2614 = vmul.f32 %v2576, %v2589
        %v2615 = vmul.f32 %v2577, %v2589
        %v2616 = vmul.f32 %v2578, %v2589
        %v2617 = vmul.f32 %v2579, %v2589
        %v2618 = vmul.f32 %v2580, %v2589
        %v2619 = vmul.f32 %v2581, %v2589
        %v2620 = vmul.f32 %v2582, %v2589
        %v2621 = vmul.f32 %v2583, %v2589
        %v2622 = vmul.f32 %v2584, %v2589
        %v2624 = vlaneseq
        %v2625 = vshrl.u32 %v2624, 7
        %v2626 = vsub.s32 0, %v2625
        %v2627 = vrot.slane %v2199, %v2626
        %v2629 = vadd.f32 %v2591, %v2627
        %v2630 = vadd.f32 %v2592, %v2627
        %v2631 = vadd.f32 %v2593, %v2627
        %v2632 = vadd.f32 %v2594, %v2627
        %v2633 = vadd.f32 %v2595, %v2627
        %v2634 = vadd.f32 %v2596, %v2627
        %v2635 = vadd.f32 %v2597, %v2627
        %v2636 = vadd.f32 %v2598, %v2627
        %v2637 = vadd.f32 %v2599, %v2627
        %v2638 = vadd.f32 %v2600, %v2627
        %v2639 = vadd.f32 %v2601, %v2627
        %v2640 = vadd.f32 %v2602, %v2627
        %v2641 = vadd.f32 %v2603, %v2627
        %v2642 = vadd.f32 %v2604, %v2627
        %v2643 = vadd.f32 %v2605, %v2627
        %v2644 = vadd.f32 %v2606, %v2627
        %v2645 = vadd.f32 %v2607, %v2627
        %v2646 = vadd.f32 %v2608, %v2627
        %v2647 = vadd.f32 %v2609, %v2627
        %v2648 = vadd.f32 %v2610, %v2627
        %v2649 = vadd.f32 %v2611, %v2627
        %v2650 = vadd.f32 %v2612, %v2627
        %v2651 = vadd.f32 %v2613, %v2627
        %v2652 = vadd.f32 %v2614, %v2627
        %v2653 = vadd.f32 %v2615, %v2627
        %v2654 = vadd.f32 %v2616, %v2627
        %v2655 = vadd.f32 %v2617, %v2627
        %v2656 = vadd.f32 %v2618, %v2627
        %v2657 = vadd.f32 %v2619, %v2627
        %v2658 = vadd.f32 %v2620, %v2627
        %v2659 = vadd.f32 %v2621, %v2627
        %v2660 = vadd.f32 %v2622, %v2627
        %v2661 = vpack.c.bf16 %v2630, %v2629
        %v2662 = vpack.c.bf16 %v2632, %v2631
        %v2663 = vpack.c.bf16 %v2634, %v2633
        %v2664 = vpack.c.bf16 %v2636, %v2635
        %v2665 = vpack.c.bf16 %v2638, %v2637
        %v2666 = vpack.c.bf16 %v2640, %v2639
        %v2667 = vpack.c.bf16 %v2642, %v2641
        %v2668 = vpack.c.bf16 %v2644, %v2643
        %v2669 = vpack.c.bf16 %v2646, %v2645
        %v2670 = vpack.c.bf16 %v2648, %v2647
        %v2671 = vpack.c.bf16 %v2650, %v2649
        %v2672 = vpack.c.bf16 %v2652, %v2651
        %v2673 = vpack.c.bf16 %v2654, %v2653
        %v2674 = vpack.c.bf16 %v2656, %v2655
        %v2675 = vpack.c.bf16 %v2658, %v2657
        %v2676 = vpack.c.bf16 %v2660, %v2659
        %s2677 = smul.addr %s1589, 4
        %s2678 = scalar_lea.vmem [#allocation15], %s2677
        %v2679 = vld [vmem:[%s2678] sm:$0xf]
        %v2680 = vld [vmem:[%s2678 + $0x4] sm:$0xf]
        %v2683 = vunpack.c.l.b16 %v2679
        %v2684 = vunpack.c.l.b16 %v2680
        %v2685 = vpack.c.b16 %v2684, %v2683
        %vm2686 = vcmask 130048
        %v2688 = vsel %vm2686, %v2685, 0
        %2690 = vmatprep.subr.bf16.mxu0 %v2662
        %2691 = vmatpush1.bf16.msra.mxu0 %v2661
        %2692 = vmatprep.subr.bf16.mxu0 0
        %2693 = vmatpush1.bf16.msra.mxu0 0
        %2694 = vmatprep.subr.bf16.mxu0 0
        %2695 = vmatpush1.bf16.msra.mxu0 0
        %2696 = vmatprep.subr.bf16.mxu0 0
        %2697 = vmatpush1.bf16.msra.mxu0 0
        %2698 = vmatprep.subr.bf16.mxu0 0
        %2699 = vmatpush1.bf16.msra.mxu0 0
        %2700 = vmatprep.subr.bf16.mxu0 0
        %2701 = vmatpush1.bf16.msra.mxu0 0
        %2702 = vmatprep.subr.bf16.mxu0 0
        %2703 = vmatpush1.bf16.msra.mxu0 0
        %2704 = vmatprep.subr.bf16.mxu0 0
        %2705 = vmatpush1.bf16.msra.mxu0 0
        %2706 = vmatprep.subr.bf16.mxu0 0
        %2707 = vmatpush1.bf16.msra.mxu0 0
        %2708 = vmatprep.subr.bf16.mxu0 0
        %2709 = vmatpush1.bf16.msra.mxu0 0
        %2710 = vmatprep.subr.bf16.mxu0 0
        %2711 = vmatpush1.bf16.msra.mxu0 0
        %2712 = vmatprep.subr.bf16.mxu0 0
        %2713 = vmatpush1.bf16.msra.mxu0 0
        %2714 = vmatprep.subr.bf16.mxu0 0
        %2715 = vmatpush1.bf16.msra.mxu0 0
        %2716 = vmatprep.subr.bf16.mxu0 0
        %2717 = vmatpush1.bf16.msra.mxu0 0
        %2718 = vmatprep.subr.bf16.mxu0 0
        %2719 = vmatpush1.bf16.msra.mxu0 0
        %2720 = vmatprep.subr.bf16.mxu0 0
        %2721 = vmatpush1.bf16.msra.mxu0 0
        %2722 = vmatprep.mubr.bf16.mxu0 0
        %2723 = vmatmul.mubr.bf16.gmra.mrb[0].mxu0 %v2688
        %v2724 = vpop.f32.mrb[0].mxu0
        %v2725 = vadd.f32 0.0, %v2724
        %v2726 = vpop.f32.mrb[0].mxu0
        %v2727 = vadd.f32 0.0, %v2726
        %v2728 = vpop.f32.mrb[0].mxu0
        %v2729 = vadd.f32 0.0, %v2728
        %v2730 = vpop.f32.mrb[0].mxu0
        %v2731 = vadd.f32 0.0, %v2730
        %2732 = vdwg.mxu0
        %2733 = vmatprep.subr.bf16.mxu0 %v2664
        %2734 = vmatpush1.bf16.msra.mxu0 %v2663
        %2735 = vmatprep.subr.bf16.mxu0 0
        %2736 = vmatpush1.bf16.msra.mxu0 0
        %2737 = vmatprep.subr.bf16.mxu0 0
        %2738 = vmatpush1.bf16.msra.mxu0 0
        %2739 = vmatprep.subr.bf16.mxu0 0
        %2740 = vmatpush1.bf16.msra.mxu0 0
        %2741 = vmatprep.subr.bf16.mxu0 0
        %2742 = vmatpush1.bf16.msra.mxu0 0
        %2743 = vmatprep.subr.bf16.mxu0 0
        %2744 = vmatpush1.bf16.msra.mxu0 0
        %2745 = vmatprep.subr.bf16.mxu0 0
        %2746 = vmatpush1.bf16.msra.mxu0 0
        %2747 = vmatprep.subr.bf16.mxu0 0
        %2748 = vmatpush1.bf16.msra.mxu0 0
        %2749 = vmatprep.subr.bf16.mxu0 0
        %2750 = vmatpush1.bf16.msra.mxu0 0
        %2751 = vmatprep.subr.bf16.mxu0 0
        %2752 = vmatpush1.bf16.msra.mxu0 0
        %2753 = vmatprep.subr.bf16.mxu0 0
        %2754 = vmatpush1.bf16.msra.mxu0 0
        %2755 = vmatprep.subr.bf16.mxu0 0
        %2756 = vmatpush1.bf16.msra.mxu0 0
        %2757 = vmatprep.subr.bf16.mxu0 0
        %2758 = vmatpush1.bf16.msra.mxu0 0
        %2759 = vmatprep.subr.bf16.mxu0 0
        %2760 = vmatpush1.bf16.msra.mxu0 0
        %2761 = vmatprep.subr.bf16.mxu0 0
        %2762 = vmatpush1.bf16.msra.mxu0 0
        %2763 = vmatprep.subr.bf16.mxu0 0
        %2764 = vmatpush1.bf16.msra.mxu0 0
        %2765 = vmatprep.mubr.bf16.mxu0 0
        %2766 = vmatmul.mubr.bf16.gmra.mrb[0].mxu0 %v2688
        %v2767 = vpop.f32.mrb[0].mxu0
        %v2768 = vadd.f32 0.0, %v2767
        %v2769 = vpop.f32.mrb[0].mxu0
        %v2770 = vadd.f32 0.0, %v2769
        %v2771 = vpop.f32.mrb[0].mxu0
        %v2772 = vadd.f32 0.0, %v2771
        %v2773 = vpop.f32.mrb[0].mxu0
        %v2774 = vadd.f32 0.0, %v2773
        %2775 = vdwg.mxu0
        %2776 = vmatprep.subr.bf16.mxu0 %v2666
        %2777 = vmatpush1.bf16.msra.mxu0 %v2665
        %2778 = vmatprep.subr.bf16.mxu0 0
        %2779 = vmatpush1.bf16.msra.mxu0 0
        %2780 = vmatprep.subr.bf16.mxu0 0
        %2781 = vmatpush1.bf16.msra.mxu0 0
        %2782 = vmatprep.subr.bf16.mxu0 0
        %2783 = vmatpush1.bf16.msra.mxu0 0
        %2784 = vmatprep.subr.bf16.mxu0 0
        %2785 = vmatpush1.bf16.msra.mxu0 0
        %2786 = vmatprep.subr.bf16.mxu0 0
        %2787 = vmatpush1.bf16.msra.mxu0 0
        %2788 = vmatprep.subr.bf16.mxu0 0
        %2789 = vmatpush1.bf16.msra.mxu0 0
        %2790 = vmatprep.subr.bf16.mxu0 0
        %2791 = vmatpush1.bf16.msra.mxu0 0
        %2792 = vmatprep.subr.bf16.mxu0 0
        %2793 = vmatpush1.bf16.msra.mxu0 0
        %2794 = vmatprep.subr.bf16.mxu0 0
        %2795 = vmatpush1.bf16.msra.mxu0 0
        %2796 = vmatprep.subr.bf16.mxu0 0
        %2797 = vmatpush1.bf16.msra.mxu0 0
        %2798 = vmatprep.subr.bf16.mxu0 0
        %2799 = vmatpush1.bf16.msra.mxu0 0
        %2800 = vmatprep.subr.bf16.mxu0 0
        %2801 = vmatpush1.bf16.msra.mxu0 0
        %2802 = vmatprep.subr.bf16.mxu0 0
        %2803 = vmatpush1.bf16.msra.mxu0 0
        %2804 = vmatprep.subr.bf16.mxu0 0
        %2805 = vmatpush1.bf16.msra.mxu0 0
        %2806 = vmatprep.subr.bf16.mxu0 0
        %2807 = vmatpush1.bf16.msra.mxu0 0
        %2808 = vmatprep.mubr.bf16.mxu0 0
        %2809 = vmatmul.mubr.bf16.gmra.mrb[0].mxu0 %v2688
        %v2810 = vpop.f32.mrb[0].mxu0
        %v2811 = vadd.f32 0.0, %v2810
        %v2812 = vpop.f32.mrb[0].mxu0
        %v2813 = vadd.f32 0.0, %v2812
        %v2814 = vpop.f32.mrb[0].mxu0
        %v2815 = vadd.f32 0.0, %v2814
        %v2816 = vpop.f32.mrb[0].mxu0
        %v2817 = vadd.f32 0.0, %v2816
        %2818 = vdwg.mxu0
        %2819 = vmatprep.subr.bf16.mxu0 %v2668
        %2820 = vmatpush1.bf16.msra.mxu0 %v2667
        %2821 = vmatprep.subr.bf16.mxu0 0
        %2822 = vmatpush1.bf16.msra.mxu0 0
        %2823 = vmatprep.subr.bf16.mxu0 0
        %2824 = vmatpush1.bf16.msra.mxu0 0
        %2825 = vmatprep.subr.bf16.mxu0 0
        %2826 = vmatpush1.bf16.msra.mxu0 0
        %2827 = vmatprep.subr.bf16.mxu0 0
        %2828 = vmatpush1.bf16.msra.mxu0 0
        %2829 = vmatprep.subr.bf16.mxu0 0
        %2830 = vmatpush1.bf16.msra.mxu0 0
        %2831 = vmatprep.subr.bf16.mxu0 0
        %2832 = vmatpush1.bf16.msra.mxu0 0
        %2833 = vmatprep.subr.bf16.mxu0 0
        %2834 = vmatpush1.bf16.msra.mxu0 0
        %2835 = vmatprep.subr.bf16.mxu0 0
        %2836 = vmatpush1.bf16.msra.mxu0 0
        %2837 = vmatprep.subr.bf16.mxu0 0
        %2838 = vmatpush1.bf16.msra.mxu0 0
        %2839 = vmatprep.subr.bf16.mxu0 0
        %2840 = vmatpush1.bf16.msra.mxu0 0
        %2841 = vmatprep.subr.bf16.mxu0 0
        %2842 = vmatpush1.bf16.msra.mxu0 0
        %2843 = vmatprep.subr.bf16.mxu0 0
        %2844 = vmatpush1.bf16.msra.mxu0 0
        %2845 = vmatprep.subr.bf16.mxu0 0
        %2846 = vmatpush1.bf16.msra.mxu0 0
        %2847 = vmatprep.subr.bf16.mxu0 0
        %2848 = vmatpush1.bf16.msra.mxu0 0
        %2849 = vmatprep.subr.bf16.mxu0 0
        %2850 = vmatpush1.bf16.msra.mxu0 0
        %2851 = vmatprep.mubr.bf16.mxu0 0
        %2852 = vmatmul.mubr.bf16.gmra.mrb[0].mxu0 %v2688
        %v2853 = vpop.f32.mrb[0].mxu0
        %v2854 = vadd.f32 0.0, %v2853
        %v2855 = vpop.f32.mrb[0].mxu0
        %v2856 = vadd.f32 0.0, %v2855
        %v2857 = vpop.f32.mrb[0].mxu0
        %v2858 = vadd.f32 0.0, %v2857
        %v2859 = vpop.f32.mrb[0].mxu0
        %v2860 = vadd.f32 0.0, %v2859
        %2861 = vdwg.mxu0
        %2862 = vmatprep.subr.bf16.mxu0 %v2670
        %2863 = vmatpush1.bf16.msra.mxu0 %v2669
        %2864 = vmatprep.subr.bf16.mxu0 0
        %2865 = vmatpush1.bf16.msra.mxu0 0
        %2866 = vmatprep.subr.bf16.mxu0 0
        %2867 = vmatpush1.bf16.msra.mxu0 0
        %2868 = vmatprep.subr.bf16.mxu0 0
        %2869 = vmatpush1.bf16.msra.mxu0 0
        %2870 = vmatprep.subr.bf16.mxu0 0
        %2871 = vmatpush1.bf16.msra.mxu0 0
        %2872 = vmatprep.subr.bf16.mxu0 0
        %2873 = vmatpush1.bf16.msra.mxu0 0
        %2874 = vmatprep.subr.bf16.mxu0 0
        %2875 = vmatpush1.bf16.msra.mxu0 0
        %2876 = vmatprep.subr.bf16.mxu0 0
        %2877 = vmatpush1.bf16.msra.mxu0 0
        %2878 = vmatprep.subr.bf16.mxu0 0
        %2879 = vmatpush1.bf16.msra.mxu0 0
        %2880 = vmatprep.subr.bf16.mxu0 0
        %2881 = vmatpush1.bf16.msra.mxu0 0
        %2882 = vmatprep.subr.bf16.mxu0 0
        %2883 = vmatpush1.bf16.msra.mxu0 0
        %2884 = vmatprep.subr.bf16.mxu0 0
        %2885 = vmatpush1.bf16.msra.mxu0 0
        %2886 = vmatprep.subr.bf16.mxu0 0
        %2887 = vmatpush1.bf16.msra.mxu0 0
        %2888 = vmatprep.subr.bf16.mxu0 0
        %2889 = vmatpush1.bf16.msra.mxu0 0
        %2890 = vmatprep.subr.bf16.mxu0 0
        %2891 = vmatpush1.bf16.msra.mxu0 0
        %2892 = vmatprep.subr.bf16.mxu0 0
        %2893 = vmatpush1.bf16.msra.mxu0 0
        %2894 = vmatprep.mubr.bf16.mxu0 0
        %2895 = vmatmul.mubr.bf16.gmra.mrb[0].mxu0 %v2688
        %v2896 = vpop.f32.mrb[0].mxu0
        %v2897 = vadd.f32 0.0, %v2896
        %v2898 = vpop.f32.mrb[0].mxu0
        %v2899 = vadd.f32 0.0, %v2898
        %v2900 = vpop.f32.mrb[0].mxu0
        %v2901 = vadd.f32 0.0, %v2900
        %v2902 = vpop.f32.mrb[0].mxu0
        %v2903 = vadd.f32 0.0, %v2902
        %2904 = vdwg.mxu0
        %2905 = vmatprep.subr.bf16.mxu0 %v2672
        %2906 = vmatpush1.bf16.msra.mxu0 %v2671
        %2907 = vmatprep.subr.bf16.mxu0 0
        %2908 = vmatpush1.bf16.msra.mxu0 0
        %2909 = vmatprep.subr.bf16.mxu0 0
        %2910 = vmatpush1.bf16.msra.mxu0 0
        %2911 = vmatprep.subr.bf16.mxu0 0
        %2912 = vmatpush1.bf16.msra.mxu0 0
        %2913 = vmatprep.subr.bf16.mxu0 0
        %2914 = vmatpush1.bf16.msra.mxu0 0
        %2915 = vmatprep.subr.bf16.mxu0 0
        %2916 = vmatpush1.bf16.msra.mxu0 0
        %2917 = vmatprep.subr.bf16.mxu0 0
        %2918 = vmatpush1.bf16.msra.mxu0 0
        %2919 = vmatprep.subr.bf16.mxu0 0
        %2920 = vmatpush1.bf16.msra.mxu0 0
        %2921 = vmatprep.subr.bf16.mxu0 0
        %2922 = vmatpush1.bf16.msra.mxu0 0
        %2923 = vmatprep.subr.bf16.mxu0 0
        %2924 = vmatpush1.bf16.msra.mxu0 0
        %2925 = vmatprep.subr.bf16.mxu0 0
        %2926 = vmatpush1.bf16.msra.mxu0 0
        %2927 = vmatprep.subr.bf16.mxu0 0
        %2928 = vmatpush1.bf16.msra.mxu0 0
        %2929 = vmatprep.subr.bf16.mxu0 0
        %2930 = vmatpush1.bf16.msra.mxu0 0
        %2931 = vmatprep.subr.bf16.mxu0 0
        %2932 = vmatpush1.bf16.msra.mxu0 0
        %2933 = vmatprep.subr.bf16.mxu0 0
        %2934 = vmatpush1.bf16.msra.mxu0 0
        %2935 = vmatprep.subr.bf16.mxu0 0
        %2936 = vmatpush1.bf16.msra.mxu0 0
        %2937 = vmatprep.mubr.bf16.mxu0 0
        %2938 = vmatmul.mubr.bf16.gmra.mrb[0].mxu0 %v2688
        %v2939 = vpop.f32.mrb[0].mxu0
        %v2940 = vadd.f32 0.0, %v2939
        %v2941 = vpop.f32.mrb[0].mxu0
        %v2942 = vadd.f32 0.0, %v2941
        %v2943 = vpop.f32.mrb[0].mxu0
        %v2944 = vadd.f32 0.0, %v2943
        %v2945 = vpop.f32.mrb[0].mxu0
        %v2946 = vadd.f32 0.0, %v2945
        %2947 = vdwg.mxu0
        %2948 = vmatprep.subr.bf16.mxu0 %v2674
        %2949 = vmatpush1.bf16.msra.mxu0 %v2673
        %2950 = vmatprep.subr.bf16.mxu0 0
        %2951 = vmatpush1.bf16.msra.mxu0 0
        %2952 = vmatprep.subr.bf16.mxu0 0
        %2953 = vmatpush1.bf16.msra.mxu0 0
        %2954 = vmatprep.subr.bf16.mxu0 0
        %2955 = vmatpush1.bf16.msra.mxu0 0
        %2956 = vmatprep.subr.bf16.mxu0 0
        %2957 = vmatpush1.bf16.msra.mxu0 0
        %2958 = vmatprep.subr.bf16.mxu0 0
        %2959 = vmatpush1.bf16.msra.mxu0 0
        %2960 = vmatprep.subr.bf16.mxu0 0
        %2961 = vmatpush1.bf16.msra.mxu0 0
        %2962 = vmatprep.subr.bf16.mxu0 0
        %2963 = vmatpush1.bf16.msra.mxu0 0
        %2964 = vmatprep.subr.bf16.mxu0 0
        %2965 = vmatpush1.bf16.msra.mxu0 0
        %2966 = vmatprep.subr.bf16.mxu0 0
        %2967 = vmatpush1.bf16.msra.mxu0 0
        %2968 = vmatprep.subr.bf16.mxu0 0
        %2969 = vmatpush1.bf16.msra.mxu0 0
        %2970 = vmatprep.subr.bf16.mxu0 0
        %2971 = vmatpush1.bf16.msra.mxu0 0
        %2972 = vmatprep.subr.bf16.mxu0 0
        %2973 = vmatpush1.bf16.msra.mxu0 0
        %2974 = vmatprep.subr.bf16.mxu0 0
        %2975 = vmatpush1.bf16.msra.mxu0 0
        %2976 = vmatprep.subr.bf16.mxu0 0
        %2977 = vmatpush1.bf16.msra.mxu0 0
        %2978 = vmatprep.subr.bf16.mxu0 0
        %2979 = vmatpush1.bf16.msra.mxu0 0
        %2980 = vmatprep.mubr.bf16.mxu0 0
        %2981 = vmatmul.mubr.bf16.gmra.mrb[0].mxu0 %v2688
        %v2982 = vpop.f32.mrb[0].mxu0
        %v2983 = vadd.f32 0.0, %v2982
        %v2984 = vpop.f32.mrb[0].mxu0
        %v2985 = vadd.f32 0.0, %v2984
        %v2986 = vpop.f32.mrb[0].mxu0
        %v2987 = vadd.f32 0.0, %v2986
        %v2988 = vpop.f32.mrb[0].mxu0
        %v2989 = vadd.f32 0.0, %v2988
        %2990 = vdwg.mxu0
        %2991 = vmatprep.subr.bf16.mxu0 %v2676
        %2992 = vmatpush1.bf16.msra.mxu0 %v2675
        %2993 = vmatprep.subr.bf16.mxu0 0
        %2994 = vmatpush1.bf16.msra.mxu0 0
        %2995 = vmatprep.subr.bf16.mxu0 0
        %2996 = vmatpush1.bf16.msra.mxu0 0
        %2997 = vmatprep.subr.bf16.mxu0 0
        %2998 = vmatpush1.bf16.msra.mxu0 0
        %2999 = vmatprep.subr.bf16.mxu0 0
        %3000 = vmatpush1.bf16.msra.mxu0 0
        %3001 = vmatprep.subr.bf16.mxu0 0
        %3002 = vmatpush1.bf16.msra.mxu0 0
        %3003 = vmatprep.subr.bf16.mxu0 0
        %3004 = vmatpush1.bf16.msra.mxu0 0
        %3005 = vmatprep.subr.bf16.mxu0 0
        %3006 = vmatpush1.bf16.msra.mxu0 0
        %3007 = vmatprep.subr.bf16.mxu0 0
        %3008 = vmatpush1.bf16.msra.mxu0 0
        %3009 = vmatprep.subr.bf16.mxu0 0
        %3010 = vmatpush1.bf16.msra.mxu0 0
        %3011 = vmatprep.subr.bf16.mxu0 0
        %3012 = vmatpush1.bf16.msra.mxu0 0
        %3013 = vmatprep.subr.bf16.mxu0 0
        %3014 = vmatpush1.bf16.msra.mxu0 0
        %3015 = vmatprep.subr.bf16.mxu0 0
        %3016 = vmatpush1.bf16.msra.mxu0 0
        %3017 = vmatprep.subr.bf16.mxu0 0
        %3018 = vmatpush1.bf16.msra.mxu0 0
        %3019 = vmatprep.subr.bf16.mxu0 0
        %3020 = vmatpush1.bf16.msra.mxu0 0
        %3021 = vmatprep.subr.bf16.mxu0 0
        %3022 = vmatpush1.bf16.msra.mxu0 0
        %3023 = vmatprep.mubr.bf16.mxu0 0
        %3024 = vmatmul.mubr.bf16.gmra.mrb[0].mxu0 %v2688
        %v3025 = vpop.f32.mrb[0].mxu0
        %v3026 = vadd.f32 0.0, %v3025
        %v3027 = vpop.f32.mrb[0].mxu0
        %v3028 = vadd.f32 0.0, %v3027
        %v3029 = vpop.f32.mrb[0].mxu0
        %v3030 = vadd.f32 0.0, %v3029
        %v3031 = vpop.f32.mrb[0].mxu0
        %v3032 = vadd.f32 0.0, %v3031
        %3033 = vdwg.mxu0
        %s3034 = smul.u32 %s42, 16
        %s3035 = scalar_lea.vmem %s10, %s3034
        %v3036 = vld [vmem:[%s3035] sm:$0xff]
        %v3037 = vld [vmem:[%s3035 + $0x8] sm:$0xff]
        %v3038 = vadd.f32 %v2725, %v3036
        %v3039 = vadd.f32 %v2729, %v3037
        %v3040 = vadd.f32 %v2727, %v3036
        %v3041 = vadd.f32 %v2731, %v3037
        %v3042 = vadd.f32 %v2768, %v3036
        %v3043 = vadd.f32 %v2772, %v3037
        %v3044 = vadd.f32 %v2770, %v3036
        %v3045 = vadd.f32 %v2774, %v3037
        %v3046 = vadd.f32 %v2811, %v3036
        %v3047 = vadd.f32 %v2815, %v3037
        %v3048 = vadd.f32 %v2813, %v3036
        %v3049 = vadd.f32 %v2817, %v3037
        %v3050 = vadd.f32 %v2854, %v3036
        %v3051 = vadd.f32 %v2858, %v3037
        %v3052 = vadd.f32 %v2856, %v3036
        %v3053 = vadd.f32 %v2860, %v3037
        %v3054 = vadd.f32 %v2897, %v3036
        %v3055 = vadd.f32 %v2901, %v3037
        %v3056 = vadd.f32 %v2899, %v3036
        %v3057 = vadd.f32 %v2903, %v3037
        %v3058 = vadd.f32 %v2940, %v3036
        %v3059 = vadd.f32 %v2944, %v3037
        %v3060 = vadd.f32 %v2942, %v3036
        %v3061 = vadd.f32 %v2946, %v3037
        %v3062 = vadd.f32 %v2983, %v3036
        %v3063 = vadd.f32 %v2987, %v3037
        %v3064 = vadd.f32 %v2985, %v3036
        %v3065 = vadd.f32 %v2989, %v3037
        %v3066 = vadd.f32 %v3026, %v3036
        %v3067 = vadd.f32 %v3030, %v3037
        %v3068 = vadd.f32 %v3028, %v3036
        %v3069 = vadd.f32 %v3032, %v3037
        %v3070 = vmul.f32 %v2132, %v3038
        %v3071 = vmul.f32 %v2134, %v3039
        %v3072 = vmul.f32 %v2136, %v3040
        %v3073 = vmul.f32 %v2138, %v3041
        %v3074 = vmul.f32 %v2140, %v3042
        %v3075 = vmul.f32 %v2142, %v3043
        %v3076 = vmul.f32 %v2144, %v3044
        %v3077 = vmul.f32 %v2146, %v3045
        %v3078 = vmul.f32 %v2148, %v3046
        %v3079 = vmul.f32 %v2150, %v3047
        %v3080 = vmul.f32 %v2152, %v3048
        %v3081 = vmul.f32 %v2154, %v3049
        %v3082 = vmul.f32 %v2156, %v3050
        %v3083 = vmul.f32 %v2158, %v3051
        %v3084 = vmul.f32 %v2160, %v3052
        %v3085 = vmul.f32 %v2162, %v3053
        %v3086 = vmul.f32 %v2164, %v3054
        %v3087 = vmul.f32 %v2166, %v3055
        %v3088 = vmul.f32 %v2168, %v3056
        %v3089 = vmul.f32 %v2170, %v3057
        %v3090 = vmul.f32 %v2172, %v3058
        %v3091 = vmul.f32 %v2174, %v3059
        %v3092 = vmul.f32 %v2176, %v3060
        %v3093 = vmul.f32 %v2178, %v3061
        %v3094 = vmul.f32 %v2180, %v3062
        %v3095 = vmul.f32 %v2182, %v3063
        %v3096 = vmul.f32 %v2184, %v3064
        %v3097 = vmul.f32 %v2186, %v3065
        %v3098 = vmul.f32 %v2188, %v3066
        %v3099 = vmul.f32 %v2190, %v3067
        %v3100 = vmul.f32 %v2192, %v3068
        %v3101 = vmul.f32 %v2194, %v3069
        %v3102 = vpack.c.bf16 %v3071, %v3070
        %v3103 = vpack.c.bf16 %v3073, %v3072
        %v3104 = vpack.c.bf16 %v3075, %v3074
        %v3105 = vpack.c.bf16 %v3077, %v3076
        %v3106 = vpack.c.bf16 %v3079, %v3078
        %v3107 = vpack.c.bf16 %v3081, %v3080
        %v3108 = vpack.c.bf16 %v3083, %v3082
        %v3109 = vpack.c.bf16 %v3085, %v3084
        %v3110 = vpack.c.bf16 %v3087, %v3086
        %v3111 = vpack.c.bf16 %v3089, %v3088
        %v3112 = vpack.c.bf16 %v3091, %v3090
        %v3113 = vpack.c.bf16 %v3093, %v3092
        %v3114 = vpack.c.bf16 %v3095, %v3094
        %v3115 = vpack.c.bf16 %v3097, %v3096
        %v3116 = vpack.c.bf16 %v3099, %v3098
        %v3117 = vpack.c.bf16 %v3101, %v3100
        %s3118 = smul.addr %s3034, 4
        %s3119 = scalar_lea.vmem [#allocation17], %s3118
        %v3120 = vld [vmem:[%s3119] sm:$0xf]
        %v3121 = vld [vmem:[%s3119 + $0x4] sm:$0xf]
        %v3122 = vld [vmem:[%s3119 + $0x8] sm:$0xf]
        %v3123 = vld [vmem:[%s3119 + $0xc] sm:$0xf]
        %v3124 = vld [vmem:[%s3119 + $0x10] sm:$0xf]
        %v3125 = vld [vmem:[%s3119 + $0x14] sm:$0xf]
        %v3126 = vld [vmem:[%s3119 + $0x18] sm:$0xf]
        %v3127 = vld [vmem:[%s3119 + $0x1c] sm:$0xf]
        %v3128 = vld [vmem:[%s3119 + $0x20] sm:$0xf]
        %v3129 = vld [vmem:[%s3119 + $0x24] sm:$0xf]
        %v3130 = vld [vmem:[%s3119 + $0x28] sm:$0xf]
        %v3131 = vld [vmem:[%s3119 + $0x2c] sm:$0xf]
        %v3132 = vld [vmem:[%s3119 + $0x30] sm:$0xf]
        %v3133 = vld [vmem:[%s3119 + $0x34] sm:$0xf]
        %v3134 = vld [vmem:[%s3119 + $0x38] sm:$0xf]
        %v3135 = vld [vmem:[%s3119 + $0x3c] sm:$0xf]
        %s3136 = scalar_lea.vmem %s12, %s42
        %v3137 = vld [vmem:[%s3136] sm:$0x1]
        %v3139 = vlaneseq
        %v3140 = vshrl.u32 %v3139, 7
        %v3141 = vsub.s32 0, %v3140
        %v3142 = vrot.slane %v3137, %v3141
        %v3160 = vunpack.c.l.b16 %v3120
        %v3161 = vunpack.c.l.b16 %v3121
        %v3162 = vunpack.c.l.b16 %v3122
        %v3163 = vunpack.c.l.b16 %v3123
        %v3164 = vunpack.c.l.b16 %v3124
        %v3165 = vunpack.c.l.b16 %v3125
        %v3166 = vunpack.c.l.b16 %v3126
        %v3167 = vunpack.c.l.b16 %v3127
        %v3168 = vunpack.c.l.b16 %v3128
        %v3169 = vunpack.c.l.b16 %v3129
        %v3170 = vunpack.c.l.b16 %v3130
        %v3171 = vunpack.c.l.b16 %v3131
        %v3172 = vunpack.c.l.b16 %v3132
        %v3173 = vunpack.c.l.b16 %v3133
        %v3174 = vunpack.c.l.b16 %v3134
        %v3175 = vunpack.c.l.b16 %v3135
        %v3176 = vpack.c.b16 %v3161, %v3160
        %v3177 = vpack.c.b16 %v3163, %v3162
        %v3178 = vpack.c.b16 %v3165, %v3164
        %v3179 = vpack.c.b16 %v3167, %v3166
        %v3180 = vpack.c.b16 %v3169, %v3168
        %v3181 = vpack.c.b16 %v3171, %v3170
        %v3182 = vpack.c.b16 %v3173, %v3172
        %v3183 = vpack.c.b16 %v3175, %v3174
        %3192 = vmatprep.subr.bf16.mxu0 0
        %3193 = vmatpush1.bf16.msra.mxu0 %v3176
        %3194 = vmatprep.subr.bf16.mxu0 0
        %3195 = vmatpush1.bf16.msra.mxu0 %v3177
        %3196 = vmatprep.subr.bf16.mxu0 0
        %3197 = vmatpush1.bf16.msra.mxu0 %v3178
        %3198 = vmatprep.subr.bf16.mxu0 0
        %3199 = vmatpush1.bf16.msra.mxu0 %v3179
        %3200 = vmatprep.subr.bf16.mxu0 0
        %3201 = vmatpush1.bf16.msra.mxu0 %v3180
        %3202 = vmatprep.subr.bf16.mxu0 0
        %3203 = vmatpush1.bf16.msra.mxu0 %v3181
        %3204 = vmatprep.subr.bf16.mxu0 0
        %3205 = vmatpush1.bf16.msra.mxu0 %v3182
        %3206 = vmatprep.subr.bf16.mxu0 0
        %3207 = vmatpush1.bf16.msra.mxu0 %v3183
        %3208 = vmatprep.subr.bf16.mxu0 0
        %3209 = vmatpush1.bf16.msra.mxu0 0
        %3210 = vmatprep.subr.bf16.mxu0 0
        %3211 = vmatpush1.bf16.msra.mxu0 0
        %3212 = vmatprep.subr.bf16.mxu0 0
        %3213 = vmatpush1.bf16.msra.mxu0 0
        %3214 = vmatprep.subr.bf16.mxu0 0
        %3215 = vmatpush1.bf16.msra.mxu0 0
        %3216 = vmatprep.subr.bf16.mxu0 0
        %3217 = vmatpush1.bf16.msra.mxu0 0
        %3218 = vmatprep.subr.bf16.mxu0 0
        %3219 = vmatpush1.bf16.msra.mxu0 0
        %3220 = vmatprep.subr.bf16.mxu0 0
        %3221 = vmatpush1.bf16.msra.mxu0 0
        %3222 = vmatprep.subr.bf16.mxu0 0
        %3223 = vmatpush1.bf16.msra.mxu0 0
        %3224 = vmatprep.mubr.bf16.mxu0 0
        %3225 = vmatmul.mubr.bf16.gmra.mrb[0].mxu0 %v3102
        %v3226 = vpop.f32.mrb[0].mxu0
        %v3227 = vadd.f32 %v3142, %v3226
        %v3228 = vpop.f32.mrb[0].mxu0
        %v3229 = vpop.f32.mrb[0].mxu0
        %v3230 = vadd.f32 %v3142, %v3229
        %v3231 = vpop.f32.mrb[0].mxu0
        %3232 = vmatprep.mubr.bf16.mxu0 0
        %3233 = vmatmul.mubr.bf16.gmra.mrb[0].mxu0 %v3103
        %v3234 = vpop.f32.mrb[0].mxu0
        %v3235 = vadd.f32 %v3142, %v3234
        %v3236 = vpop.f32.mrb[0].mxu0
        %v3237 = vpop.f32.mrb[0].mxu0
        %v3238 = vadd.f32 %v3142, %v3237
        %v3239 = vpop.f32.mrb[0].mxu0
        %3240 = vmatprep.mubr.bf16.mxu0 0
        %3241 = vmatmul.mubr.bf16.gmra.mrb[0].mxu0 %v3104
        %v3242 = vpop.f32.mrb[0].mxu0
        %v3243 = vadd.f32 %v3142, %v3242
        %v3244 = vpop.f32.mrb[0].mxu0
        %v3245 = vpop.f32.mrb[0].mxu0
        %v3246 = vadd.f32 %v3142, %v3245
        %v3247 = vpop.f32.mrb[0].mxu0
        %3248 = vmatprep.mubr.bf16.mxu0 0
        %3249 = vmatmul.mubr.bf16.gmra.mrb[0].mxu0 %v3105
        %v3250 = vpop.f32.mrb[0].mxu0
        %v3251 = vadd.f32 %v3142, %v3250
        %v3252 = vpop.f32.mrb[0].mxu0
        %v3253 = vpop.f32.mrb[0].mxu0
        %v3254 = vadd.f32 %v3142, %v3253
        %v3255 = vpop.f32.mrb[0].mxu0
        %3256 = vmatprep.mubr.bf16.mxu0 0
        %3257 = vmatmul.mubr.bf16.gmra.mrb[0].mxu0 %v3106
        %v3258 = vpop.f32.mrb[0].mxu0
        %v3259 = vadd.f32 %v3142, %v3258
        %v3260 = vpop.f32.mrb[0].mxu0
        %v3261 = vpop.f32.mrb[0].mxu0
        %v3262 = vadd.f32 %v3142, %v3261
        %v3263 = vpop.f32.mrb[0].mxu0
        %3264 = vmatprep.mubr.bf16.mxu0 0
        %3265 = vmatmul.mubr.bf16.gmra.mrb[0].mxu0 %v3107
        %v3266 = vpop.f32.mrb[0].mxu0
        %v3267 = vadd.f32 %v3142, %v3266
        %v3268 = vpop.f32.mrb[0].mxu0
        %v3269 = vpop.f32.mrb[0].mxu0
        %v3270 = vadd.f32 %v3142, %v3269
        %v3271 = vpop.f32.mrb[0].mxu0
        %3272 = vmatprep.mubr.bf16.mxu0 0
        %3273 = vmatmul.mubr.bf16.gmra.mrb[0].mxu0 %v3108
        %v3274 = vpop.f32.mrb[0].mxu0
        %v3275 = vadd.f32 %v3142, %v3274
        %v3276 = vpop.f32.mrb[0].mxu0
        %v3277 = vpop.f32.mrb[0].mxu0
        %v3278 = vadd.f32 %v3142, %v3277
        %v3279 = vpop.f32.mrb[0].mxu0
        %3280 = vmatprep.mubr.bf16.mxu0 0
        %3281 = vmatmul.mubr.bf16.gmra.mrb[0].mxu0 %v3109
        %v3282 = vpop.f32.mrb[0].mxu0
        %v3283 = vadd.f32 %v3142, %v3282
        %v3284 = vpop.f32.mrb[0].mxu0
        %v3285 = vpop.f32.mrb[0].mxu0
        %v3286 = vadd.f32 %v3142, %v3285
        %v3287 = vpop.f32.mrb[0].mxu0
        %3288 = vmatprep.mubr.bf16.mxu0 0
        %3289 = vmatmul.mubr.bf16.gmra.mrb[0].mxu0 %v3110
        %v3290 = vpop.f32.mrb[0].mxu0
        %v3291 = vadd.f32 %v3142, %v3290
        %v3292 = vpop.f32.mrb[0].mxu0
        %v3293 = vpop.f32.mrb[0].mxu0
        %v3294 = vadd.f32 %v3142, %v3293
        %v3295 = vpop.f32.mrb[0].mxu0
        %3296 = vmatprep.mubr.bf16.mxu0 0
        %3297 = vmatmul.mubr.bf16.gmra.mrb[0].mxu0 %v3111
        %v3298 = vpop.f32.mrb[0].mxu0
        %v3299 = vadd.f32 %v3142, %v3298
        %v3300 = vpop.f32.mrb[0].mxu0
        %v3301 = vpop.f32.mrb[0].mxu0
        %v3302 = vadd.f32 %v3142, %v3301
        %v3303 = vpop.f32.mrb[0].mxu0
        %3304 = vmatprep.mubr.bf16.mxu0 0
        %3305 = vmatmul.mubr.bf16.gmra.mrb[0].mxu0 %v3112
        %v3306 = vpop.f32.mrb[0].mxu0
        %v3307 = vadd.f32 %v3142, %v3306
        %v3308 = vpop.f32.mrb[0].mxu0
        %v3309 = vpop.f32.mrb[0].mxu0
        %v3310 = vadd.f32 %v3142, %v3309
        %v3311 = vpop.f32.mrb[0].mxu0
        %3312 = vmatprep.mubr.bf16.mxu0 0
        %3313 = vmatmul.mubr.bf16.gmra.mrb[0].mxu0 %v3113
        %v3314 = vpop.f32.mrb[0].mxu0
        %v3315 = vadd.f32 %v3142, %v3314
        %v3316 = vpop.f32.mrb[0].mxu0
        %v3317 = vpop.f32.mrb[0].mxu0
        %v3318 = vadd.f32 %v3142, %v3317
        %v3319 = vpop.f32.mrb[0].mxu0
        %3320 = vmatprep.mubr.bf16.mxu0 0
        %3321 = vmatmul.mubr.bf16.gmra.mrb[0].mxu0 %v3114
        %v3322 = vpop.f32.mrb[0].mxu0
        %v3323 = vadd.f32 %v3142, %v3322
        %v3324 = vpop.f32.mrb[0].mxu0
        %v3325 = vpop.f32.mrb[0].mxu0
        %v3326 = vadd.f32 %v3142, %v3325
        %v3327 = vpop.f32.mrb[0].mxu0
        %3328 = vmatprep.mubr.bf16.mxu0 0
        %3329 = vmatmul.mubr.bf16.gmra.mrb[0].mxu0 %v3115
        %v3330 = vpop.f32.mrb[0].mxu0
        %v3331 = vadd.f32 %v3142, %v3330
        %v3332 = vpop.f32.mrb[0].mxu0
        %v3333 = vpop.f32.mrb[0].mxu0
        %v3334 = vadd.f32 %v3142, %v3333
        %v3335 = vpop.f32.mrb[0].mxu0
        %3336 = vmatprep.mubr.bf16.mxu0 0
        %3337 = vmatmul.mubr.bf16.gmra.mrb[0].mxu0 %v3116
        %v3338 = vpop.f32.mrb[0].mxu0
        %v3339 = vadd.f32 %v3142, %v3338
        %v3340 = vpop.f32.mrb[0].mxu0
        %v3341 = vpop.f32.mrb[0].mxu0
        %v3342 = vadd.f32 %v3142, %v3341
        %v3343 = vpop.f32.mrb[0].mxu0
        %3344 = vmatprep.mubr.bf16.mxu0 0
        %3345 = vmatmul.mubr.bf16.gmra.mrb[0].mxu0 %v3117
        %v3346 = vpop.f32.mrb[0].mxu0
        %v3347 = vadd.f32 %v3142, %v3346
        %v3348 = vpop.f32.mrb[0].mxu0
        %v3349 = vpop.f32.mrb[0].mxu0
        %v3350 = vadd.f32 %v3142, %v3349
        %v3351 = vpop.f32.mrb[0].mxu0
        %3352 = vdwg.mxu0
        %v3353 = vadd.f32 %v3227, %v1055
        %v3354 = vadd.f32 %v3230, %v1056
        %v3355 = vadd.f32 %v3235, %v1057
        %v3356 = vadd.f32 %v3238, %v1058
        %v3357 = vadd.f32 %v3243, %v1059
        %v3358 = vadd.f32 %v3246, %v1060
        %v3359 = vadd.f32 %v3251, %v1061
        %v3360 = vadd.f32 %v3254, %v1062
        %v3361 = vadd.f32 %v3259, %v1063
        %v3362 = vadd.f32 %v3262, %v1064
        %v3363 = vadd.f32 %v3267, %v1065
        %v3364 = vadd.f32 %v3270, %v1066
        %v3365 = vadd.f32 %v3275, %v1067
        %v3366 = vadd.f32 %v3278, %v1068
        %v3367 = vadd.f32 %v3283, %v1069
        %v3368 = vadd.f32 %v3286, %v1070
        %v3369 = vadd.f32 %v3291, %v1071
        %v3370 = vadd.f32 %v3294, %v1072
        %v3371 = vadd.f32 %v3299, %v1073
        %v3372 = vadd.f32 %v3302, %v1074
        %v3373 = vadd.f32 %v3307, %v1075
        %v3374 = vadd.f32 %v3310, %v1076
        %v3375 = vadd.f32 %v3315, %v1077
        %v3376 = vadd.f32 %v3318, %v1078
        %v3377 = vadd.f32 %v3323, %v1079
        %v3378 = vadd.f32 %v3326, %v1080
        %v3379 = vadd.f32 %v3331, %v1081
        %v3380 = vadd.f32 %v3334, %v1082
        %v3381 = vadd.f32 %v3339, %v1083
        %v3382 = vadd.f32 %v3342, %v1084
        %v3383 = vadd.f32 %v3347, %v1085
        %v3384 = vadd.f32 %v3350, %v1086
        %3385 = vst [vmem:[#allocation2] sm:$0xff] %v3353
        %3386 = vst [vmem:[#allocation2 + $0x8] sm:$0xff] %v3354
        %3387 = vst [vmem:[#allocation2 + $0x10] sm:$0xff] %v3355
        %3388 = vst [vmem:[#allocation2 + $0x18] sm:$0xff] %v3356
        %3389 = vst [vmem:[#allocation2 + $0x20] sm:$0xff] %v3357
        %3390 = vst [vmem:[#allocation2 + $0x28] sm:$0xff] %v3358
        %3391 = vst [vmem:[#allocation2 + $0x30] sm:$0xff] %v3359
        %3392 = vst [vmem:[#allocation2 + $0x38] sm:$0xff] %v3360
        %3393 = vst [vmem:[#allocation2 + $0x40] sm:$0xff] %v3361
        %3394 = vst [vmem:[#allocation2 + $0x48] sm:$0xff] %v3362
        %3395 = vst [vmem:[#allocation2 + $0x50] sm:$0xff] %v3363
        %3396 = vst [vmem:[#allocation2 + $0x58] sm:$0xff] %v3364
        %3397 = vst [vmem:[#allocation2 + $0x60] sm:$0xff] %v3365
        %3398 = vst [vmem:[#allocation2 + $0x68] sm:$0xff] %v3366
        %3399 = vst [vmem:[#allocation2 + $0x70] sm:$0xff] %v3367
        %3400 = vst [vmem:[#allocation2 + $0x78] sm:$0xff] %v3368
        %3401 = vst [vmem:[#allocation2 + $0x80] sm:$0xff] %v3369
        %3402 = vst [vmem:[#allocation2 + $0x88] sm:$0xff] %v3370
        %3403 = vst [vmem:[#allocation2 + $0x90] sm:$0xff] %v3371
        %3404 = vst [vmem:[#allocation2 + $0x98] sm:$0xff] %v3372
        %3405 = vst [vmem:[#allocation2 + $0xa0] sm:$0xff] %v3373
        %3406 = vst [vmem:[#allocation2 + $0xa8] sm:$0xff] %v3374
        %3407 = vst [vmem:[#allocation2 + $0xb0] sm:$0xff] %v3375
        %3408 = vst [vmem:[#allocation2 + $0xb8] sm:$0xff] %v3376
        %3409 = vst [vmem:[#allocation2 + $0xc0] sm:$0xff] %v3377
        %3410 = vst [vmem:[#allocation2 + $0xc8] sm:$0xff] %v3378
        %3411 = vst [vmem:[#allocation2 + $0xd0] sm:$0xff] %v3379
        %3412 = vst [vmem:[#allocation2 + $0xd8] sm:$0xff] %v3380
        %3413 = vst [vmem:[#allocation2 + $0xe0] sm:$0xff] %v3381
        %3414 = vst [vmem:[#allocation2 + $0xe8] sm:$0xff] %v3382
        %3415 = vst [vmem:[#allocation2 + $0xf0] sm:$0xff] %v3383
        %3416 = vst [vmem:[#allocation2 + $0xf8] sm:$0xff] %v3384
        %p3417 = scmp.eq.s32.totalorder %s42, 1
        // Predicated region
        $region125: #{tpu_custom_call.1} parent=79 // pred_check
          %p3418 = pneg %p3417
        $region126: #{tpu_custom_call.1} parent=79 // pred_check_branch
          %3420 = sbr.rel (%p3418) target = $region128
        $region127: #{tpu_custom_call.1} parent=79 // pred_region
          %v3421 = vld [vmem:[#allocation2] sm:$0xff]
          %v3422 = vld [vmem:[#allocation2 + $0x8] sm:$0xff]
          %v3423 = vld [vmem:[#allocation2 + $0x10] sm:$0xff]
          %v3424 = vld [vmem:[#allocation2 + $0x18] sm:$0xff]
          %v3425 = vld [vmem:[#allocation2 + $0x20] sm:$0xff]
          %v3426 = vld [vmem:[#allocation2 + $0x28] sm:$0xff]
          %v3427 = vld [vmem:[#allocation2 + $0x30] sm:$0xff]
          %v3428 = vld [vmem:[#allocation2 + $0x38] sm:$0xff]
          %v3429 = vld [vmem:[#allocation2 + $0x40] sm:$0xff]
          %v3430 = vld [vmem:[#allocation2 + $0x48] sm:$0xff]
          %v3431 = vld [vmem:[#allocation2 + $0x50] sm:$0xff]
          %v3432 = vld [vmem:[#allocation2 + $0x58] sm:$0xff]
          %v3433 = vld [vmem:[#allocation2 + $0x60] sm:$0xff]
          %v3434 = vld [vmem:[#allocation2 + $0x68] sm:$0xff]
          %v3435 = vld [vmem:[#allocation2 + $0x70] sm:$0xff]
          %v3436 = vld [vmem:[#allocation2 + $0x78] sm:$0xff]
          %v3437 = vld [vmem:[#allocation2 + $0x80] sm:$0xff]
          %v3438 = vld [vmem:[#allocation2 + $0x88] sm:$0xff]
          %v3439 = vld [vmem:[#allocation2 + $0x90] sm:$0xff]
          %v3440 = vld [vmem:[#allocation2 + $0x98] sm:$0xff]
          %v3441 = vld [vmem:[#allocation2 + $0xa0] sm:$0xff]
          %v3442 = vld [vmem:[#allocation2 + $0xa8] sm:$0xff]
          %v3443 = vld [vmem:[#allocation2 + $0xb0] sm:$0xff]
          %v3444 = vld [vmem:[#allocation2 + $0xb8] sm:$0xff]
          %v3445 = vld [vmem:[#allocation2 + $0xc0] sm:$0xff]
          %v3446 = vld [vmem:[#allocation2 + $0xc8] sm:$0xff]
          %v3447 = vld [vmem:[#allocation2 + $0xd0] sm:$0xff]
          %v3448 = vld [vmem:[#allocation2 + $0xd8] sm:$0xff]
          %v3449 = vld [vmem:[#allocation2 + $0xe0] sm:$0xff]
          %v3450 = vld [vmem:[#allocation2 + $0xe8] sm:$0xff]
          %v3451 = vld [vmem:[#allocation2 + $0xf0] sm:$0xff]
          %v3452 = vld [vmem:[#allocation2 + $0xf8] sm:$0xff]
          %v3453 = vadd.f32 %v3421, %v3422
          %v3454 = vrot.slane %v3453, 4
          %v3455 = vadd.f32 %v3453, %v3454
          %v3456 = vrot.slane %v3455, 2
          %v3457 = vadd.f32 %v3455, %v3456
          %v3458 = vrot.slane %v3457, 1
          %v3459 = vadd.f32 %v3457, %v3458
          %v3460 = vadd.f32 %v3423, %v3424
          %v3461 = vrot.slane %v3460, 4
          %v3462 = vadd.f32 %v3460, %v3461
          %v3463 = vrot.slane %v3462, 2
          %v3464 = vadd.f32 %v3462, %v3463
          %v3465 = vrot.slane %v3464, 1
          %v3466 = vadd.f32 %v3464, %v3465
          %v3467 = vadd.f32 %v3425, %v3426
          %v3468 = vrot.slane %v3467, 4
          %v3469 = vadd.f32 %v3467, %v3468
          %v3470 = vrot.slane %v3469, 2
          %v3471 = vadd.f32 %v3469, %v3470
          %v3472 = vrot.slane %v3471, 1
          %v3473 = vadd.f32 %v3471, %v3472
          %v3474 = vadd.f32 %v3427, %v3428
          %v3475 = vrot.slane %v3474, 4
          %v3476 = vadd.f32 %v3474, %v3475
          %v3477 = vrot.slane %v3476, 2
          %v3478 = vadd.f32 %v3476, %v3477
          %v3479 = vrot.slane %v3478, 1
          %v3480 = vadd.f32 %v3478, %v3479
          %v3481 = vadd.f32 %v3429, %v3430
          %v3482 = vrot.slane %v3481, 4
          %v3483 = vadd.f32 %v3481, %v3482
          %v3484 = vrot.slane %v3483, 2
          %v3485 = vadd.f32 %v3483, %v3484
          %v3486 = vrot.slane %v3485, 1
          %v3487 = vadd.f32 %v3485, %v3486
          %v3488 = vadd.f32 %v3431, %v3432
          %v3489 = vrot.slane %v3488, 4
          %v3490 = vadd.f32 %v3488, %v3489
          %v3491 = vrot.slane %v3490, 2
          %v3492 = vadd.f32 %v3490, %v3491
          %v3493 = vrot.slane %v3492, 1
          %v3494 = vadd.f32 %v3492, %v3493
          %v3495 = vadd.f32 %v3433, %v3434
          %v3496 = vrot.slane %v3495, 4
          %v3497 = vadd.f32 %v3495, %v3496
          %v3498 = vrot.slane %v3497, 2
          %v3499 = vadd.f32 %v3497, %v3498
          %v3500 = vrot.slane %v3499, 1
          %v3501 = vadd.f32 %v3499, %v3500
          %v3502 = vadd.f32 %v3435, %v3436
          %v3503 = vrot.slane %v3502, 4
          %v3504 = vadd.f32 %v3502, %v3503
          %v3505 = vrot.slane %v3504, 2
          %v3506 = vadd.f32 %v3504, %v3505
          %v3507 = vrot.slane %v3506, 1
          %v3508 = vadd.f32 %v3506, %v3507
          %v3509 = vadd.f32 %v3437, %v3438
          %v3510 = vrot.slane %v3509, 4
          %v3511 = vadd.f32 %v3509, %v3510
          %v3512 = vrot.slane %v3511, 2
          %v3513 = vadd.f32 %v3511, %v3512
          %v3514 = vrot.slane %v3513, 1
          %v3515 = vadd.f32 %v3513, %v3514
          %v3516 = vadd.f32 %v3439, %v3440
          %v3517 = vrot.slane %v3516, 4
          %v3518 = vadd.f32 %v3516, %v3517
          %v3519 = vrot.slane %v3518, 2
          %v3520 = vadd.f32 %v3518, %v3519
          %v3521 = vrot.slane %v3520, 1
          %v3522 = vadd.f32 %v3520, %v3521
          %v3523 = vadd.f32 %v3441, %v3442
          %v3524 = vrot.slane %v3523, 4
          %v3525 = vadd.f32 %v3523, %v3524
          %v3526 = vrot.slane %v3525, 2
          %v3527 = vadd.f32 %v3525, %v3526
          %v3528 = vrot.slane %v3527, 1
          %v3529 = vadd.f32 %v3527, %v3528
          %v3530 = vadd.f32 %v3443, %v3444
          %v3531 = vrot.slane %v3530, 4
          %v3532 = vadd.f32 %v3530, %v3531
          %v3533 = vrot.slane %v3532, 2
          %v3534 = vadd.f32 %v3532, %v3533
          %v3535 = vrot.slane %v3534, 1
          %v3536 = vadd.f32 %v3534, %v3535
          %v3537 = vadd.f32 %v3445, %v3446
          %v3538 = vrot.slane %v3537, 4
          %v3539 = vadd.f32 %v3537, %v3538
          %v3540 = vrot.slane %v3539, 2
          %v3541 = vadd.f32 %v3539, %v3540
          %v3542 = vrot.slane %v3541, 1
          %v3543 = vadd.f32 %v3541, %v3542
          %v3544 = vadd.f32 %v3447, %v3448
          %v3545 = vrot.slane %v3544, 4
          %v3546 = vadd.f32 %v3544, %v3545
          %v3547 = vrot.slane %v3546, 2
          %v3548 = vadd.f32 %v3546, %v3547
          %v3549 = vrot.slane %v3548, 1
          %v3550 = vadd.f32 %v3548, %v3549
          %v3551 = vadd.f32 %v3449, %v3450
          %v3552 = vrot.slane %v3551, 4
          %v3553 = vadd.f32 %v3551, %v3552
          %v3554 = vrot.slane %v3553, 2
          %v3555 = vadd.f32 %v3553, %v3554
          %v3556 = vrot.slane %v3555, 1
          %v3557 = vadd.f32 %v3555, %v3556
          %v3558 = vadd.f32 %v3451, %v3452
          %v3559 = vrot.slane %v3558, 4
          %v3560 = vadd.f32 %v3558, %v3559
          %v3561 = vrot.slane %v3560, 2
          %v3562 = vadd.f32 %v3560, %v3561
          %v3563 = vrot.slane %v3562, 1
          %v3564 = vadd.f32 %v3562, %v3563
          %v3565 = vpack.c.bf16 %v3459, %v3459
          %v3566 = vpack.c.bf16 %v3466, %v3466
          %v3567 = vpack.c.bf16 %v3473, %v3473
          %v3568 = vpack.c.bf16 %v3480, %v3480
          %v3569 = vpack.c.bf16 %v3487, %v3487
          %v3570 = vpack.c.bf16 %v3494, %v3494
          %v3571 = vpack.c.bf16 %v3501, %v3501
          %v3572 = vpack.c.bf16 %v3508, %v3508
          %v3573 = vpack.c.bf16 %v3515, %v3515
          %v3574 = vpack.c.bf16 %v3522, %v3522
          %v3575 = vpack.c.bf16 %v3529, %v3529
          %v3576 = vpack.c.bf16 %v3536, %v3536
          %v3577 = vpack.c.bf16 %v3543, %v3543
          %v3578 = vpack.c.bf16 %v3550, %v3550
          %v3579 = vpack.c.bf16 %v3557, %v3557
          %v3580 = vpack.c.bf16 %v3564, %v3564
          %v3581 = vld [vmem:[#allocation18] sm:$0xf]
          %v3582 = vld [vmem:[#allocation18 + $0x4] sm:$0xf]
          %v3583 = vld [vmem:[#allocation18 + $0x8] sm:$0xf]
          %v3584 = vld [vmem:[#allocation18 + $0xc] sm:$0xf]
          %v3585 = vld [vmem:[#allocation18 + $0x10] sm:$0xf]
          %v3586 = vld [vmem:[#allocation18 + $0x14] sm:$0xf]
          %v3587 = vld [vmem:[#allocation18 + $0x18] sm:$0xf]
          %v3588 = vld [vmem:[#allocation18 + $0x1c] sm:$0xf]
          %v3589 = vld [vmem:[#allocation18 + $0x20] sm:$0xf]
          %v3590 = vld [vmem:[#allocation18 + $0x24] sm:$0xf]
          %v3591 = vld [vmem:[#allocation18 + $0x28] sm:$0xf]
          %v3592 = vld [vmem:[#allocation18 + $0x2c] sm:$0xf]
          %v3593 = vld [vmem:[#allocation18 + $0x30] sm:$0xf]
          %v3594 = vld [vmem:[#allocation18 + $0x34] sm:$0xf]
          %v3595 = vld [vmem:[#allocation18 + $0x38] sm:$0xf]
          %v3596 = vld [vmem:[#allocation18 + $0x3c] sm:$0xf]
          %v3597 = vld [vmem:[%s14] sm:$0x1]
          %v3599 = vlaneseq
          %v3600 = vshrl.u32 %v3599, 7
          %v3601 = vsub.s32 0, %v3600
          %v3602 = vrot.slane %v3597, %v3601
          %v3620 = vunpack.c.l.b16 %v3565
          %v3621 = vunpack.c.l.b16 %v3566
          %v3622 = vunpack.c.l.b16 %v3567
          %v3623 = vunpack.c.l.b16 %v3568
          %v3624 = vunpack.c.l.b16 %v3569
          %v3625 = vunpack.c.l.b16 %v3570
          %v3626 = vunpack.c.l.b16 %v3571
          %v3627 = vunpack.c.l.b16 %v3572
          %v3628 = vunpack.c.l.b16 %v3573
          %v3629 = vunpack.c.l.b16 %v3574
          %v3630 = vunpack.c.l.b16 %v3575
          %v3631 = vunpack.c.l.b16 %v3576
          %v3632 = vunpack.c.l.b16 %v3577
          %v3633 = vunpack.c.l.b16 %v3578
          %v3634 = vunpack.c.l.b16 %v3579
          %v3635 = vunpack.c.l.b16 %v3580
          %vm3636 = vcmask 1041409
          %v3637 = vsel %vm3636, %v3621, %v3620
          %vm3638 = vcmask 1042434
          %v3639 = vsel %vm3638, %v3622, %v3637
          %vm3640 = vcmask 1043459
          %v3641 = vsel %vm3640, %v3623, %v3639
          %vm3642 = vcmask 1044484
          %v3643 = vsel %vm3642, %v3624, %v3641
          %vm3644 = vcmask 1045509
          %v3645 = vsel %vm3644, %v3625, %v3643
          %vm3646 = vcmask 1046534
          %v3647 = vsel %vm3646, %v3626, %v3645
          %vm3648 = vcmask 1047559
          %v3649 = vsel %vm3648, %v3627, %v3647
          %v3650 = vsel %vm3636, %v3629, %v3628
          %v3651 = vsel %vm3638, %v3630, %v3650
          %v3652 = vsel %vm3640, %v3631, %v3651
          %v3653 = vsel %vm3642, %v3632, %v3652
          %v3654 = vsel %vm3644, %v3633, %v3653
          %v3655 = vsel %vm3646, %v3634, %v3654
          %v3656 = vsel %vm3648, %v3635, %v3655
          %v3657 = vpack.c.b16 %v3656, %v3649
          %v3675 = vunpack.c.l.b16 %v3581
          %v3676 = vunpack.c.l.b16 %v3582
          %v3677 = vunpack.c.l.b16 %v3583
          %v3678 = vunpack.c.l.b16 %v3584
          %v3679 = vunpack.c.l.b16 %v3585
          %v3680 = vunpack.c.l.b16 %v3586
          %v3681 = vunpack.c.l.b16 %v3587
          %v3682 = vunpack.c.l.b16 %v3588
          %v3683 = vunpack.c.l.b16 %v3589
          %v3684 = vunpack.c.l.b16 %v3590
          %v3685 = vunpack.c.l.b16 %v3591
          %v3686 = vunpack.c.l.b16 %v3592
          %v3687 = vunpack.c.l.b16 %v3593
          %v3688 = vunpack.c.l.b16 %v3594
          %v3689 = vunpack.c.l.b16 %v3595
          %v3690 = vunpack.c.l.b16 %v3596
          %v3691 = vpack.c.b16 %v3676, %v3675
          %v3692 = vpack.c.b16 %v3678, %v3677
          %v3693 = vpack.c.b16 %v3680, %v3679
          %v3694 = vpack.c.b16 %v3682, %v3681
          %v3695 = vpack.c.b16 %v3684, %v3683
          %v3696 = vpack.c.b16 %v3686, %v3685
          %v3697 = vpack.c.b16 %v3688, %v3687
          %v3698 = vpack.c.b16 %v3690, %v3689
          %3707 = vmatprep.subr.bf16.mxu0 0
          %3708 = vmatpush1.bf16.msra.mxu0 %v3691
          %3709 = vmatprep.subr.bf16.mxu0 0
          %3710 = vmatpush1.bf16.msra.mxu0 %v3692
          %3711 = vmatprep.subr.bf16.mxu0 0
          %3712 = vmatpush1.bf16.msra.mxu0 %v3693
          %3713 = vmatprep.subr.bf16.mxu0 0
          %3714 = vmatpush1.bf16.msra.mxu0 %v3694
          %3715 = vmatprep.subr.bf16.mxu0 0
          %3716 = vmatpush1.bf16.msra.mxu0 %v3695
          %3717 = vmatprep.subr.bf16.mxu0 0
          %3718 = vmatpush1.bf16.msra.mxu0 %v3696
          %3719 = vmatprep.subr.bf16.mxu0 0
          %3720 = vmatpush1.bf16.msra.mxu0 %v3697
          %3721 = vmatprep.subr.bf16.mxu0 0
          %3722 = vmatpush1.bf16.msra.mxu0 %v3698
          %3723 = vmatprep.subr.bf16.mxu0 0
          %3724 = vmatpush1.bf16.msra.mxu0 0
          %3725 = vmatprep.subr.bf16.mxu0 0
          %3726 = vmatpush1.bf16.msra.mxu0 0
          %3727 = vmatprep.subr.bf16.mxu0 0
          %3728 = vmatpush1.bf16.msra.mxu0 0
          %3729 = vmatprep.subr.bf16.mxu0 0
          %3730 = vmatpush1.bf16.msra.mxu0 0
          %3731 = vmatprep.subr.bf16.mxu0 0
          %3732 = vmatpush1.bf16.msra.mxu0 0
          %3733 = vmatprep.subr.bf16.mxu0 0
          %3734 = vmatpush1.bf16.msra.mxu0 0
          %3735 = vmatprep.subr.bf16.mxu0 0
          %3736 = vmatpush1.bf16.msra.mxu0 0
          %3737 = vmatprep.subr.bf16.mxu0 0
          %3738 = vmatpush1.bf16.msra.mxu0 0
          %3739 = vmatprep.mubr.bf16.mxu0 0
          %3740 = vmatmul.mubr.bf16.gmra.mrb[0].mxu0 %v3657
          %v3741 = vpop.f32.mrb[0].mxu0
          %v3742 = vadd.f32 %v3602, %v3741
          %v3743 = vpop.f32.mrb[0].mxu0
          %v3744 = vpop.f32.mrb[0].mxu0
          %v3745 = vadd.f32 %v3602, %v3744
          %v3746 = vpop.f32.mrb[0].mxu0
          %3747 = vdwg.mxu0
          %3748 = vst [vmem:[%s656] sm:$0xff] %v3742
          %3749 = vst [vmem:[%s656 + $0x8] sm:$0xff] %v3745
        $region128: #{tpu_custom_call.1} parent=79 // pred_fallthru
          _
        %s3750 = sand.u32 %s377, 1
        %s3751 = scalar_lea.sflag [#allocation5], %s3750
        %s3752 = sand.u32 %s377, 1
        %s3753 = smul.addr %s3752, 16
        %s3754 = scalar_lea.vmem [#allocation20], %s3753
        // Predicated region
        $region129: #{tpu_custom_call.1} parent=79 // pred_check
          %p3755 = pneg %p387
        $region130: #{tpu_custom_call.1} parent=79 // pred_check_branch
          %3757 = sbr.rel (%p3755) target = $region132
        $region131: #{tpu_custom_call.1} parent=79 // pred_region
          %s3759 = ssub.s32 256, 256
          %3760 = vsyncadd %s3751, %s3759
          %s3761 = smul.addr %s41, 2
          %s3762 = smul.addr %s3761, 128
          %s3763 = scalar_lea.hbm %s15, %s3762
          %s3764 = sshll.u32 %s3754, 4
          %s3765 = int_to_ptr.vmem [resolvable:$true] %s3764
          %3770 = dma.vmem_to_hbm [thread:$0]  %s3765, 256, %s3763, %s3751, 128, 128, 8
        $region132: #{tpu_custom_call.1} parent=79 // pred_fallthru
          _
      $region80: #{tpu_custom_call.1} parent=5 // pred_fallthru
        _
      %p3771 = scmp.le.s32.totalorder 2, %s32
      // Predicated region
      $region133: #{tpu_custom_call.1} parent=5 // pred_check
        %p3772 = pneg %p3771
      $region134: #{tpu_custom_call.1} parent=5 // pred_check_branch
        %3774 = sbr.rel (%p3772) target = $region136
      $region135: #{tpu_custom_call.1} parent=5 // pred_region
        %s3775 = ssub.s32 %s32, 2
        // Predicated region
        $region137: #{tpu_custom_call.1} parent=135 // pred_check
          %p3776 = pneg %p393
        $region138: #{tpu_custom_call.1} parent=135 // pred_check_branch
          %3778 = sbr.rel (%p3776) target = $region140
        $region139: #{tpu_custom_call.1} parent=135 // pred_region
          %s3779 = sand.u32 %s378, 1
          %s3780 = scalar_lea.sflag [#allocation5], %s3779
          %s3781 = sand.u32 %s378, 1
          %s3782 = smul.addr %s3781, 16
          %s3783 = scalar_lea.vmem [#allocation20], %s3782
          %3784 = dma.done %s3780, 256
        $region140: #{tpu_custom_call.1} parent=135 // pred_fallthru
          _
      $region136: #{tpu_custom_call.1} parent=5 // pred_fallthru
        _
    $region6: #{tpu_custom_call.1} parent=1 // loop_footer
      %s36 = sadd.s32 1, %s32
    $region7: #{tpu_custom_call.1} parent=1 // loop_footer_branch
      %31 = sbr.rel target = $region3
    $region8: #{tpu_custom_call.1} parent=1 // loop_exit
      _
    %3785 = vsyncpa [#allocation4], 1
    %s3786 = scalar_lea.sflag [#allocation4], 1
    %3787 = vsyncpa %s3786, 1
    %3788 = vsyncpa [#allocation7], 1
    %3789 = vsyncpa [#allocation10], 1
    %3790 = vsyncpa [#allocation13], 1
    %3791 = vsyncpa [#allocation16], 1
    %3792 = vsyncpa [#allocation19], 1
    %3793 = vsyncpa [#allocation5], 1
    %s3794 = scalar_lea.sflag [#allocation5], 1
    %3795 = vsyncpa %s3794, 1

</llo_original>
